<compile_context>
chip_gen: v7x
topology: tpu7x:2x2x1
jax: 0.10.0
libtpu: 0.0.40
codegen_flags: <defaults>
</compile_context>

<pallas_src>
import functools
import math

import jax
import jax.numpy as jnp
from jax.experimental import pallas as pl
from jax.experimental.pallas import tpu as pltpu  # noqa: F401  (TPU backend)

# ------------------------- fixed small config -------------------------
IMAGE_SIZE = 16
PATCH_SIZE = 4
CHANNELS = 3
EMBED_DIM = 32          # cfg.hidden_channels
IN_DIM = 8              # cfg.embed_dim (latent dim fed into decoder)
NUM_HEADS = 4
HEAD_DIM = EMBED_DIM // NUM_HEADS
NUM_LAYERS = 2
MID_DIM = 64
THETA_BASE = 10000.0
EPS = 1e-5
NUM_H_PATCH = IMAGE_SIZE // PATCH_SIZE
NUM_W_PATCH = IMAGE_SIZE // PATCH_SIZE
NUM_PATCH = NUM_H_PATCH * NUM_W_PATCH
PATCH_DIM = PATCH_SIZE * PATCH_SIZE * CHANNELS
BATCH = 2


# ------------------------- in-kernel helpers -------------------------
def _layernorm(x, g, b):
    # x: (B, N, D), g/b: (1, D) -> broadcasts over (B, N).
    mu = jnp.mean(x, axis=-1, keepdims=True)
    var = jnp.mean(jnp.square(x - mu), axis=-1, keepdims=True)
    return (x - mu) * jax.lax.rsqrt(var + EPS) * g + b


def _mm(x, w):
    # (B, N, Din) @ (Din, Dout) -> (B, N, Dout) as a single 2-D MXU matmul.
    # Reshapes only touch leading (non-lane) dims -> cheap in Mosaic.
    B, N, Din = x.shape
    y = jnp.dot(x.reshape(B * N, Din), w, preferred_element_type=jnp.float32)
    return y.reshape(B, N, w.shape[1])


# ------------------------- fused decoder kernel -------------------------
def decoder_kernel(
    x_ref, pe_ref, w_in_ref,
    tn_g_ref, tn_b_ref, wqkv_ref, wo_ref,
    cn_g_ref, cn_b_ref, w12_ref, w3_ref,
    fn_g_ref, fn_b_ref, w_rev_ref,
    o_ref, *, num_layers, num_heads, mid_dim,
):
    x = x_ref[...]                                   # (B, N, IN_DIM)
    B, N, _ = x.shape
    D = w_in_ref.shape[1]
    hd = D // num_heads
    scale = 1.0 / math.sqrt(hd)

    # ---- in_proj + additive SinCos APE (whole batch at once) ----
    h = _mm(x, w_in_ref[...]) + pe_ref[...]          # (B, N, D)

    # ---- transformer layers (statically unrolled) ----
    for l in range(num_layers):
        # --- token mixer: multi-head softmax attention (pre-LN, residual) ---
        xn = _layernorm(h, tn_g_ref[l], tn_b_ref[l])
        qkv = _mm(xn, wqkv_ref[l])                   # (B, N, 3D), fused QKV
        q = qkv[:, :, 0 * D:1 * D]
        k = qkv[:, :, 1 * D:2 * D]
        v = qkv[:, :, 2 * D:3 * D]
        wo = wo_ref[l]                               # (D, D)

        attn = None
        for head in range(num_heads):                # small static unroll
            sl = slice(head * hd, (head + 1) * hd)
            qh, kh, vh = q[:, :, sl], k[:, :, sl], v[:, :, sl]
            s = jnp.einsum("bnd,bmd->bnm", qh, kh,
                           preferred_element_type=jnp.float32) * scale
            s = s - jnp.max(s, axis=-1, keepdims=True)
            p = jnp.exp(s)
            p = p * pl.reciprocal(jnp.sum(p, axis=-1, keepdims=True),
                                  approx=True)
            ctx = jnp.einsum("bnm,bmd->bnd", p, vh,
                             preferred_element_type=jnp.float32)  # (B, N, hd)
            # concat-free head merge: project through the matching Wo rows.
            part = _mm(ctx, wo[sl, :])               # (B, N, D)
            attn = part if attn is None else attn + part
        h = h + attn

        # --- channel mixer: GLU with SiLU on the first branch ---
        xn = _layernorm(h, cn_g_ref[l], cn_b_ref[l])
        ug = _mm(xn, w12_ref[l])                     # (B, N, 2*mid) lane-dense
        u = ug[:, :, :mid_dim]
        g = ug[:, :, mid_dim:]
        h = h + _mm(u * jax.nn.sigmoid(u) * g, w3_ref[l])

    # ---- final LayerNorm + reverse_patch_embed projection ----
    xn = _layernorm(h, fn_g_ref[...], fn_b_ref[...])
    # TODO(synk): output last dim is 48 (< 128 lanes) -> a few masked stores;
    # a lane-dense (B, N*48) slab would need an in-kernel minor-dim reshape,
    # skipped for lowering robustness (store volume is ~6 KiB total).
    o_ref[...] = _mm(xn, w_rev_ref[...])             # (B, N, P*P*C)


# ------------------------- pallas_call wrapper -------------------------
def decoder_pallas(x, params):
    B, N, _ = x.shape
    kernel = functools.partial(
        decoder_kernel,
        num_layers=NUM_LAYERS, num_heads=NUM_HEADS, mid_dim=MID_DIM)
    # No grid: a single invocation with every array fully resident in VMEM
    # (total < 100 KiB of weights + activations).
    return pl.pallas_call(
        kernel,
        out_shape=jax.ShapeDtypeStruct((B, N, PATCH_DIM), jnp.float32),
    )(
        x, params["pe"], params["in_proj_w"],
        params["tn_g"], params["tn_b"], params["wqkv"], params["wo"],
        params["cn_g"], params["cn_b"], params["w12"], params["w3"],
        params["final_norm_g"], params["final_norm_b"], params["rev_patch_w"],
    )


# ------------------------- glue (plain JAX) -------------------------
def sincos_pe_1d(n, d, base):
    # SinCosPe for a 1-D token grid: pe = [sin(pos*theta) | cos(pos*theta)].
    half = d // 2
    inv_freq = base ** (-jnp.arange(half, dtype=jnp.float32) / half)
    pos = jnp.arange(n, dtype=jnp.float32)
    ang = pos[:, None] * inv_freq[None, :]
    return jnp.concatenate([jnp.sin(ang), jnp.cos(ang)], axis=-1)  # (n, d)


def init_params(key):
    std = 0.02
    L, D, M = NUM_LAYERS, EMBED_DIM, MID_DIM
    keys = jax.random.split(key, 6)

    def nrm(k, shape):
        return jax.random.normal(k, shape, jnp.float32) * std

    lk = jax.random.split(keys[2], 4)
    return {
        # constant SinCos APE table, computed once (use_ape=True)
        "pe": sincos_pe_1d(NUM_PATCH, D, THETA_BASE),
        "in_proj_w": nrm(keys[0], (IN_DIM, D)),
        "rev_patch_w": nrm(keys[1], (D, PATCH_DIM)),
        "final_norm_g": jnp.ones((1, D), jnp.float32),
        "final_norm_b": jnp.zeros((1, D), jnp.float32),
        # stacked per-layer parameters
        "tn_g": jnp.ones((L, 1, D), jnp.float32),
        "tn_b": jnp.zeros((L, 1, D), jnp.float32),
        "cn_g": jnp.ones((L, 1, D), jnp.float32),
        "cn_b": jnp.zeros((L, 1, D), jnp.float32),
        "wqkv": nrm(lk[0], (L, D, 3 * D)),   # fused Q|K|V
        "wo": nrm(lk[1], (L, D, D)),
        "w12": nrm(lk[2], (L, D, 2 * M)),    # fused GLU branches
        "w3": nrm(lk[3], (L, M, D)),
    }


@jax.jit
def freq_transformer_decoder_forward(x, params):
    # x: (B, NUM_PATCH, IN_DIM) latent tokens -> (B, C, H, W) image (NCHW).
    y = decoder_pallas(x, params)                    # (B, N, p*p*C)
    # reverse patch embed un-patchify (layout plumbing, done in XLA):
    #   'b (h w) (c p1 p2) -> b c (h p1) (w p2)'
    B = y.shape[0]
    y = y.reshape(B, NUM_H_PATCH, NUM_W_PATCH, CHANNELS, PATCH_SIZE, PATCH_SIZE)
    y = jnp.transpose(y, (0, 3, 1, 4, 2, 5))
    return y.reshape(B, CHANNELS, IMAGE_SIZE, IMAGE_SIZE)


if __name__ == "__main__":
    key = jax.random.PRNGKey(0)
    pkey, xkey = jax.random.split(key)
    params = init_params(pkey)
    x = jax.random.normal(xkey, (BATCH, NUM_PATCH, IN_DIM), jnp.float32)

    out = freq_transformer_decoder_forward(x, params)
    out = jax.block_until_ready(out)
    assert out.shape == (BATCH, CHANNELS, IMAGE_SIZE, IMAGE_SIZE), out.shape
    assert bool(jnp.all(jnp.isfinite(out)))
    print("KERNEL_OK")
</pallas_src>

<mosaic_0001>
module attributes {stable_mosaic.version = 11 : i64} {
  func.func @decoder_kernel(%arg0: memref<2x16x8xf32, #tpu.memory_space<vmem>>, %arg1: memref<16x32xf32, #tpu.memory_space<vmem>>, %arg2: memref<8x32xf32, #tpu.memory_space<vmem>>, %arg3: memref<2x1x32xf32, #tpu.memory_space<vmem>>, %arg4: memref<2x1x32xf32, #tpu.memory_space<vmem>>, %arg5: memref<2x32x96xf32, #tpu.memory_space<vmem>>, %arg6: memref<2x32x32xf32, #tpu.memory_space<vmem>>, %arg7: memref<2x1x32xf32, #tpu.memory_space<vmem>>, %arg8: memref<2x1x32xf32, #tpu.memory_space<vmem>>, %arg9: memref<2x32x128xf32, #tpu.memory_space<vmem>>, %arg10: memref<2x64x32xf32, #tpu.memory_space<vmem>>, %arg11: memref<1x32xf32, #tpu.memory_space<vmem>>, %arg12: memref<1x32xf32, #tpu.memory_space<vmem>>, %arg13: memref<32x48xf32, #tpu.memory_space<vmem>>, %arg14: memref<2x16x48xf32, #tpu.memory_space<vmem>>) attributes {dimension_semantics = [], scalar_prefetch = 0 : i64, scratch_operands = 0 : i64, tpu.core_type = #tpu.core_type<tc>} {
    %c0 = arith.constant 0 : index
    %c0_0 = arith.constant 0 : index
    %c0_1 = arith.constant 0 : index
    %0 = vector.load %arg0[%c0, %c0_0, %c0_1] : memref<2x16x8xf32, #tpu.memory_space<vmem>>, vector<2x16x8xf32>
    %c0_2 = arith.constant 0 : index
    %c0_3 = arith.constant 0 : index
    %1 = vector.load %arg2[%c0_2, %c0_3] : memref<8x32xf32, #tpu.memory_space<vmem>>, vector<8x32xf32>
    %2 = vector.shape_cast %0 : vector<2x16x8xf32> to vector<32x8xf32>
    %cst = arith.constant dense<0.000000e+00> : vector<32x32xf32>
    %3 = tpu.matmul %2, %1, %cst {dimension_numbers = #tpu.dot_dimension_numbers<[1], [0], [0], [1], [0, 0, 1, 1], [], []>} : vector<32x8xf32>, vector<8x32xf32>, vector<32x32xf32> -> vector<32x32xf32>
    %4 = vector.shape_cast %3 : vector<32x32xf32> to vector<2x16x32xf32>
    %c0_4 = arith.constant 0 : index
    %c0_5 = arith.constant 0 : index
    %5 = vector.load %arg1[%c0_4, %c0_5] : memref<16x32xf32, #tpu.memory_space<vmem>>, vector<16x32xf32>
    %6 = vector.shape_cast %5 : vector<16x32xf32> to vector<1x16x32xf32>
    %7 = vector.broadcast %6 : vector<1x16x32xf32> to vector<2x16x32xf32>
    %8 = arith.addf %4, %7 : vector<2x16x32xf32>
    %c0_6 = arith.constant 0 : index
    %c0_7 = arith.constant 0 : index
    %c0_8 = arith.constant 0 : index
    %9 = vector.load %arg3[%c0_6, %c0_7, %c0_8] : memref<2x1x32xf32, #tpu.memory_space<vmem>>, vector<1x1x32xf32>
    %10 = vector.shape_cast %9 : vector<1x1x32xf32> to vector<1x32xf32>
    %c0_9 = arith.constant 0 : index
    %c0_10 = arith.constant 0 : index
    %c0_11 = arith.constant 0 : index
    %11 = vector.load %arg4[%c0_9, %c0_10, %c0_11] : memref<2x1x32xf32, #tpu.memory_space<vmem>>, vector<1x1x32xf32>
    %12 = vector.shape_cast %11 : vector<1x1x32xf32> to vector<1x32xf32>
    %cst_12 = arith.constant dense<0.000000e+00> : vector<2x16xf32>
    %13 = vector.multi_reduction <add>, %8, %cst_12 [2] : vector<2x16x32xf32> to vector<2x16xf32>
    %14 = vector.shape_cast %13 : vector<2x16xf32> to vector<2x16x1xf32>
    %cst_13 = arith.constant 3.200000e+01 : f32
    %15 = vector.broadcast %cst_13 : f32 to vector<2x16x1xf32>
    %16 = arith.divf %14, %15 : vector<2x16x1xf32>
    %17 = vector.broadcast %16 : vector<2x16x1xf32> to vector<2x16x32xf32>
    %18 = arith.subf %8, %17 : vector<2x16x32xf32>
    %19 = arith.mulf %18, %18 : vector<2x16x32xf32>
    %cst_14 = arith.constant dense<0.000000e+00> : vector<2x16xf32>
    %20 = vector.multi_reduction <add>, %19, %cst_14 [2] : vector<2x16x32xf32> to vector<2x16xf32>
    %21 = vector.shape_cast %20 : vector<2x16xf32> to vector<2x16x1xf32>
    %cst_15 = arith.constant 3.200000e+01 : f32
    %22 = vector.broadcast %cst_15 : f32 to vector<2x16x1xf32>
    %23 = arith.divf %21, %22 : vector<2x16x1xf32>
    %24 = vector.broadcast %16 : vector<2x16x1xf32> to vector<2x16x32xf32>
    %25 = arith.subf %8, %24 : vector<2x16x32xf32>
    %cst_16 = arith.constant 9.99999974E-6 : f32
    %26 = vector.broadcast %cst_16 : f32 to vector<2x16x1xf32>
    %27 = arith.addf %23, %26 : vector<2x16x1xf32>
    %28 = math.rsqrt %27 : vector<2x16x1xf32>
    %29 = vector.broadcast %28 : vector<2x16x1xf32> to vector<2x16x32xf32>
    %30 = arith.mulf %25, %29 : vector<2x16x32xf32>
    %31 = vector.shape_cast %10 : vector<1x32xf32> to vector<1x1x32xf32>
    %32 = vector.broadcast %31 : vector<1x1x32xf32> to vector<2x16x32xf32>
    %33 = arith.mulf %30, %32 : vector<2x16x32xf32>
    %34 = vector.shape_cast %12 : vector<1x32xf32> to vector<1x1x32xf32>
    %35 = vector.broadcast %34 : vector<1x1x32xf32> to vector<2x16x32xf32>
    %36 = arith.addf %33, %35 : vector<2x16x32xf32>
    %c0_17 = arith.constant 0 : index
    %c0_18 = arith.constant 0 : index
    %c0_19 = arith.constant 0 : index
    %37 = vector.load %arg5[%c0_17, %c0_18, %c0_19] : memref<2x32x96xf32, #tpu.memory_space<vmem>>, vector<1x32x96xf32>
    %38 = vector.shape_cast %37 : vector<1x32x96xf32> to vector<32x96xf32>
    %39 = vector.shape_cast %36 : vector<2x16x32xf32> to vector<32x32xf32>
    %cst_20 = arith.constant dense<0.000000e+00> : vector<32x96xf32>
    %40 = tpu.matmul %39, %38, %cst_20 {dimension_numbers = #tpu.dot_dimension_numbers<[1], [0], [0], [1], [0, 0, 1, 1], [], []>} : vector<32x32xf32>, vector<32x96xf32>, vector<32x96xf32> -> vector<32x96xf32>
    %41 = vector.shape_cast %40 : vector<32x96xf32> to vector<2x16x96xf32>
    %42 = vector.extract_strided_slice %41 {offsets = [0, 0, 0], sizes = [2, 16, 32], strides = [1, 1, 1]} : vector<2x16x96xf32> to vector<2x16x32xf32>
    %43 = vector.extract_strided_slice %41 {offsets = [0, 0, 32], sizes = [2, 16, 32], strides = [1, 1, 1]} : vector<2x16x96xf32> to vector<2x16x32xf32>
    %44 = vector.extract_strided_slice %41 {offsets = [0, 0, 64], sizes = [2, 16, 32], strides = [1, 1, 1]} : vector<2x16x96xf32> to vector<2x16x32xf32>
    %c0_21 = arith.constant 0 : index
    %c0_22 = arith.constant 0 : index
    %c0_23 = arith.constant 0 : index
    %45 = vector.load %arg6[%c0_21, %c0_22, %c0_23] : memref<2x32x32xf32, #tpu.memory_space<vmem>>, vector<1x32x32xf32>
    %46 = vector.shape_cast %45 : vector<1x32x32xf32> to vector<32x32xf32>
    %47 = vector.extract_strided_slice %42 {offsets = [0, 0, 0], sizes = [2, 16, 8], strides = [1, 1, 1]} : vector<2x16x32xf32> to vector<2x16x8xf32>
    %48 = vector.extract_strided_slice %43 {offsets = [0, 0, 0], sizes = [2, 16, 8], strides = [1, 1, 1]} : vector<2x16x32xf32> to vector<2x16x8xf32>
    %49 = vector.extract_strided_slice %44 {offsets = [0, 0, 0], sizes = [2, 16, 8], strides = [1, 1, 1]} : vector<2x16x32xf32> to vector<2x16x8xf32>
    "tpu.trace_start"() <{level = 10 : i32, message = "bnd,bmd->bnm"}> : () -> ()
    %cst_24 = arith.constant dense<0.000000e+00> : vector<2x16x16xf32>
    %50 = tpu.matmul %47, %48, %cst_24 {dimension_numbers = #tpu.dot_dimension_numbers<[2], [2], [1], [1], [0, 0, 0, 1, 1, 1], [0], [0]>} : vector<2x16x8xf32>, vector<2x16x8xf32>, vector<2x16x16xf32> -> vector<2x16x16xf32>
    "tpu.trace_stop"() : () -> ()
    %cst_25 = arith.constant 0.353553385 : f32
    %51 = vector.broadcast %cst_25 : f32 to vector<2x16x16xf32>
    %52 = arith.mulf %50, %51 : vector<2x16x16xf32>
    %cst_26 = arith.constant dense<0xFF800000> : vector<2x16xf32>
    %53 = vector.multi_reduction <maximumf>, %52, %cst_26 [2] : vector<2x16x16xf32> to vector<2x16xf32>
    %54 = vector.shape_cast %53 : vector<2x16xf32> to vector<2x16x1xf32>
    %55 = vector.broadcast %54 : vector<2x16x1xf32> to vector<2x16x16xf32>
    %56 = arith.subf %52, %55 : vector<2x16x16xf32>
    %57 = math.exp %56 : vector<2x16x16xf32>
    %cst_27 = arith.constant dense<0.000000e+00> : vector<2x16xf32>
    %58 = vector.multi_reduction <add>, %57, %cst_27 [2] : vector<2x16x16xf32> to vector<2x16xf32>
    %59 = vector.shape_cast %58 : vector<2x16xf32> to vector<2x16x1xf32>
    %60 = tpu.reciprocal %59 {approx = true} : vector<2x16x1xf32> -> vector<2x16x1xf32>
    %61 = vector.broadcast %60 : vector<2x16x1xf32> to vector<2x16x16xf32>
    %62 = arith.mulf %57, %61 : vector<2x16x16xf32>
    "tpu.trace_start"() <{level = 10 : i32, message = "bnm,bmd->bnd"}> : () -> ()
    %cst_28 = arith.constant dense<0.000000e+00> : vector<2x16x8xf32>
    %63 = tpu.matmul %62, %49, %cst_28 {dimension_numbers = #tpu.dot_dimension_numbers<[2], [1], [1], [2], [0, 0, 0, 1, 1, 2], [0], [0]>} : vector<2x16x16xf32>, vector<2x16x8xf32>, vector<2x16x8xf32> -> vector<2x16x8xf32>
    "tpu.trace_stop"() : () -> ()
    %64 = vector.extract_strided_slice %46 {offsets = [0, 0], sizes = [8, 32], strides = [1, 1]} : vector<32x32xf32> to vector<8x32xf32>
    %65 = vector.shape_cast %63 : vector<2x16x8xf32> to vector<32x8xf32>
    %cst_29 = arith.constant dense<0.000000e+00> : vector<32x32xf32>
    %66 = tpu.matmul %65, %64, %cst_29 {dimension_numbers = #tpu.dot_dimension_numbers<[1], [0], [0], [1], [0, 0, 1, 1], [], []>} : vector<32x8xf32>, vector<8x32xf32>, vector<32x32xf32> -> vector<32x32xf32>
    %67 = vector.shape_cast %66 : vector<32x32xf32> to vector<2x16x32xf32>
    %68 = vector.extract_strided_slice %42 {offsets = [0, 0, 8], sizes = [2, 16, 8], strides = [1, 1, 1]} : vector<2x16x32xf32> to vector<2x16x8xf32>
    %69 = vector.extract_strided_slice %43 {offsets = [0, 0, 8], sizes = [2, 16, 8], strides = [1, 1, 1]} : vector<2x16x32xf32> to vector<2x16x8xf32>
    %70 = vector.extract_strided_slice %44 {offsets = [0, 0, 8], sizes = [2, 16, 8], strides = [1, 1, 1]} : vector<2x16x32xf32> to vector<2x16x8xf32>
    "tpu.trace_start"() <{level = 10 : i32, message = "bnd,bmd->bnm"}> : () -> ()
    %cst_30 = arith.constant dense<0.000000e+00> : vector<2x16x16xf32>
    %71 = tpu.matmul %68, %69, %cst_30 {dimension_numbers = #tpu.dot_dimension_numbers<[2], [2], [1], [1], [0, 0, 0, 1, 1, 1], [0], [0]>} : vector<2x16x8xf32>, vector<2x16x8xf32>, vector<2x16x16xf32> -> vector<2x16x16xf32>
    "tpu.trace_stop"() : () -> ()
    %cst_31 = arith.constant 0.353553385 : f32
    %72 = vector.broadcast %cst_31 : f32 to vector<2x16x16xf32>
    %73 = arith.mulf %71, %72 : vector<2x16x16xf32>
    %cst_32 = arith.constant dense<0xFF800000> : vector<2x16xf32>
    %74 = vector.multi_reduction <maximumf>, %73, %cst_32 [2] : vector<2x16x16xf32> to vector<2x16xf32>
    %75 = vector.shape_cast %74 : vector<2x16xf32> to vector<2x16x1xf32>
    %76 = vector.broadcast %75 : vector<2x16x1xf32> to vector<2x16x16xf32>
    %77 = arith.subf %73, %76 : vector<2x16x16xf32>
    %78 = math.exp %77 : vector<2x16x16xf32>
    %cst_33 = arith.constant dense<0.000000e+00> : vector<2x16xf32>
    %79 = vector.multi_reduction <add>, %78, %cst_33 [2] : vector<2x16x16xf32> to vector<2x16xf32>
    %80 = vector.shape_cast %79 : vector<2x16xf32> to vector<2x16x1xf32>
    %81 = tpu.reciprocal %80 {approx = true} : vector<2x16x1xf32> -> vector<2x16x1xf32>
    %82 = vector.broadcast %81 : vector<2x16x1xf32> to vector<2x16x16xf32>
    %83 = arith.mulf %78, %82 : vector<2x16x16xf32>
    "tpu.trace_start"() <{level = 10 : i32, message = "bnm,bmd->bnd"}> : () -> ()
    %cst_34 = arith.constant dense<0.000000e+00> : vector<2x16x8xf32>
    %84 = tpu.matmul %83, %70, %cst_34 {dimension_numbers = #tpu.dot_dimension_numbers<[2], [1], [1], [2], [0, 0, 0, 1, 1, 2], [0], [0]>} : vector<2x16x16xf32>, vector<2x16x8xf32>, vector<2x16x8xf32> -> vector<2x16x8xf32>
    "tpu.trace_stop"() : () -> ()
    %85 = vector.extract_strided_slice %46 {offsets = [8, 0], sizes = [8, 32], strides = [1, 1]} : vector<32x32xf32> to vector<8x32xf32>
    %86 = vector.shape_cast %84 : vector<2x16x8xf32> to vector<32x8xf32>
    %cst_35 = arith.constant dense<0.000000e+00> : vector<32x32xf32>
    %87 = tpu.matmul %86, %85, %cst_35 {dimension_numbers = #tpu.dot_dimension_numbers<[1], [0], [0], [1], [0, 0, 1, 1], [], []>} : vector<32x8xf32>, vector<8x32xf32>, vector<32x32xf32> -> vector<32x32xf32>
    %88 = vector.shape_cast %87 : vector<32x32xf32> to vector<2x16x32xf32>
    %89 = arith.addf %67, %88 : vector<2x16x32xf32>
    %90 = vector.extract_strided_slice %42 {offsets = [0, 0, 16], sizes = [2, 16, 8], strides = [1, 1, 1]} : vector<2x16x32xf32> to vector<2x16x8xf32>
    %91 = vector.extract_strided_slice %43 {offsets = [0, 0, 16], sizes = [2, 16, 8], strides = [1, 1, 1]} : vector<2x16x32xf32> to vector<2x16x8xf32>
    %92 = vector.extract_strided_slice %44 {offsets = [0, 0, 16], sizes = [2, 16, 8], strides = [1, 1, 1]} : vector<2x16x32xf32> to vector<2x16x8xf32>
    "tpu.trace_start"() <{level = 10 : i32, message = "bnd,bmd->bnm"}> : () -> ()
    %cst_36 = arith.constant dense<0.000000e+00> : vector<2x16x16xf32>
    %93 = tpu.matmul %90, %91, %cst_36 {dimension_numbers = #tpu.dot_dimension_numbers<[2], [2], [1], [1], [0, 0, 0, 1, 1, 1], [0], [0]>} : vector<2x16x8xf32>, vector<2x16x8xf32>, vector<2x16x16xf32> -> vector<2x16x16xf32>
    "tpu.trace_stop"() : () -> ()
    %cst_37 = arith.constant 0.353553385 : f32
    %94 = vector.broadcast %cst_37 : f32 to vector<2x16x16xf32>
    %95 = arith.mulf %93, %94 : vector<2x16x16xf32>
    %cst_38 = arith.constant dense<0xFF800000> : vector<2x16xf32>
    %96 = vector.multi_reduction <maximumf>, %95, %cst_38 [2] : vector<2x16x16xf32> to vector<2x16xf32>
    %97 = vector.shape_cast %96 : vector<2x16xf32> to vector<2x16x1xf32>
    %98 = vector.broadcast %97 : vector<2x16x1xf32> to vector<2x16x16xf32>
    %99 = arith.subf %95, %98 : vector<2x16x16xf32>
    %100 = math.exp %99 : vector<2x16x16xf32>
    %cst_39 = arith.constant dense<0.000000e+00> : vector<2x16xf32>
    %101 = vector.multi_reduction <add>, %100, %cst_39 [2] : vector<2x16x16xf32> to vector<2x16xf32>
    %102 = vector.shape_cast %101 : vector<2x16xf32> to vector<2x16x1xf32>
    %103 = tpu.reciprocal %102 {approx = true} : vector<2x16x1xf32> -> vector<2x16x1xf32>
    %104 = vector.broadcast %103 : vector<2x16x1xf32> to vector<2x16x16xf32>
    %105 = arith.mulf %100, %104 : vector<2x16x16xf32>
    "tpu.trace_start"() <{level = 10 : i32, message = "bnm,bmd->bnd"}> : () -> ()
    %cst_40 = arith.constant dense<0.000000e+00> : vector<2x16x8xf32>
    %106 = tpu.matmul %105, %92, %cst_40 {dimension_numbers = #tpu.dot_dimension_numbers<[2], [1], [1], [2], [0, 0, 0, 1, 1, 2], [0], [0]>} : vector<2x16x16xf32>, vector<2x16x8xf32>, vector<2x16x8xf32> -> vector<2x16x8xf32>
    "tpu.trace_stop"() : () -> ()
    %107 = vector.extract_strided_slice %46 {offsets = [16, 0], sizes = [8, 32], strides = [1, 1]} : vector<32x32xf32> to vector<8x32xf32>
    %108 = vector.shape_cast %106 : vector<2x16x8xf32> to vector<32x8xf32>
    %cst_41 = arith.constant dense<0.000000e+00> : vector<32x32xf32>
    %109 = tpu.matmul %108, %107, %cst_41 {dimension_numbers = #tpu.dot_dimension_numbers<[1], [0], [0], [1], [0, 0, 1, 1], [], []>} : vector<32x8xf32>, vector<8x32xf32>, vector<32x32xf32> -> vector<32x32xf32>
    %110 = vector.shape_cast %109 : vector<32x32xf32> to vector<2x16x32xf32>
    %111 = arith.addf %89, %110 : vector<2x16x32xf32>
    %112 = vector.extract_strided_slice %42 {offsets = [0, 0, 24], sizes = [2, 16, 8], strides = [1, 1, 1]} : vector<2x16x32xf32> to vector<2x16x8xf32>
    %113 = vector.extract_strided_slice %43 {offsets = [0, 0, 24], sizes = [2, 16, 8], strides = [1, 1, 1]} : vector<2x16x32xf32> to vector<2x16x8xf32>
    %114 = vector.extract_strided_slice %44 {offsets = [0, 0, 24], sizes = [2, 16, 8], strides = [1, 1, 1]} : vector<2x16x32xf32> to vector<2x16x8xf32>
    "tpu.trace_start"() <{level = 10 : i32, message = "bnd,bmd->bnm"}> : () -> ()
    %cst_42 = arith.constant dense<0.000000e+00> : vector<2x16x16xf32>
    %115 = tpu.matmul %112, %113, %cst_42 {dimension_numbers = #tpu.dot_dimension_numbers<[2], [2], [1], [1], [0, 0, 0, 1, 1, 1], [0], [0]>} : vector<2x16x8xf32>, vector<2x16x8xf32>, vector<2x16x16xf32> -> vector<2x16x16xf32>
    "tpu.trace_stop"() : () -> ()
    %cst_43 = arith.constant 0.353553385 : f32
    %116 = vector.broadcast %cst_43 : f32 to vector<2x16x16xf32>
    %117 = arith.mulf %115, %116 : vector<2x16x16xf32>
    %cst_44 = arith.constant dense<0xFF800000> : vector<2x16xf32>
    %118 = vector.multi_reduction <maximumf>, %117, %cst_44 [2] : vector<2x16x16xf32> to vector<2x16xf32>
    %119 = vector.shape_cast %118 : vector<2x16xf32> to vector<2x16x1xf32>
    %120 = vector.broadcast %119 : vector<2x16x1xf32> to vector<2x16x16xf32>
    %121 = arith.subf %117, %120 : vector<2x16x16xf32>
    %122 = math.exp %121 : vector<2x16x16xf32>
    %cst_45 = arith.constant dense<0.000000e+00> : vector<2x16xf32>
    %123 = vector.multi_reduction <add>, %122, %cst_45 [2] : vector<2x16x16xf32> to vector<2x16xf32>
    %124 = vector.shape_cast %123 : vector<2x16xf32> to vector<2x16x1xf32>
    %125 = tpu.reciprocal %124 {approx = true} : vector<2x16x1xf32> -> vector<2x16x1xf32>
    %126 = vector.broadcast %125 : vector<2x16x1xf32> to vector<2x16x16xf32>
    %127 = arith.mulf %122, %126 : vector<2x16x16xf32>
    "tpu.trace_start"() <{level = 10 : i32, message = "bnm,bmd->bnd"}> : () -> ()
    %cst_46 = arith.constant dense<0.000000e+00> : vector<2x16x8xf32>
    %128 = tpu.matmul %127, %114, %cst_46 {dimension_numbers = #tpu.dot_dimension_numbers<[2], [1], [1], [2], [0, 0, 0, 1, 1, 2], [0], [0]>} : vector<2x16x16xf32>, vector<2x16x8xf32>, vector<2x16x8xf32> -> vector<2x16x8xf32>
    "tpu.trace_stop"() : () -> ()
    %129 = vector.extract_strided_slice %46 {offsets = [24, 0], sizes = [8, 32], strides = [1, 1]} : vector<32x32xf32> to vector<8x32xf32>
    %130 = vector.shape_cast %128 : vector<2x16x8xf32> to vector<32x8xf32>
    %cst_47 = arith.constant dense<0.000000e+00> : vector<32x32xf32>
    %131 = tpu.matmul %130, %129, %cst_47 {dimension_numbers = #tpu.dot_dimension_numbers<[1], [0], [0], [1], [0, 0, 1, 1], [], []>} : vector<32x8xf32>, vector<8x32xf32>, vector<32x32xf32> -> vector<32x32xf32>
    %132 = vector.shape_cast %131 : vector<32x32xf32> to vector<2x16x32xf32>
    %133 = arith.addf %111, %132 : vector<2x16x32xf32>
    %134 = arith.addf %8, %133 : vector<2x16x32xf32>
    %c0_48 = arith.constant 0 : index
    %c0_49 = arith.constant 0 : index
    %c0_50 = arith.constant 0 : index
    %135 = vector.load %arg7[%c0_48, %c0_49, %c0_50] : memref<2x1x32xf32, #tpu.memory_space<vmem>>, vector<1x1x32xf32>
    %136 = vector.shape_cast %135 : vector<1x1x32xf32> to vector<1x32xf32>
    %c0_51 = arith.constant 0 : index
    %c0_52 = arith.constant 0 : index
    %c0_53 = arith.constant 0 : index
    %137 = vector.load %arg8[%c0_51, %c0_52, %c0_53] : memref<2x1x32xf32, #tpu.memory_space<vmem>>, vector<1x1x32xf32>
    %138 = vector.shape_cast %137 : vector<1x1x32xf32> to vector<1x32xf32>
    %cst_54 = arith.constant dense<0.000000e+00> : vector<2x16xf32>
    %139 = vector.multi_reduction <add>, %134, %cst_54 [2] : vector<2x16x32xf32> to vector<2x16xf32>
    %140 = vector.shape_cast %139 : vector<2x16xf32> to vector<2x16x1xf32>
    %cst_55 = arith.constant 3.200000e+01 : f32
    %141 = vector.broadcast %cst_55 : f32 to vector<2x16x1xf32>
    %142 = arith.divf %140, %141 : vector<2x16x1xf32>
    %143 = vector.broadcast %142 : vector<2x16x1xf32> to vector<2x16x32xf32>
    %144 = arith.subf %134, %143 : vector<2x16x32xf32>
    %145 = arith.mulf %144, %144 : vector<2x16x32xf32>
    %cst_56 = arith.constant dense<0.000000e+00> : vector<2x16xf32>
    %146 = vector.multi_reduction <add>, %145, %cst_56 [2] : vector<2x16x32xf32> to vector<2x16xf32>
    %147 = vector.shape_cast %146 : vector<2x16xf32> to vector<2x16x1xf32>
    %cst_57 = arith.constant 3.200000e+01 : f32
    %148 = vector.broadcast %cst_57 : f32 to vector<2x16x1xf32>
    %149 = arith.divf %147, %148 : vector<2x16x1xf32>
    %150 = vector.broadcast %142 : vector<2x16x1xf32> to vector<2x16x32xf32>
    %151 = arith.subf %134, %150 : vector<2x16x32xf32>
    %cst_58 = arith.constant 9.99999974E-6 : f32
    %152 = vector.broadcast %cst_58 : f32 to vector<2x16x1xf32>
    %153 = arith.addf %149, %152 : vector<2x16x1xf32>
    %154 = math.rsqrt %153 : vector<2x16x1xf32>
    %155 = vector.broadcast %154 : vector<2x16x1xf32> to vector<2x16x32xf32>
    %156 = arith.mulf %151, %155 : vector<2x16x32xf32>
    %157 = vector.shape_cast %136 : vector<1x32xf32> to vector<1x1x32xf32>
    %158 = vector.broadcast %157 : vector<1x1x32xf32> to vector<2x16x32xf32>
    %159 = arith.mulf %156, %158 : vector<2x16x32xf32>
    %160 = vector.shape_cast %138 : vector<1x32xf32> to vector<1x1x32xf32>
    %161 = vector.broadcast %160 : vector<1x1x32xf32> to vector<2x16x32xf32>
    %162 = arith.addf %159, %161 : vector<2x16x32xf32>
    %c0_59 = arith.constant 0 : index
    %c0_60 = arith.constant 0 : index
    %c0_61 = arith.constant 0 : index
    %163 = vector.load %arg9[%c0_59, %c0_60, %c0_61] : memref<2x32x128xf32, #tpu.memory_space<vmem>>, vector<1x32x128xf32>
    %164 = vector.shape_cast %163 : vector<1x32x128xf32> to vector<32x128xf32>
    %165 = vector.shape_cast %162 : vector<2x16x32xf32> to vector<32x32xf32>
    %cst_62 = arith.constant dense<0.000000e+00> : vector<32x128xf32>
    %166 = tpu.matmul %165, %164, %cst_62 {dimension_numbers = #tpu.dot_dimension_numbers<[1], [0], [0], [1], [0, 0, 1, 1], [], []>} : vector<32x32xf32>, vector<32x128xf32>, vector<32x128xf32> -> vector<32x128xf32>
    %167 = vector.shape_cast %166 : vector<32x128xf32> to vector<2x16x128xf32>
    %168 = vector.extract_strided_slice %167 {offsets = [0, 0, 0], sizes = [2, 16, 64], strides = [1, 1, 1]} : vector<2x16x128xf32> to vector<2x16x64xf32>
    %169 = vector.extract_strided_slice %167 {offsets = [0, 0, 64], sizes = [2, 16, 64], strides = [1, 1, 1]} : vector<2x16x128xf32> to vector<2x16x64xf32>
    %170 = arith.negf %168 : vector<2x16x64xf32>
    %171 = math.exp %170 : vector<2x16x64xf32>
    %cst_63 = arith.constant 1.000000e+00 : f32
    %172 = vector.broadcast %cst_63 : f32 to vector<2x16x64xf32>
    %173 = arith.addf %172, %171 : vector<2x16x64xf32>
    %174 = arith.divf %172, %173 : vector<2x16x64xf32>
    %175 = arith.mulf %168, %174 : vector<2x16x64xf32>
    %176 = arith.mulf %175, %169 : vector<2x16x64xf32>
    %c0_64 = arith.constant 0 : index
    %c0_65 = arith.constant 0 : index
    %c0_66 = arith.constant 0 : index
    %177 = vector.load %arg10[%c0_64, %c0_65, %c0_66] : memref<2x64x32xf32, #tpu.memory_space<vmem>>, vector<1x64x32xf32>
    %178 = vector.shape_cast %177 : vector<1x64x32xf32> to vector<64x32xf32>
    %179 = vector.shape_cast %176 : vector<2x16x64xf32> to vector<32x64xf32>
    %cst_67 = arith.constant dense<0.000000e+00> : vector<32x32xf32>
    %180 = tpu.matmul %179, %178, %cst_67 {dimension_numbers = #tpu.dot_dimension_numbers<[1], [0], [0], [1], [0, 0, 1, 1], [], []>} : vector<32x64xf32>, vector<64x32xf32>, vector<32x32xf32> -> vector<32x32xf32>
    %181 = vector.shape_cast %180 : vector<32x32xf32> to vector<2x16x32xf32>
    %182 = arith.addf %134, %181 : vector<2x16x32xf32>
    %c1 = arith.constant 1 : index
    %c0_68 = arith.constant 0 : index
    %c0_69 = arith.constant 0 : index
    %183 = vector.load %arg3[%c1, %c0_68, %c0_69] : memref<2x1x32xf32, #tpu.memory_space<vmem>>, vector<1x1x32xf32>
    %184 = vector.shape_cast %183 : vector<1x1x32xf32> to vector<1x32xf32>
    %c1_70 = arith.constant 1 : index
    %c0_71 = arith.constant 0 : index
    %c0_72 = arith.constant 0 : index
    %185 = vector.load %arg4[%c1_70, %c0_71, %c0_72] : memref<2x1x32xf32, #tpu.memory_space<vmem>>, vector<1x1x32xf32>
    %186 = vector.shape_cast %185 : vector<1x1x32xf32> to vector<1x32xf32>
    %cst_73 = arith.constant dense<0.000000e+00> : vector<2x16xf32>
    %187 = vector.multi_reduction <add>, %182, %cst_73 [2] : vector<2x16x32xf32> to vector<2x16xf32>
    %188 = vector.shape_cast %187 : vector<2x16xf32> to vector<2x16x1xf32>
    %cst_74 = arith.constant 3.200000e+01 : f32
    %189 = vector.broadcast %cst_74 : f32 to vector<2x16x1xf32>
    %190 = arith.divf %188, %189 : vector<2x16x1xf32>
    %191 = vector.broadcast %190 : vector<2x16x1xf32> to vector<2x16x32xf32>
    %192 = arith.subf %182, %191 : vector<2x16x32xf32>
    %193 = arith.mulf %192, %192 : vector<2x16x32xf32>
    %cst_75 = arith.constant dense<0.000000e+00> : vector<2x16xf32>
    %194 = vector.multi_reduction <add>, %193, %cst_75 [2] : vector<2x16x32xf32> to vector<2x16xf32>
    %195 = vector.shape_cast %194 : vector<2x16xf32> to vector<2x16x1xf32>
    %cst_76 = arith.constant 3.200000e+01 : f32
    %196 = vector.broadcast %cst_76 : f32 to vector<2x16x1xf32>
    %197 = arith.divf %195, %196 : vector<2x16x1xf32>
    %198 = vector.broadcast %190 : vector<2x16x1xf32> to vector<2x16x32xf32>
    %199 = arith.subf %182, %198 : vector<2x16x32xf32>
    %cst_77 = arith.constant 9.99999974E-6 : f32
    %200 = vector.broadcast %cst_77 : f32 to vector<2x16x1xf32>
    %201 = arith.addf %197, %200 : vector<2x16x1xf32>
    %202 = math.rsqrt %201 : vector<2x16x1xf32>
    %203 = vector.broadcast %202 : vector<2x16x1xf32> to vector<2x16x32xf32>
    %204 = arith.mulf %199, %203 : vector<2x16x32xf32>
    %205 = vector.shape_cast %184 : vector<1x32xf32> to vector<1x1x32xf32>
    %206 = vector.broadcast %205 : vector<1x1x32xf32> to vector<2x16x32xf32>
    %207 = arith.mulf %204, %206 : vector<2x16x32xf32>
    %208 = vector.shape_cast %186 : vector<1x32xf32> to vector<1x1x32xf32>
    %209 = vector.broadcast %208 : vector<1x1x32xf32> to vector<2x16x32xf32>
    %210 = arith.addf %207, %209 : vector<2x16x32xf32>
    %c1_78 = arith.constant 1 : index
    %c0_79 = arith.constant 0 : index
    %c0_80 = arith.constant 0 : index
    %211 = vector.load %arg5[%c1_78, %c0_79, %c0_80] : memref<2x32x96xf32, #tpu.memory_space<vmem>>, vector<1x32x96xf32>
    %212 = vector.shape_cast %211 : vector<1x32x96xf32> to vector<32x96xf32>
    %213 = vector.shape_cast %210 : vector<2x16x32xf32> to vector<32x32xf32>
    %cst_81 = arith.constant dense<0.000000e+00> : vector<32x96xf32>
    %214 = tpu.matmul %213, %212, %cst_81 {dimension_numbers = #tpu.dot_dimension_numbers<[1], [0], [0], [1], [0, 0, 1, 1], [], []>} : vector<32x32xf32>, vector<32x96xf32>, vector<32x96xf32> -> vector<32x96xf32>
    %215 = vector.shape_cast %214 : vector<32x96xf32> to vector<2x16x96xf32>
    %216 = vector.extract_strided_slice %215 {offsets = [0, 0, 0], sizes = [2, 16, 32], strides = [1, 1, 1]} : vector<2x16x96xf32> to vector<2x16x32xf32>
    %217 = vector.extract_strided_slice %215 {offsets = [0, 0, 32], sizes = [2, 16, 32], strides = [1, 1, 1]} : vector<2x16x96xf32> to vector<2x16x32xf32>
    %218 = vector.extract_strided_slice %215 {offsets = [0, 0, 64], sizes = [2, 16, 32], strides = [1, 1, 1]} : vector<2x16x96xf32> to vector<2x16x32xf32>
    %c1_82 = arith.constant 1 : index
    %c0_83 = arith.constant 0 : index
    %c0_84 = arith.constant 0 : index
    %219 = vector.load %arg6[%c1_82, %c0_83, %c0_84] : memref<2x32x32xf32, #tpu.memory_space<vmem>>, vector<1x32x32xf32>
    %220 = vector.shape_cast %219 : vector<1x32x32xf32> to vector<32x32xf32>
    %221 = vector.extract_strided_slice %216 {offsets = [0, 0, 0], sizes = [2, 16, 8], strides = [1, 1, 1]} : vector<2x16x32xf32> to vector<2x16x8xf32>
    %222 = vector.extract_strided_slice %217 {offsets = [0, 0, 0], sizes = [2, 16, 8], strides = [1, 1, 1]} : vector<2x16x32xf32> to vector<2x16x8xf32>
    %223 = vector.extract_strided_slice %218 {offsets = [0, 0, 0], sizes = [2, 16, 8], strides = [1, 1, 1]} : vector<2x16x32xf32> to vector<2x16x8xf32>
    "tpu.trace_start"() <{level = 10 : i32, message = "bnd,bmd->bnm"}> : () -> ()
    %cst_85 = arith.constant dense<0.000000e+00> : vector<2x16x16xf32>
    %224 = tpu.matmul %221, %222, %cst_85 {dimension_numbers = #tpu.dot_dimension_numbers<[2], [2], [1], [1], [0, 0, 0, 1, 1, 1], [0], [0]>} : vector<2x16x8xf32>, vector<2x16x8xf32>, vector<2x16x16xf32> -> vector<2x16x16xf32>
    "tpu.trace_stop"() : () -> ()
    %cst_86 = arith.constant 0.353553385 : f32
    %225 = vector.broadcast %cst_86 : f32 to vector<2x16x16xf32>
    %226 = arith.mulf %224, %225 : vector<2x16x16xf32>
    %cst_87 = arith.constant dense<0xFF800000> : vector<2x16xf32>
    %227 = vector.multi_reduction <maximumf>, %226, %cst_87 [2] : vector<2x16x16xf32> to vector<2x16xf32>
    %228 = vector.shape_cast %227 : vector<2x16xf32> to vector<2x16x1xf32>
    %229 = vector.broadcast %228 : vector<2x16x1xf32> to vector<2x16x16xf32>
    %230 = arith.subf %226, %229 : vector<2x16x16xf32>
    %231 = math.exp %230 : vector<2x16x16xf32>
    %cst_88 = arith.constant dense<0.000000e+00> : vector<2x16xf32>
    %232 = vector.multi_reduction <add>, %231, %cst_88 [2] : vector<2x16x16xf32> to vector<2x16xf32>
    %233 = vector.shape_cast %232 : vector<2x16xf32> to vector<2x16x1xf32>
    %234 = tpu.reciprocal %233 {approx = true} : vector<2x16x1xf32> -> vector<2x16x1xf32>
    %235 = vector.broadcast %234 : vector<2x16x1xf32> to vector<2x16x16xf32>
    %236 = arith.mulf %231, %235 : vector<2x16x16xf32>
    "tpu.trace_start"() <{level = 10 : i32, message = "bnm,bmd->bnd"}> : () -> ()
    %cst_89 = arith.constant dense<0.000000e+00> : vector<2x16x8xf32>
    %237 = tpu.matmul %236, %223, %cst_89 {dimension_numbers = #tpu.dot_dimension_numbers<[2], [1], [1], [2], [0, 0, 0, 1, 1, 2], [0], [0]>} : vector<2x16x16xf32>, vector<2x16x8xf32>, vector<2x16x8xf32> -> vector<2x16x8xf32>
    "tpu.trace_stop"() : () -> ()
    %238 = vector.extract_strided_slice %220 {offsets = [0, 0], sizes = [8, 32], strides = [1, 1]} : vector<32x32xf32> to vector<8x32xf32>
    %239 = vector.shape_cast %237 : vector<2x16x8xf32> to vector<32x8xf32>
    %cst_90 = arith.constant dense<0.000000e+00> : vector<32x32xf32>
    %240 = tpu.matmul %239, %238, %cst_90 {dimension_numbers = #tpu.dot_dimension_numbers<[1], [0], [0], [1], [0, 0, 1, 1], [], []>} : vector<32x8xf32>, vector<8x32xf32>, vector<32x32xf32> -> vector<32x32xf32>
    %241 = vector.shape_cast %240 : vector<32x32xf32> to vector<2x16x32xf32>
    %242 = vector.extract_strided_slice %216 {offsets = [0, 0, 8], sizes = [2, 16, 8], strides = [1, 1, 1]} : vector<2x16x32xf32> to vector<2x16x8xf32>
    %243 = vector.extract_strided_slice %217 {offsets = [0, 0, 8], sizes = [2, 16, 8], strides = [1, 1, 1]} : vector<2x16x32xf32> to vector<2x16x8xf32>
    %244 = vector.extract_strided_slice %218 {offsets = [0, 0, 8], sizes = [2, 16, 8], strides = [1, 1, 1]} : vector<2x16x32xf32> to vector<2x16x8xf32>
    "tpu.trace_start"() <{level = 10 : i32, message = "bnd,bmd->bnm"}> : () -> ()
    %cst_91 = arith.constant dense<0.000000e+00> : vector<2x16x16xf32>
    %245 = tpu.matmul %242, %243, %cst_91 {dimension_numbers = #tpu.dot_dimension_numbers<[2], [2], [1], [1], [0, 0, 0, 1, 1, 1], [0], [0]>} : vector<2x16x8xf32>, vector<2x16x8xf32>, vector<2x16x16xf32> -> vector<2x16x16xf32>
    "tpu.trace_stop"() : () -> ()
    %cst_92 = arith.constant 0.353553385 : f32
    %246 = vector.broadcast %cst_92 : f32 to vector<2x16x16xf32>
    %247 = arith.mulf %245, %246 : vector<2x16x16xf32>
    %cst_93 = arith.constant dense<0xFF800000> : vector<2x16xf32>
    %248 = vector.multi_reduction <maximumf>, %247, %cst_93 [2] : vector<2x16x16xf32> to vector<2x16xf32>
    %249 = vector.shape_cast %248 : vector<2x16xf32> to vector<2x16x1xf32>
    %250 = vector.broadcast %249 : vector<2x16x1xf32> to vector<2x16x16xf32>
    %251 = arith.subf %247, %250 : vector<2x16x16xf32>
    %252 = math.exp %251 : vector<2x16x16xf32>
    %cst_94 = arith.constant dense<0.000000e+00> : vector<2x16xf32>
    %253 = vector.multi_reduction <add>, %252, %cst_94 [2] : vector<2x16x16xf32> to vector<2x16xf32>
    %254 = vector.shape_cast %253 : vector<2x16xf32> to vector<2x16x1xf32>
    %255 = tpu.reciprocal %254 {approx = true} : vector<2x16x1xf32> -> vector<2x16x1xf32>
    %256 = vector.broadcast %255 : vector<2x16x1xf32> to vector<2x16x16xf32>
    %257 = arith.mulf %252, %256 : vector<2x16x16xf32>
    "tpu.trace_start"() <{level = 10 : i32, message = "bnm,bmd->bnd"}> : () -> ()
    %cst_95 = arith.constant dense<0.000000e+00> : vector<2x16x8xf32>
    %258 = tpu.matmul %257, %244, %cst_95 {dimension_numbers = #tpu.dot_dimension_numbers<[2], [1], [1], [2], [0, 0, 0, 1, 1, 2], [0], [0]>} : vector<2x16x16xf32>, vector<2x16x8xf32>, vector<2x16x8xf32> -> vector<2x16x8xf32>
    "tpu.trace_stop"() : () -> ()
    %259 = vector.extract_strided_slice %220 {offsets = [8, 0], sizes = [8, 32], strides = [1, 1]} : vector<32x32xf32> to vector<8x32xf32>
    %260 = vector.shape_cast %258 : vector<2x16x8xf32> to vector<32x8xf32>
    %cst_96 = arith.constant dense<0.000000e+00> : vector<32x32xf32>
    %261 = tpu.matmul %260, %259, %cst_96 {dimension_numbers = #tpu.dot_dimension_numbers<[1], [0], [0], [1], [0, 0, 1, 1], [], []>} : vector<32x8xf32>, vector<8x32xf32>, vector<32x32xf32> -> vector<32x32xf32>
    %262 = vector.shape_cast %261 : vector<32x32xf32> to vector<2x16x32xf32>
    %263 = arith.addf %241, %262 : vector<2x16x32xf32>
    %264 = vector.extract_strided_slice %216 {offsets = [0, 0, 16], sizes = [2, 16, 8], strides = [1, 1, 1]} : vector<2x16x32xf32> to vector<2x16x8xf32>
    %265 = vector.extract_strided_slice %217 {offsets = [0, 0, 16], sizes = [2, 16, 8], strides = [1, 1, 1]} : vector<2x16x32xf32> to vector<2x16x8xf32>
    %266 = vector.extract_strided_slice %218 {offsets = [0, 0, 16], sizes = [2, 16, 8], strides = [1, 1, 1]} : vector<2x16x32xf32> to vector<2x16x8xf32>
    "tpu.trace_start"() <{level = 10 : i32, message = "bnd,bmd->bnm"}> : () -> ()
    %cst_97 = arith.constant dense<0.000000e+00> : vector<2x16x16xf32>
    %267 = tpu.matmul %264, %265, %cst_97 {dimension_numbers = #tpu.dot_dimension_numbers<[2], [2], [1], [1], [0, 0, 0, 1, 1, 1], [0], [0]>} : vector<2x16x8xf32>, vector<2x16x8xf32>, vector<2x16x16xf32> -> vector<2x16x16xf32>
    "tpu.trace_stop"() : () -> ()
    %cst_98 = arith.constant 0.353553385 : f32
    %268 = vector.broadcast %cst_98 : f32 to vector<2x16x16xf32>
    %269 = arith.mulf %267, %268 : vector<2x16x16xf32>
    %cst_99 = arith.constant dense<0xFF800000> : vector<2x16xf32>
    %270 = vector.multi_reduction <maximumf>, %269, %cst_99 [2] : vector<2x16x16xf32> to vector<2x16xf32>
    %271 = vector.shape_cast %270 : vector<2x16xf32> to vector<2x16x1xf32>
    %272 = vector.broadcast %271 : vector<2x16x1xf32> to vector<2x16x16xf32>
    %273 = arith.subf %269, %272 : vector<2x16x16xf32>
    %274 = math.exp %273 : vector<2x16x16xf32>
    %cst_100 = arith.constant dense<0.000000e+00> : vector<2x16xf32>
    %275 = vector.multi_reduction <add>, %274, %cst_100 [2] : vector<2x16x16xf32> to vector<2x16xf32>
    %276 = vector.shape_cast %275 : vector<2x16xf32> to vector<2x16x1xf32>
    %277 = tpu.reciprocal %276 {approx = true} : vector<2x16x1xf32> -> vector<2x16x1xf32>
    %278 = vector.broadcast %277 : vector<2x16x1xf32> to vector<2x16x16xf32>
    %279 = arith.mulf %274, %278 : vector<2x16x16xf32>
    "tpu.trace_start"() <{level = 10 : i32, message = "bnm,bmd->bnd"}> : () -> ()
    %cst_101 = arith.constant dense<0.000000e+00> : vector<2x16x8xf32>
    %280 = tpu.matmul %279, %266, %cst_101 {dimension_numbers = #tpu.dot_dimension_numbers<[2], [1], [1], [2], [0, 0, 0, 1, 1, 2], [0], [0]>} : vector<2x16x16xf32>, vector<2x16x8xf32>, vector<2x16x8xf32> -> vector<2x16x8xf32>
    "tpu.trace_stop"() : () -> ()
    %281 = vector.extract_strided_slice %220 {offsets = [16, 0], sizes = [8, 32], strides = [1, 1]} : vector<32x32xf32> to vector<8x32xf32>
    %282 = vector.shape_cast %280 : vector<2x16x8xf32> to vector<32x8xf32>
    %cst_102 = arith.constant dense<0.000000e+00> : vector<32x32xf32>
    %283 = tpu.matmul %282, %281, %cst_102 {dimension_numbers = #tpu.dot_dimension_numbers<[1], [0], [0], [1], [0, 0, 1, 1], [], []>} : vector<32x8xf32>, vector<8x32xf32>, vector<32x32xf32> -> vector<32x32xf32>
    %284 = vector.shape_cast %283 : vector<32x32xf32> to vector<2x16x32xf32>
    %285 = arith.addf %263, %284 : vector<2x16x32xf32>
    %286 = vector.extract_strided_slice %216 {offsets = [0, 0, 24], sizes = [2, 16, 8], strides = [1, 1, 1]} : vector<2x16x32xf32> to vector<2x16x8xf32>
    %287 = vector.extract_strided_slice %217 {offsets = [0, 0, 24], sizes = [2, 16, 8], strides = [1, 1, 1]} : vector<2x16x32xf32> to vector<2x16x8xf32>
    %288 = vector.extract_strided_slice %218 {offsets = [0, 0, 24], sizes = [2, 16, 8], strides = [1, 1, 1]} : vector<2x16x32xf32> to vector<2x16x8xf32>
    "tpu.trace_start"() <{level = 10 : i32, message = "bnd,bmd->bnm"}> : () -> ()
    %cst_103 = arith.constant dense<0.000000e+00> : vector<2x16x16xf32>
    %289 = tpu.matmul %286, %287, %cst_103 {dimension_numbers = #tpu.dot_dimension_numbers<[2], [2], [1], [1], [0, 0, 0, 1, 1, 1], [0], [0]>} : vector<2x16x8xf32>, vector<2x16x8xf32>, vector<2x16x16xf32> -> vector<2x16x16xf32>
    "tpu.trace_stop"() : () -> ()
    %cst_104 = arith.constant 0.353553385 : f32
    %290 = vector.broadcast %cst_104 : f32 to vector<2x16x16xf32>
    %291 = arith.mulf %289, %290 : vector<2x16x16xf32>
    %cst_105 = arith.constant dense<0xFF800000> : vector<2x16xf32>
    %292 = vector.multi_reduction <maximumf>, %291, %cst_105 [2] : vector<2x16x16xf32> to vector<2x16xf32>
    %293 = vector.shape_cast %292 : vector<2x16xf32> to vector<2x16x1xf32>
    %294 = vector.broadcast %293 : vector<2x16x1xf32> to vector<2x16x16xf32>
    %295 = arith.subf %291, %294 : vector<2x16x16xf32>
    %296 = math.exp %295 : vector<2x16x16xf32>
    %cst_106 = arith.constant dense<0.000000e+00> : vector<2x16xf32>
    %297 = vector.multi_reduction <add>, %296, %cst_106 [2] : vector<2x16x16xf32> to vector<2x16xf32>
    %298 = vector.shape_cast %297 : vector<2x16xf32> to vector<2x16x1xf32>
    %299 = tpu.reciprocal %298 {approx = true} : vector<2x16x1xf32> -> vector<2x16x1xf32>
    %300 = vector.broadcast %299 : vector<2x16x1xf32> to vector<2x16x16xf32>
    %301 = arith.mulf %296, %300 : vector<2x16x16xf32>
    "tpu.trace_start"() <{level = 10 : i32, message = "bnm,bmd->bnd"}> : () -> ()
    %cst_107 = arith.constant dense<0.000000e+00> : vector<2x16x8xf32>
    %302 = tpu.matmul %301, %288, %cst_107 {dimension_numbers = #tpu.dot_dimension_numbers<[2], [1], [1], [2], [0, 0, 0, 1, 1, 2], [0], [0]>} : vector<2x16x16xf32>, vector<2x16x8xf32>, vector<2x16x8xf32> -> vector<2x16x8xf32>
    "tpu.trace_stop"() : () -> ()
    %303 = vector.extract_strided_slice %220 {offsets = [24, 0], sizes = [8, 32], strides = [1, 1]} : vector<32x32xf32> to vector<8x32xf32>
    %304 = vector.shape_cast %302 : vector<2x16x8xf32> to vector<32x8xf32>
    %cst_108 = arith.constant dense<0.000000e+00> : vector<32x32xf32>
    %305 = tpu.matmul %304, %303, %cst_108 {dimension_numbers = #tpu.dot_dimension_numbers<[1], [0], [0], [1], [0, 0, 1, 1], [], []>} : vector<32x8xf32>, vector<8x32xf32>, vector<32x32xf32> -> vector<32x32xf32>
    %306 = vector.shape_cast %305 : vector<32x32xf32> to vector<2x16x32xf32>
    %307 = arith.addf %285, %306 : vector<2x16x32xf32>
    %308 = arith.addf %182, %307 : vector<2x16x32xf32>
    %c1_109 = arith.constant 1 : index
    %c0_110 = arith.constant 0 : index
    %c0_111 = arith.constant 0 : index
    %309 = vector.load %arg7[%c1_109, %c0_110, %c0_111] : memref<2x1x32xf32, #tpu.memory_space<vmem>>, vector<1x1x32xf32>
    %310 = vector.shape_cast %309 : vector<1x1x32xf32> to vector<1x32xf32>
    %c1_112 = arith.constant 1 : index
    %c0_113 = arith.constant 0 : index
    %c0_114 = arith.constant 0 : index
    %311 = vector.load %arg8[%c1_112, %c0_113, %c0_114] : memref<2x1x32xf32, #tpu.memory_space<vmem>>, vector<1x1x32xf32>
    %312 = vector.shape_cast %311 : vector<1x1x32xf32> to vector<1x32xf32>
    %cst_115 = arith.constant dense<0.000000e+00> : vector<2x16xf32>
    %313 = vector.multi_reduction <add>, %308, %cst_115 [2] : vector<2x16x32xf32> to vector<2x16xf32>
    %314 = vector.shape_cast %313 : vector<2x16xf32> to vector<2x16x1xf32>
    %cst_116 = arith.constant 3.200000e+01 : f32
    %315 = vector.broadcast %cst_116 : f32 to vector<2x16x1xf32>
    %316 = arith.divf %314, %315 : vector<2x16x1xf32>
    %317 = vector.broadcast %316 : vector<2x16x1xf32> to vector<2x16x32xf32>
    %318 = arith.subf %308, %317 : vector<2x16x32xf32>
    %319 = arith.mulf %318, %318 : vector<2x16x32xf32>
    %cst_117 = arith.constant dense<0.000000e+00> : vector<2x16xf32>
    %320 = vector.multi_reduction <add>, %319, %cst_117 [2] : vector<2x16x32xf32> to vector<2x16xf32>
    %321 = vector.shape_cast %320 : vector<2x16xf32> to vector<2x16x1xf32>
    %cst_118 = arith.constant 3.200000e+01 : f32
    %322 = vector.broadcast %cst_118 : f32 to vector<2x16x1xf32>
    %323 = arith.divf %321, %322 : vector<2x16x1xf32>
    %324 = vector.broadcast %316 : vector<2x16x1xf32> to vector<2x16x32xf32>
    %325 = arith.subf %308, %324 : vector<2x16x32xf32>
    %cst_119 = arith.constant 9.99999974E-6 : f32
    %326 = vector.broadcast %cst_119 : f32 to vector<2x16x1xf32>
    %327 = arith.addf %323, %326 : vector<2x16x1xf32>
    %328 = math.rsqrt %327 : vector<2x16x1xf32>
    %329 = vector.broadcast %328 : vector<2x16x1xf32> to vector<2x16x32xf32>
    %330 = arith.mulf %325, %329 : vector<2x16x32xf32>
    %331 = vector.shape_cast %310 : vector<1x32xf32> to vector<1x1x32xf32>
    %332 = vector.broadcast %331 : vector<1x1x32xf32> to vector<2x16x32xf32>
    %333 = arith.mulf %330, %332 : vector<2x16x32xf32>
    %334 = vector.shape_cast %312 : vector<1x32xf32> to vector<1x1x32xf32>
    %335 = vector.broadcast %334 : vector<1x1x32xf32> to vector<2x16x32xf32>
    %336 = arith.addf %333, %335 : vector<2x16x32xf32>
    %c1_120 = arith.constant 1 : index
    %c0_121 = arith.constant 0 : index
    %c0_122 = arith.constant 0 : index
    %337 = vector.load %arg9[%c1_120, %c0_121, %c0_122] : memref<2x32x128xf32, #tpu.memory_space<vmem>>, vector<1x32x128xf32>
    %338 = vector.shape_cast %337 : vector<1x32x128xf32> to vector<32x128xf32>
    %339 = vector.shape_cast %336 : vector<2x16x32xf32> to vector<32x32xf32>
    %cst_123 = arith.constant dense<0.000000e+00> : vector<32x128xf32>
    %340 = tpu.matmul %339, %338, %cst_123 {dimension_numbers = #tpu.dot_dimension_numbers<[1], [0], [0], [1], [0, 0, 1, 1], [], []>} : vector<32x32xf32>, vector<32x128xf32>, vector<32x128xf32> -> vector<32x128xf32>
    %341 = vector.shape_cast %340 : vector<32x128xf32> to vector<2x16x128xf32>
    %342 = vector.extract_strided_slice %341 {offsets = [0, 0, 0], sizes = [2, 16, 64], strides = [1, 1, 1]} : vector<2x16x128xf32> to vector<2x16x64xf32>
    %343 = vector.extract_strided_slice %341 {offsets = [0, 0, 64], sizes = [2, 16, 64], strides = [1, 1, 1]} : vector<2x16x128xf32> to vector<2x16x64xf32>
    %344 = arith.negf %342 : vector<2x16x64xf32>
    %345 = math.exp %344 : vector<2x16x64xf32>
    %cst_124 = arith.constant 1.000000e+00 : f32
    %346 = vector.broadcast %cst_124 : f32 to vector<2x16x64xf32>
    %347 = arith.addf %346, %345 : vector<2x16x64xf32>
    %348 = arith.divf %346, %347 : vector<2x16x64xf32>
    %349 = arith.mulf %342, %348 : vector<2x16x64xf32>
    %350 = arith.mulf %349, %343 : vector<2x16x64xf32>
    %c1_125 = arith.constant 1 : index
    %c0_126 = arith.constant 0 : index
    %c0_127 = arith.constant 0 : index
    %351 = vector.load %arg10[%c1_125, %c0_126, %c0_127] : memref<2x64x32xf32, #tpu.memory_space<vmem>>, vector<1x64x32xf32>
    %352 = vector.shape_cast %351 : vector<1x64x32xf32> to vector<64x32xf32>
    %353 = vector.shape_cast %350 : vector<2x16x64xf32> to vector<32x64xf32>
    %cst_128 = arith.constant dense<0.000000e+00> : vector<32x32xf32>
    %354 = tpu.matmul %353, %352, %cst_128 {dimension_numbers = #tpu.dot_dimension_numbers<[1], [0], [0], [1], [0, 0, 1, 1], [], []>} : vector<32x64xf32>, vector<64x32xf32>, vector<32x32xf32> -> vector<32x32xf32>
    %355 = vector.shape_cast %354 : vector<32x32xf32> to vector<2x16x32xf32>
    %356 = arith.addf %308, %355 : vector<2x16x32xf32>
    %c0_129 = arith.constant 0 : index
    %c0_130 = arith.constant 0 : index
    %357 = vector.load %arg11[%c0_129, %c0_130] : memref<1x32xf32, #tpu.memory_space<vmem>>, vector<1x32xf32>
    %c0_131 = arith.constant 0 : index
    %c0_132 = arith.constant 0 : index
    %358 = vector.load %arg12[%c0_131, %c0_132] : memref<1x32xf32, #tpu.memory_space<vmem>>, vector<1x32xf32>
    %cst_133 = arith.constant dense<0.000000e+00> : vector<2x16xf32>
    %359 = vector.multi_reduction <add>, %356, %cst_133 [2] : vector<2x16x32xf32> to vector<2x16xf32>
    %360 = vector.shape_cast %359 : vector<2x16xf32> to vector<2x16x1xf32>
    %cst_134 = arith.constant 3.200000e+01 : f32
    %361 = vector.broadcast %cst_134 : f32 to vector<2x16x1xf32>
    %362 = arith.divf %360, %361 : vector<2x16x1xf32>
    %363 = vector.broadcast %362 : vector<2x16x1xf32> to vector<2x16x32xf32>
    %364 = arith.subf %356, %363 : vector<2x16x32xf32>
    %365 = arith.mulf %364, %364 : vector<2x16x32xf32>
    %cst_135 = arith.constant dense<0.000000e+00> : vector<2x16xf32>
    %366 = vector.multi_reduction <add>, %365, %cst_135 [2] : vector<2x16x32xf32> to vector<2x16xf32>
    %367 = vector.shape_cast %366 : vector<2x16xf32> to vector<2x16x1xf32>
    %cst_136 = arith.constant 3.200000e+01 : f32
    %368 = vector.broadcast %cst_136 : f32 to vector<2x16x1xf32>
    %369 = arith.divf %367, %368 : vector<2x16x1xf32>
    %370 = vector.broadcast %362 : vector<2x16x1xf32> to vector<2x16x32xf32>
    %371 = arith.subf %356, %370 : vector<2x16x32xf32>
    %cst_137 = arith.constant 9.99999974E-6 : f32
    %372 = vector.broadcast %cst_137 : f32 to vector<2x16x1xf32>
    %373 = arith.addf %369, %372 : vector<2x16x1xf32>
    %374 = math.rsqrt %373 : vector<2x16x1xf32>
    %375 = vector.broadcast %374 : vector<2x16x1xf32> to vector<2x16x32xf32>
    %376 = arith.mulf %371, %375 : vector<2x16x32xf32>
    %377 = vector.shape_cast %357 : vector<1x32xf32> to vector<1x1x32xf32>
    %378 = vector.broadcast %377 : vector<1x1x32xf32> to vector<2x16x32xf32>
    %379 = arith.mulf %376, %378 : vector<2x16x32xf32>
    %380 = vector.shape_cast %358 : vector<1x32xf32> to vector<1x1x32xf32>
    %381 = vector.broadcast %380 : vector<1x1x32xf32> to vector<2x16x32xf32>
    %382 = arith.addf %379, %381 : vector<2x16x32xf32>
    %c0_138 = arith.constant 0 : index
    %c0_139 = arith.constant 0 : index
    %383 = vector.load %arg13[%c0_138, %c0_139] : memref<32x48xf32, #tpu.memory_space<vmem>>, vector<32x48xf32>
    %384 = vector.shape_cast %382 : vector<2x16x32xf32> to vector<32x32xf32>
    %cst_140 = arith.constant dense<0.000000e+00> : vector<32x48xf32>
    %385 = tpu.matmul %384, %383, %cst_140 {dimension_numbers = #tpu.dot_dimension_numbers<[1], [0], [0], [1], [0, 0, 1, 1], [], []>} : vector<32x32xf32>, vector<32x48xf32>, vector<32x48xf32> -> vector<32x48xf32>
    %386 = vector.shape_cast %385 : vector<32x48xf32> to vector<2x16x48xf32>
    %c0_141 = arith.constant 0 : index
    %c0_142 = arith.constant 0 : index
    %c0_143 = arith.constant 0 : index
    %387 = vector.load %arg14[%c0_141, %c0_142, %c0_143] : memref<2x16x48xf32, #tpu.memory_space<vmem>>, vector<2x16x48xf32>
    tpu.vector_store %arg14[%c0_141, %c0_142, %c0_143], %386 {strides = array<i32>} : memref<2x16x48xf32, #tpu.memory_space<vmem>>, vector<2x16x48xf32>,
    return
  }
}

</mosaic_0001>

<llo_original>
// kernel: freq_transformer_decoder_forward.1
$region0: #{freq_transformer_decoder_forward.1}
  #allocation0 [shape = 'u32[]', space=smem, size = 0x4, offset = 0x4, fixed_abs, tag = 'smem constant byte address 0x4 - core index']
  #allocation1 [shape = 'u32[144,128]{1,0:T(1,128)}', space=vmem, size = 0x12000, scoped, tag = 'internal scratch']
  %s0 = inlined_call_operand.vmem [shape: f32[2,16,8], index: 0, kind: input, shape index: {}]
  %s1 = inlined_call_operand.vmem [shape: f32[16,32], index: 1, kind: input, shape index: {}]
  %s2 = inlined_call_operand.vmem [shape: f32[8,32], index: 2, kind: input, shape index: {}]
  %s3 = inlined_call_operand.hbm [shape: f32[2,1,32], index: 3, kind: input, shape index: {}]
  %s4 = inlined_call_operand.hbm [shape: f32[2,1,32], index: 4, kind: input, shape index: {}]
  %s5 = inlined_call_operand.vmem [shape: f32[2,32,96], index: 5, kind: input, shape index: {}]
  %s6 = inlined_call_operand.vmem [shape: f32[2,32,32], index: 6, kind: input, shape index: {}]
  %s7 = inlined_call_operand.hbm [shape: f32[2,1,32], index: 7, kind: input, shape index: {}]
  %s8 = inlined_call_operand.hbm [shape: f32[2,1,32], index: 8, kind: input, shape index: {}]
  %s9 = inlined_call_operand.vmem [shape: f32[2,32,128], index: 9, kind: input, shape index: {}]
  %s10 = inlined_call_operand.vmem [shape: f32[2,64,32], index: 10, kind: input, shape index: {}]
  %s11 = inlined_call_operand.vmem [shape: f32[1,32], index: 11, kind: input, shape index: {}]
  %s12 = inlined_call_operand.hbm [shape: f32[1,32], index: 12, kind: input, shape index: {}]
  %s13 = inlined_call_operand.hbm [shape: f32[32,48], index: 13, kind: input, shape index: {}]
  %s14 = inlined_call_operand.vmem [shape: f32[2,16,48], index: 14, kind: output, shape index: {}]
  %s15 = sld [smem:[#allocation0]]
  $region90: #{freq_transformer_decoder_forward.1} parent=0
    _
  %s17 = ssub.s32 1, %s15
  %s18 = scalar_select 0, %s17, %s15
  $region1: #{freq_transformer_decoder_forward.1} parent=0
    #allocation2 [shape = 'u8[1024]{0}', space=vmem, size = 0x400, scoped, tag = 'input window, operand 3, single buffered']
    #allocation3 [shape = 's32[1]{0}', space=sflag, size = 0x4, scoped, tag = 'scoped memory for freq_transformer_decoder_forward.1']
    #allocation4 [shape = 'u8[1024]{0}', space=vmem, size = 0x400, scoped, tag = 'input window, operand 4, single buffered']
    #allocation5 [shape = 's32[1]{0}', space=sflag, size = 0x4, scoped, tag = 'scoped memory for freq_transformer_decoder_forward.1']
    #allocation6 [shape = 'u8[1024]{0}', space=vmem, size = 0x400, scoped, tag = 'input window, operand 7, single buffered']
    #allocation7 [shape = 'u8[1024]{0}', space=vmem, size = 0x400, scoped, tag = 'input window, operand 8, single buffered']
    #allocation8 [shape = 's32[1]{0}', space=sflag, size = 0x4, scoped, tag = 'scoped memory for freq_transformer_decoder_forward.1']
    #allocation9 [shape = 'u8[512]{0}', space=vmem, size = 0x400, scoped, tag = 'input window, operand 12, single buffered']
    #allocation10 [shape = 'u8[16384]{0}', space=vmem, size = 0x4000, scoped, tag = 'input window, operand 13, single buffered']
    #allocation11 [shape = 's32[1]{0}', space=sflag, size = 0x4, scoped, tag = 'scoped memory for freq_transformer_decoder_forward.1']
    %19 = vsyncpa [#allocation3], 0
    %20 = vsyncpa [#allocation5], 0
    %21 = vsyncpa [#allocation8], 0
    %22 = vsyncpa [#allocation11], 0
    // Predicated region
    $region2: #{freq_transformer_decoder_forward.1} parent=1 // pred_check
      _
    $region3: #{freq_transformer_decoder_forward.1} parent=1 // pred_check_branch
      %24 = sbr.rel (0) target = $region5
    $region4: #{freq_transformer_decoder_forward.1} parent=1 // pred_region
      _
    $region5: #{freq_transformer_decoder_forward.1} parent=1 // pred_fallthru
      _
    // Predicated region
    $region6: #{freq_transformer_decoder_forward.1} parent=1 // pred_check
      _
    $region7: #{freq_transformer_decoder_forward.1} parent=1 // pred_check_branch
      %26 = sbr.rel (0) target = $region9
    $region8: #{freq_transformer_decoder_forward.1} parent=1 // pred_region
      _
    $region9: #{freq_transformer_decoder_forward.1} parent=1 // pred_fallthru
      _
    // Predicated region
    $region10: #{freq_transformer_decoder_forward.1} parent=1 // pred_check
      _
    $region11: #{freq_transformer_decoder_forward.1} parent=1 // pred_check_branch
      %28 = sbr.rel (0) target = $region13
    $region12: #{freq_transformer_decoder_forward.1} parent=1 // pred_region
      _
    $region13: #{freq_transformer_decoder_forward.1} parent=1 // pred_fallthru
      _
    // Predicated region
    $region14: #{freq_transformer_decoder_forward.1} parent=1 // pred_check
      _
    $region15: #{freq_transformer_decoder_forward.1} parent=1 // pred_check_branch
      %30 = sbr.rel (0) target = $region17
    $region16: #{freq_transformer_decoder_forward.1} parent=1 // pred_region
      %s32 = ssub.s32 32, 32
      %33 = vsyncadd [#allocation3], %s32
      %s34 = sshll.u32 [#allocation2], 4
      %s35 = int_to_ptr.vmem [resolvable:$true] %s34
      %40 = dma.hbm_to_vmem [thread:$0]  %s3, 32, %s35, [#allocation3], 16, 16, 1
    $region17: #{freq_transformer_decoder_forward.1} parent=1 // pred_fallthru
      _
    // Predicated region
    $region18: #{freq_transformer_decoder_forward.1} parent=1 // pred_check
      _
    $region19: #{freq_transformer_decoder_forward.1} parent=1 // pred_check_branch
      %42 = sbr.rel (0) target = $region21
    $region20: #{freq_transformer_decoder_forward.1} parent=1 // pred_region
      %s44 = ssub.s32 32, 32
      %45 = vsyncadd [#allocation5], %s44
      %s46 = sshll.u32 [#allocation4], 4
      %s47 = int_to_ptr.vmem [resolvable:$true] %s46
      %52 = dma.hbm_to_vmem [thread:$0]  %s4, 32, %s47, [#allocation5], 16, 16, 1
    $region21: #{freq_transformer_decoder_forward.1} parent=1 // pred_fallthru
      _
    // Predicated region
    $region22: #{freq_transformer_decoder_forward.1} parent=1 // pred_check
      _
    $region23: #{freq_transformer_decoder_forward.1} parent=1 // pred_check_branch
      %54 = sbr.rel (0) target = $region25
    $region24: #{freq_transformer_decoder_forward.1} parent=1 // pred_region
      _
    $region25: #{freq_transformer_decoder_forward.1} parent=1 // pred_fallthru
      _
    // Predicated region
    $region26: #{freq_transformer_decoder_forward.1} parent=1 // pred_check
      _
    $region27: #{freq_transformer_decoder_forward.1} parent=1 // pred_check_branch
      %56 = sbr.rel (0) target = $region29
    $region28: #{freq_transformer_decoder_forward.1} parent=1 // pred_region
      _
    $region29: #{freq_transformer_decoder_forward.1} parent=1 // pred_fallthru
      _
    // Predicated region
    $region30: #{freq_transformer_decoder_forward.1} parent=1 // pred_check
      _
    $region31: #{freq_transformer_decoder_forward.1} parent=1 // pred_check_branch
      %58 = sbr.rel (0) target = $region33
    $region32: #{freq_transformer_decoder_forward.1} parent=1 // pred_region
      %s60 = ssub.s32 32, 32
      %61 = vsyncadd [#allocation5], %s60
      %s62 = sshll.u32 [#allocation6], 4
      %s63 = int_to_ptr.vmem [resolvable:$true] %s62
      %68 = dma.hbm_to_vmem [thread:$0]  %s7, 32, %s63, [#allocation5], 16, 16, 1
    $region33: #{freq_transformer_decoder_forward.1} parent=1 // pred_fallthru
      _
    // Predicated region
    $region34: #{freq_transformer_decoder_forward.1} parent=1 // pred_check
      _
    $region35: #{freq_transformer_decoder_forward.1} parent=1 // pred_check_branch
      %70 = sbr.rel (0) target = $region37
    $region36: #{freq_transformer_decoder_forward.1} parent=1 // pred_region
      %s72 = ssub.s32 32, 32
      %73 = vsyncadd [#allocation8], %s72
      %s74 = sshll.u32 [#allocation7], 4
      %s75 = int_to_ptr.vmem [resolvable:$true] %s74
      %80 = dma.hbm_to_vmem [thread:$0]  %s8, 32, %s75, [#allocation8], 16, 16, 1
    $region37: #{freq_transformer_decoder_forward.1} parent=1 // pred_fallthru
      _
    // Predicated region
    $region38: #{freq_transformer_decoder_forward.1} parent=1 // pred_check
      _
    $region39: #{freq_transformer_decoder_forward.1} parent=1 // pred_check_branch
      %82 = sbr.rel (0) target = $region41
    $region40: #{freq_transformer_decoder_forward.1} parent=1 // pred_region
      _
    $region41: #{freq_transformer_decoder_forward.1} parent=1 // pred_fallthru
      _
    // Predicated region
    $region42: #{freq_transformer_decoder_forward.1} parent=1 // pred_check
      _
    $region43: #{freq_transformer_decoder_forward.1} parent=1 // pred_check_branch
      %84 = sbr.rel (0) target = $region45
    $region44: #{freq_transformer_decoder_forward.1} parent=1 // pred_region
      _
    $region45: #{freq_transformer_decoder_forward.1} parent=1 // pred_fallthru
      _
    // Predicated region
    $region46: #{freq_transformer_decoder_forward.1} parent=1 // pred_check
      _
    $region47: #{freq_transformer_decoder_forward.1} parent=1 // pred_check_branch
      %86 = sbr.rel (0) target = $region49
    $region48: #{freq_transformer_decoder_forward.1} parent=1 // pred_region
      _
    $region49: #{freq_transformer_decoder_forward.1} parent=1 // pred_fallthru
      _
    // Predicated region
    $region50: #{freq_transformer_decoder_forward.1} parent=1 // pred_check
      _
    $region51: #{freq_transformer_decoder_forward.1} parent=1 // pred_check_branch
      %88 = sbr.rel (0) target = $region53
    $region52: #{freq_transformer_decoder_forward.1} parent=1 // pred_region
      %s90 = ssub.s32 16, 16
      %91 = vsyncadd [#allocation8], %s90
      %s93 = sshll.u32 [#allocation9], 4
      %s94 = int_to_ptr.vmem [resolvable:$true] %s93
      %96 = dma.hbm_to_vmem [thread:$0]  %s12, 16, %s94, [#allocation8]
    $region53: #{freq_transformer_decoder_forward.1} parent=1 // pred_fallthru
      _
    // Predicated region
    $region54: #{freq_transformer_decoder_forward.1} parent=1 // pred_check
      _
    $region55: #{freq_transformer_decoder_forward.1} parent=1 // pred_check_branch
      %98 = sbr.rel (0) target = $region57
    $region56: #{freq_transformer_decoder_forward.1} parent=1 // pred_region
      %s100 = ssub.s32 512, 512
      %101 = vsyncadd [#allocation11], %s100
      %s102 = sshll.u32 [#allocation10], 4
      %s103 = int_to_ptr.vmem [resolvable:$true] %s102
      %108 = dma.hbm_to_vmem [thread:$0]  %s13, 512, %s103, [#allocation11], 128, 128, 8
    $region57: #{freq_transformer_decoder_forward.1} parent=1 // pred_fallthru
      _
    // Predicated region
    $region58: #{freq_transformer_decoder_forward.1} parent=1 // pred_check
      _
    $region59: #{freq_transformer_decoder_forward.1} parent=1 // pred_check_branch
      %110 = sbr.rel (0) target = $region61
    $region60: #{freq_transformer_decoder_forward.1} parent=1 // pred_region
      %111 = dma.done [#allocation3], 32
    $region61: #{freq_transformer_decoder_forward.1} parent=1 // pred_fallthru
      _
    // Predicated region
    $region62: #{freq_transformer_decoder_forward.1} parent=1 // pred_check
      _
    $region63: #{freq_transformer_decoder_forward.1} parent=1 // pred_check_branch
      %113 = sbr.rel (0) target = $region65
    $region64: #{freq_transformer_decoder_forward.1} parent=1 // pred_region
      %114 = dma.done [#allocation5], 32
    $region65: #{freq_transformer_decoder_forward.1} parent=1 // pred_fallthru
      _
    // Predicated region
    $region66: #{freq_transformer_decoder_forward.1} parent=1 // pred_check
      _
    $region67: #{freq_transformer_decoder_forward.1} parent=1 // pred_check_branch
      %116 = sbr.rel (0) target = $region69
    $region68: #{freq_transformer_decoder_forward.1} parent=1 // pred_region
      %117 = dma.done [#allocation5], 32
    $region69: #{freq_transformer_decoder_forward.1} parent=1 // pred_fallthru
      _
    // Predicated region
    $region70: #{freq_transformer_decoder_forward.1} parent=1 // pred_check
      _
    $region71: #{freq_transformer_decoder_forward.1} parent=1 // pred_check_branch
      %119 = sbr.rel (0) target = $region73
    $region72: #{freq_transformer_decoder_forward.1} parent=1 // pred_region
      %120 = dma.done [#allocation8], 32
    $region73: #{freq_transformer_decoder_forward.1} parent=1 // pred_fallthru
      _
    // Predicated region
    $region74: #{freq_transformer_decoder_forward.1} parent=1 // pred_check
      _
    $region75: #{freq_transformer_decoder_forward.1} parent=1 // pred_check_branch
      %122 = sbr.rel (0) target = $region77
    $region76: #{freq_transformer_decoder_forward.1} parent=1 // pred_region
      %123 = dma.done [#allocation8], 16
    $region77: #{freq_transformer_decoder_forward.1} parent=1 // pred_fallthru
      _
    // Predicated region
    $region78: #{freq_transformer_decoder_forward.1} parent=1 // pred_check
      _
    $region79: #{freq_transformer_decoder_forward.1} parent=1 // pred_check_branch
      %125 = sbr.rel (0) target = $region81
    $region80: #{freq_transformer_decoder_forward.1} parent=1 // pred_region
      %126 = dma.done [#allocation11], 512
    $region81: #{freq_transformer_decoder_forward.1} parent=1 // pred_fallthru
      _
    %v127 = vld [vmem:[%s0] sm:$0xff]
    %v128 = vld [vmem:[%s0 + $0x8] sm:$0xff]
    %v129 = vld [vmem:[%s0 + $0x10] sm:$0xff]
    %v130 = vld [vmem:[%s0 + $0x18] sm:$0xff]
    %v131 = vld [vmem:[%s2] sm:$0xff]
    %vm132 = vcmask 64512
    %v134 = vsel %vm132, %v127, 0
    %v137 = vsel %vm132, %v128, 0
    %v140 = vsel %vm132, %v129, 0
    %v143 = vsel %vm132, %v130, 0
    %145 = vmatprep.subr.mxu0 0.0
    %146 = vmatpush1.msra.mxu0 %v131
    %147 = vmatprep.subr.mxu0 0.0
    %148 = vmatpush1.msra.mxu0 0.0
    %149 = vmatprep.subr.mxu0 0.0
    %150 = vmatpush1.msra.mxu0 0.0
    %151 = vmatprep.subr.mxu0 0.0
    %152 = vmatpush1.msra.mxu0 0.0
    %153 = vmatprep.subr.mxu0 0.0
    %154 = vmatpush1.msra.mxu0 0.0
    %155 = vmatprep.subr.mxu0 0.0
    %156 = vmatpush1.msra.mxu0 0.0
    %157 = vmatprep.subr.mxu0 0.0
    %158 = vmatpush1.msra.mxu0 0.0
    %159 = vmatprep.subr.mxu0 0.0
    %160 = vmatpush1.msra.mxu0 0.0
    %161 = vmatprep.subr.mxu0 0.0
    %162 = vmatpush1.msra.mxu0 0.0
    %163 = vmatprep.subr.mxu0 0.0
    %164 = vmatpush1.msra.mxu0 0.0
    %165 = vmatprep.subr.mxu0 0.0
    %166 = vmatpush1.msra.mxu0 0.0
    %167 = vmatprep.subr.mxu0 0.0
    %168 = vmatpush1.msra.mxu0 0.0
    %169 = vmatprep.subr.mxu0 0.0
    %170 = vmatpush1.msra.mxu0 0.0
    %171 = vmatprep.subr.mxu0 0.0
    %172 = vmatpush1.msra.mxu0 0.0
    %173 = vmatprep.subr.mxu0 0.0
    %174 = vmatpush1.msra.mxu0 0.0
    %175 = vmatprep.subr.mxu0 0.0
    %176 = vmatpush1.msra.mxu0 0.0
    %177 = vmatprep.subr.mxu0 0.0
    %178 = vmatpush1.msra.mxu0 0.0
    %179 = vmatprep.subr.mxu0 0.0
    %180 = vmatpush1.msra.mxu0 0.0
    %181 = vmatprep.subr.mxu0 0.0
    %182 = vmatpush1.msra.mxu0 0.0
    %183 = vmatprep.subr.mxu0 0.0
    %184 = vmatpush1.msra.mxu0 0.0
    %185 = vmatprep.subr.mxu0 0.0
    %186 = vmatpush1.msra.mxu0 0.0
    %187 = vmatprep.subr.mxu0 0.0
    %188 = vmatpush1.msra.mxu0 0.0
    %189 = vmatprep.subr.mxu0 0.0
    %190 = vmatpush1.msra.mxu0 0.0
    %191 = vmatprep.subr.mxu0 0.0
    %192 = vmatpush1.msra.mxu0 0.0
    %193 = vmatprep.subr.mxu0 0.0
    %194 = vmatpush1.msra.mxu0 0.0
    %195 = vmatprep.subr.mxu0 0.0
    %196 = vmatpush1.msra.mxu0 0.0
    %197 = vmatprep.subr.mxu0 0.0
    %198 = vmatpush1.msra.mxu0 0.0
    %199 = vmatprep.subr.mxu0 0.0
    %200 = vmatpush1.msra.mxu0 0.0
    %201 = vmatprep.subr.mxu0 0.0
    %202 = vmatpush1.msra.mxu0 0.0
    %203 = vmatprep.subr.mxu0 0.0
    %204 = vmatpush1.msra.mxu0 0.0
    %205 = vmatprep.subr.mxu0 0.0
    %206 = vmatpush1.msra.mxu0 0.0
    %207 = vmatprep.subr.mxu0 0.0
    %208 = vmatpush1.msra.mxu0 0.0
    %209 = vmatprep.mubr.f32.mxu0 0.0
    %210 = vmatmul.mubr.f32.gmra.mrb[0].mxu0 %v134
    %v211 = vpop.f32.mrb[0].mxu0
    %v212 = vadd.f32 0.0, %v211
    %v213 = vpop.f32.mrb[0].mxu0
    %214 = vmatprep.mubr.f32.mxu0 0.0
    %215 = vmatmul.mubr.f32.gmra.mrb[0].mxu0 %v137
    %v216 = vpop.f32.mrb[0].mxu0
    %v217 = vadd.f32 0.0, %v216
    %v218 = vpop.f32.mrb[0].mxu0
    %219 = vmatprep.mubr.f32.mxu0 0.0
    %220 = vmatmul.mubr.f32.gmra.mrb[0].mxu0 %v140
    %v221 = vpop.f32.mrb[0].mxu0
    %v222 = vadd.f32 0.0, %v221
    %v223 = vpop.f32.mrb[0].mxu0
    %224 = vmatprep.mubr.f32.mxu0 0.0
    %225 = vmatmul.mubr.f32.gmra.mrb[0].mxu0 %v143
    %v226 = vpop.f32.mrb[0].mxu0
    %v227 = vadd.f32 0.0, %v226
    %v228 = vpop.f32.mrb[0].mxu0
    %229 = vdwg.mxu0
    %v230 = vld [vmem:[%s1] sm:$0xff]
    %v231 = vld [vmem:[%s1 + $0x8] sm:$0xff]
    %v232 = vadd.f32 %v212, %v230
    %v233 = vadd.f32 %v217, %v231
    %v234 = vadd.f32 %v222, %v230
    %v235 = vadd.f32 %v227, %v231
    %v236 = vld [vmem:[#allocation2] sm:$0x1]
    %v237 = vld [vmem:[#allocation4] sm:$0x1]
    %vm238 = vcmask 261120
    %v239 = vsel %vm238, %v232, 0.0
    %240 = vadd.xlane.f32.xlu0 %v239
    %v241 = vpop.xlane.xlu0 %240
    %v242 = vsel %vm238, %v233, 0.0
    %243 = vadd.xlane.f32.xlu0 %v242
    %v244 = vpop.xlane.xlu0 %243
    %v245 = vsel %vm238, %v234, 0.0
    %246 = vadd.xlane.f32.xlu0 %v245
    %v247 = vpop.xlane.xlu0 %246
    %v248 = vsel %vm238, %v235, 0.0
    %249 = vadd.xlane.f32.xlu0 %v248
    %v250 = vpop.xlane.xlu0 %249
    %v251 = vrcp.pop 32.0
    %v252 = vmul.f32 %v241, %v251
    %v253 = vmul.f32 %v244, %v251
    %v254 = vmul.f32 %v247, %v251
    %v255 = vmul.f32 %v250, %v251
    %v256 = vsub.f32 %v232, %v252
    %v257 = vsub.f32 %v233, %v253
    %v258 = vsub.f32 %v234, %v254
    %v259 = vsub.f32 %v235, %v255
    %v260 = vmul.f32 %v256, %v256
    %v261 = vmul.f32 %v257, %v257
    %v262 = vmul.f32 %v258, %v258
    %v263 = vmul.f32 %v259, %v259
    %v264 = vsel %vm238, %v260, 0.0
    %265 = vadd.xlane.f32.xlu0 %v264
    %v266 = vpop.xlane.xlu0 %265
    %v267 = vsel %vm238, %v261, 0.0
    %268 = vadd.xlane.f32.xlu0 %v267
    %v269 = vpop.xlane.xlu0 %268
    %v270 = vsel %vm238, %v262, 0.0
    %271 = vadd.xlane.f32.xlu0 %v270
    %v272 = vpop.xlane.xlu0 %271
    %v273 = vsel %vm238, %v263, 0.0
    %274 = vadd.xlane.f32.xlu0 %v273
    %v275 = vpop.xlane.xlu0 %274
    %v276 = vmul.f32 %v266, %v251
    %v277 = vmul.f32 %v269, %v251
    %v278 = vmul.f32 %v272, %v251
    %v279 = vmul.f32 %v275, %v251
    %v280 = vadd.f32 %v276, 1e-05
    %v281 = vadd.f32 %v277, 1e-05
    %v282 = vadd.f32 %v278, 1e-05
    %v283 = vadd.f32 %v279, 1e-05
    %v284 = vrsqrt.pop %v280
    %v285 = vrsqrt.pop %v281
    %v286 = vrsqrt.pop %v282
    %v287 = vrsqrt.pop %v283
    %v288 = vmul.f32 %v256, %v284
    %v289 = vmul.f32 %v257, %v285
    %v290 = vmul.f32 %v258, %v286
    %v291 = vmul.f32 %v259, %v287
    %v293 = vlaneseq
    %v294 = vshrl.u32 %v293, 7
    %v295 = vsub.s32 0, %v294
    %v296 = vrot.slane %v236, %v295
    %v298 = vmul.f32 %v288, %v296
    %v299 = vmul.f32 %v289, %v296
    %v300 = vmul.f32 %v290, %v296
    %v301 = vmul.f32 %v291, %v296
    %v303 = vlaneseq
    %v304 = vshrl.u32 %v303, 7
    %v305 = vsub.s32 0, %v304
    %v306 = vrot.slane %v237, %v305
    %v308 = vadd.f32 %v298, %v306
    %v309 = vadd.f32 %v299, %v306
    %v310 = vadd.f32 %v300, %v306
    %v311 = vadd.f32 %v301, %v306
    %v312 = vld [vmem:[%s5] sm:$0xff]
    %v313 = vld [vmem:[%s5 + $0x8] sm:$0xff]
    %v314 = vld [vmem:[%s5 + $0x10] sm:$0xff]
    %v315 = vld [vmem:[%s5 + $0x18] sm:$0xff]
    %v317 = vsel %vm238, %v308, 0
    %v320 = vsel %vm238, %v309, 0
    %v323 = vsel %vm238, %v310, 0
    %v326 = vsel %vm238, %v311, 0
    %328 = vmatprep.subr.mxu0 0.0
    %329 = vmatpush1.msra.mxu0 %v312
    %330 = vmatprep.subr.mxu0 0.0
    %331 = vmatpush1.msra.mxu0 %v313
    %332 = vmatprep.subr.mxu0 0.0
    %333 = vmatpush1.msra.mxu0 %v314
    %334 = vmatprep.subr.mxu0 0.0
    %335 = vmatpush1.msra.mxu0 %v315
    %336 = vmatprep.subr.mxu0 0.0
    %337 = vmatpush1.msra.mxu0 0.0
    %338 = vmatprep.subr.mxu0 0.0
    %339 = vmatpush1.msra.mxu0 0.0
    %340 = vmatprep.subr.mxu0 0.0
    %341 = vmatpush1.msra.mxu0 0.0
    %342 = vmatprep.subr.mxu0 0.0
    %343 = vmatpush1.msra.mxu0 0.0
    %344 = vmatprep.subr.mxu0 0.0
    %345 = vmatpush1.msra.mxu0 0.0
    %346 = vmatprep.subr.mxu0 0.0
    %347 = vmatpush1.msra.mxu0 0.0
    %348 = vmatprep.subr.mxu0 0.0
    %349 = vmatpush1.msra.mxu0 0.0
    %350 = vmatprep.subr.mxu0 0.0
    %351 = vmatpush1.msra.mxu0 0.0
    %352 = vmatprep.subr.mxu0 0.0
    %353 = vmatpush1.msra.mxu0 0.0
    %354 = vmatprep.subr.mxu0 0.0
    %355 = vmatpush1.msra.mxu0 0.0
    %356 = vmatprep.subr.mxu0 0.0
    %357 = vmatpush1.msra.mxu0 0.0
    %358 = vmatprep.subr.mxu0 0.0
    %359 = vmatpush1.msra.mxu0 0.0
    %360 = vmatprep.subr.mxu0 0.0
    %361 = vmatpush1.msra.mxu0 0.0
    %362 = vmatprep.subr.mxu0 0.0
    %363 = vmatpush1.msra.mxu0 0.0
    %364 = vmatprep.subr.mxu0 0.0
    %365 = vmatpush1.msra.mxu0 0.0
    %366 = vmatprep.subr.mxu0 0.0
    %367 = vmatpush1.msra.mxu0 0.0
    %368 = vmatprep.subr.mxu0 0.0
    %369 = vmatpush1.msra.mxu0 0.0
    %370 = vmatprep.subr.mxu0 0.0
    %371 = vmatpush1.msra.mxu0 0.0
    %372 = vmatprep.subr.mxu0 0.0
    %373 = vmatpush1.msra.mxu0 0.0
    %374 = vmatprep.subr.mxu0 0.0
    %375 = vmatpush1.msra.mxu0 0.0
    %376 = vmatprep.subr.mxu0 0.0
    %377 = vmatpush1.msra.mxu0 0.0
    %378 = vmatprep.subr.mxu0 0.0
    %379 = vmatpush1.msra.mxu0 0.0
    %380 = vmatprep.subr.mxu0 0.0
    %381 = vmatpush1.msra.mxu0 0.0
    %382 = vmatprep.subr.mxu0 0.0
    %383 = vmatpush1.msra.mxu0 0.0
    %384 = vmatprep.subr.mxu0 0.0
    %385 = vmatpush1.msra.mxu0 0.0
    %386 = vmatprep.subr.mxu0 0.0
    %387 = vmatpush1.msra.mxu0 0.0
    %388 = vmatprep.subr.mxu0 0.0
    %389 = vmatpush1.msra.mxu0 0.0
    %390 = vmatprep.subr.mxu0 0.0
    %391 = vmatpush1.msra.mxu0 0.0
    %392 = vmatprep.mubr.f32.mxu0 0.0
    %393 = vmatmul.mubr.f32.gmra.mrb[0].mxu0 %v317
    %v394 = vpop.f32.mrb[0].mxu0
    %v395 = vadd.f32 0.0, %v394
    %v396 = vpop.f32.mrb[0].mxu0
    %397 = vmatprep.mubr.f32.mxu0 0.0
    %398 = vmatmul.mubr.f32.gmra.mrb[0].mxu0 %v320
    %v399 = vpop.f32.mrb[0].mxu0
    %v400 = vadd.f32 0.0, %v399
    %v401 = vpop.f32.mrb[0].mxu0
    %402 = vmatprep.mubr.f32.mxu0 0.0
    %403 = vmatmul.mubr.f32.gmra.mrb[0].mxu0 %v323
    %v404 = vpop.f32.mrb[0].mxu0
    %v405 = vadd.f32 0.0, %v404
    %v406 = vpop.f32.mrb[0].mxu0
    %407 = vmatprep.mubr.f32.mxu0 0.0
    %408 = vmatmul.mubr.f32.gmra.mrb[0].mxu0 %v326
    %v409 = vpop.f32.mrb[0].mxu0
    %v410 = vadd.f32 0.0, %v409
    %v411 = vpop.f32.mrb[0].mxu0
    %412 = vdwg.mxu0
    %v413 = vld [vmem:[%s6] sm:$0xff]
    %v414 = vld [vmem:[%s6 + $0x8] sm:$0xff]
    %v415 = vld [vmem:[%s6 + $0x10] sm:$0xff]
    %v416 = vld [vmem:[%s6 + $0x18] sm:$0xff]
    %419 = vrot.lane.b32.xlu0 %v395, 96
    %v420 = vpop.permute.xlu0 %419
    %421 = vrot.lane.b32.xlu0 %v400, 96
    %v422 = vpop.permute.xlu0 %421
    %v423 = vsel %vm132, %v395, 0
    %v425 = vsel %vm132, %v400, 0
    %v427 = vsel %vm132, %v420, 0
    %v429 = vsel %vm132, %v422, 0
    %431 = vmatprep.subr.mxu0 0.0
    %432 = vmatpush1.xpose.msra.mxu0 %v427
    %433 = vmatprep.subr.mxu0 0.0
    %434 = vmatpush1.xpose.msra.mxu0 %v429
    %435 = vmatprep.subr.mxu0 0.0
    %436 = vmatpush1.xpose.msra.mxu0 0.0
    %437 = vmatprep.subr.mxu0 0.0
    %438 = vmatpush1.xpose.msra.mxu0 0.0
    %439 = vmatprep.subr.mxu0 0.0
    %440 = vmatpush1.xpose.msra.mxu0 0.0
    %441 = vmatprep.subr.mxu0 0.0
    %442 = vmatpush1.xpose.msra.mxu0 0.0
    %443 = vmatprep.subr.mxu0 0.0
    %444 = vmatpush1.xpose.msra.mxu0 0.0
    %445 = vmatprep.subr.mxu0 0.0
    %446 = vmatpush1.xpose.msra.mxu0 0.0
    %447 = vmatprep.subr.mxu0 0.0
    %448 = vmatpush1.xpose.msra.mxu0 0.0
    %449 = vmatprep.subr.mxu0 0.0
    %450 = vmatpush1.xpose.msra.mxu0 0.0
    %451 = vmatprep.subr.mxu0 0.0
    %452 = vmatpush1.xpose.msra.mxu0 0.0
    %453 = vmatprep.subr.mxu0 0.0
    %454 = vmatpush1.xpose.msra.mxu0 0.0
    %455 = vmatprep.subr.mxu0 0.0
    %456 = vmatpush1.xpose.msra.mxu0 0.0
    %457 = vmatprep.subr.mxu0 0.0
    %458 = vmatpush1.xpose.msra.mxu0 0.0
    %459 = vmatprep.subr.mxu0 0.0
    %460 = vmatpush1.xpose.msra.mxu0 0.0
    %461 = vmatprep.subr.mxu0 0.0
    %462 = vmatpush1.xpose.msra.mxu0 0.0
    %463 = vmatprep.subr.mxu0 0.0
    %464 = vmatpush1.xpose.msra.mxu0 0.0
    %465 = vmatprep.subr.mxu0 0.0
    %466 = vmatpush1.xpose.msra.mxu0 0.0
    %467 = vmatprep.subr.mxu0 0.0
    %468 = vmatpush1.xpose.msra.mxu0 0.0
    %469 = vmatprep.subr.mxu0 0.0
    %470 = vmatpush1.xpose.msra.mxu0 0.0
    %471 = vmatprep.subr.mxu0 0.0
    %472 = vmatpush1.xpose.msra.mxu0 0.0
    %473 = vmatprep.subr.mxu0 0.0
    %474 = vmatpush1.xpose.msra.mxu0 0.0
    %475 = vmatprep.subr.mxu0 0.0
    %476 = vmatpush1.xpose.msra.mxu0 0.0
    %477 = vmatprep.subr.mxu0 0.0
    %478 = vmatpush1.xpose.msra.mxu0 0.0
    %479 = vmatprep.subr.mxu0 0.0
    %480 = vmatpush1.xpose.msra.mxu0 0.0
    %481 = vmatprep.subr.mxu0 0.0
    %482 = vmatpush1.xpose.msra.mxu0 0.0
    %483 = vmatprep.subr.mxu0 0.0
    %484 = vmatpush1.xpose.msra.mxu0 0.0
    %485 = vmatprep.subr.mxu0 0.0
    %486 = vmatpush1.xpose.msra.mxu0 0.0
    %487 = vmatprep.subr.mxu0 0.0
    %488 = vmatpush1.xpose.msra.mxu0 0.0
    %489 = vmatprep.subr.mxu0 0.0
    %490 = vmatpush1.xpose.msra.mxu0 0.0
    %491 = vmatprep.subr.mxu0 0.0
    %492 = vmatpush1.xpose.msra.mxu0 0.0
    %493 = vmatprep.subr.mxu0 0.0
    %494 = vmatpush1.xpose.msra.mxu0 0.0
    %495 = vmatprep.mubr.f32.mxu0 0.0
    %496 = vmatmul.mubr.f32.gmra.mrb[0].mxu0 %v423
    %v497 = vpop.f32.mrb[0].mxu0
    %v498 = vadd.f32 0.0, %v497
    %v499 = vpop.f32.mrb[0].mxu0
    %500 = vmatprep.mubr.f32.mxu0 0.0
    %501 = vmatmul.mubr.f32.gmra.mrb[0].mxu0 %v425
    %v502 = vpop.f32.mrb[0].mxu0
    %v503 = vadd.f32 0.0, %v502
    %v504 = vpop.f32.mrb[0].mxu0
    %505 = vdwg.mxu0
    %508 = vrot.lane.b32.xlu0 %v405, 96
    %v509 = vpop.permute.xlu0 %508
    %510 = vrot.lane.b32.xlu0 %v410, 96
    %v511 = vpop.permute.xlu0 %510
    %v512 = vsel %vm132, %v405, 0
    %v514 = vsel %vm132, %v410, 0
    %v516 = vsel %vm132, %v509, 0
    %v518 = vsel %vm132, %v511, 0
    %520 = vmatprep.subr.mxu0 0.0
    %521 = vmatpush1.xpose.msra.mxu0 %v516
    %522 = vmatprep.subr.mxu0 0.0
    %523 = vmatpush1.xpose.msra.mxu0 %v518
    %524 = vmatprep.subr.mxu0 0.0
    %525 = vmatpush1.xpose.msra.mxu0 0.0
    %526 = vmatprep.subr.mxu0 0.0
    %527 = vmatpush1.xpose.msra.mxu0 0.0
    %528 = vmatprep.subr.mxu0 0.0
    %529 = vmatpush1.xpose.msra.mxu0 0.0
    %530 = vmatprep.subr.mxu0 0.0
    %531 = vmatpush1.xpose.msra.mxu0 0.0
    %532 = vmatprep.subr.mxu0 0.0
    %533 = vmatpush1.xpose.msra.mxu0 0.0
    %534 = vmatprep.subr.mxu0 0.0
    %535 = vmatpush1.xpose.msra.mxu0 0.0
    %536 = vmatprep.subr.mxu0 0.0
    %537 = vmatpush1.xpose.msra.mxu0 0.0
    %538 = vmatprep.subr.mxu0 0.0
    %539 = vmatpush1.xpose.msra.mxu0 0.0
    %540 = vmatprep.subr.mxu0 0.0
    %541 = vmatpush1.xpose.msra.mxu0 0.0
    %542 = vmatprep.subr.mxu0 0.0
    %543 = vmatpush1.xpose.msra.mxu0 0.0
    %544 = vmatprep.subr.mxu0 0.0
    %545 = vmatpush1.xpose.msra.mxu0 0.0
    %546 = vmatprep.subr.mxu0 0.0
    %547 = vmatpush1.xpose.msra.mxu0 0.0
    %548 = vmatprep.subr.mxu0 0.0
    %549 = vmatpush1.xpose.msra.mxu0 0.0
    %550 = vmatprep.subr.mxu0 0.0
    %551 = vmatpush1.xpose.msra.mxu0 0.0
    %552 = vmatprep.subr.mxu0 0.0
    %553 = vmatpush1.xpose.msra.mxu0 0.0
    %554 = vmatprep.subr.mxu0 0.0
    %555 = vmatpush1.xpose.msra.mxu0 0.0
    %556 = vmatprep.subr.mxu0 0.0
    %557 = vmatpush1.xpose.msra.mxu0 0.0
    %558 = vmatprep.subr.mxu0 0.0
    %559 = vmatpush1.xpose.msra.mxu0 0.0
    %560 = vmatprep.subr.mxu0 0.0
    %561 = vmatpush1.xpose.msra.mxu0 0.0
    %562 = vmatprep.subr.mxu0 0.0
    %563 = vmatpush1.xpose.msra.mxu0 0.0
    %564 = vmatprep.subr.mxu0 0.0
    %565 = vmatpush1.xpose.msra.mxu0 0.0
    %566 = vmatprep.subr.mxu0 0.0
    %567 = vmatpush1.xpose.msra.mxu0 0.0
    %568 = vmatprep.subr.mxu0 0.0
    %569 = vmatpush1.xpose.msra.mxu0 0.0
    %570 = vmatprep.subr.mxu0 0.0
    %571 = vmatpush1.xpose.msra.mxu0 0.0
    %572 = vmatprep.subr.mxu0 0.0
    %573 = vmatpush1.xpose.msra.mxu0 0.0
    %574 = vmatprep.subr.mxu0 0.0
    %575 = vmatpush1.xpose.msra.mxu0 0.0
    %576 = vmatprep.subr.mxu0 0.0
    %577 = vmatpush1.xpose.msra.mxu0 0.0
    %578 = vmatprep.subr.mxu0 0.0
    %579 = vmatpush1.xpose.msra.mxu0 0.0
    %580 = vmatprep.subr.mxu0 0.0
    %581 = vmatpush1.xpose.msra.mxu0 0.0
    %582 = vmatprep.subr.mxu0 0.0
    %583 = vmatpush1.xpose.msra.mxu0 0.0
    %584 = vmatprep.mubr.f32.mxu0 0.0
    %585 = vmatmul.mubr.f32.gmra.mrb[0].mxu0 %v512
    %v586 = vpop.f32.mrb[0].mxu0
    %v587 = vadd.f32 0.0, %v586
    %v588 = vpop.f32.mrb[0].mxu0
    %589 = vmatprep.mubr.f32.mxu0 0.0
    %590 = vmatmul.mubr.f32.gmra.mrb[0].mxu0 %v514
    %v591 = vpop.f32.mrb[0].mxu0
    %v592 = vadd.f32 0.0, %v591
    %v593 = vpop.f32.mrb[0].mxu0
    %594 = vdwg.mxu0
    %v595 = vmul.f32 %v498, 0.35355338
    %v596 = vmul.f32 %v503, 0.35355338
    %v597 = vmul.f32 %v587, 0.35355338
    %v598 = vmul.f32 %v592, 0.35355338
    %vm599 = vcmask 130048
    %v600 = vsel %vm599, %v595, -inf
    %601 = vmax.xlane.f32.xlu0 %v600
    %v602 = vpop.xlane.xlu0 %601
    %v603 = vsel %vm599, %v596, -inf
    %604 = vmax.xlane.f32.xlu0 %v603
    %v605 = vpop.xlane.xlu0 %604
    %v606 = vsel %vm599, %v597, -inf
    %607 = vmax.xlane.f32.xlu0 %v606
    %v608 = vpop.xlane.xlu0 %607
    %v609 = vsel %vm599, %v598, -inf
    %610 = vmax.xlane.f32.xlu0 %v609
    %v611 = vpop.xlane.xlu0 %610
    %v612 = vsub.f32 %v595, %v602
    %v613 = vsub.f32 %v596, %v605
    %v614 = vsub.f32 %v597, %v608
    %v615 = vsub.f32 %v598, %v611
    %v616 = vmul.f32 %v612, 1.442695
    %v617 = vpow.pop %v616
    %v618 = vmul.f32 %v613, 1.442695
    %v619 = vpow.pop %v618
    %v620 = vmul.f32 %v614, 1.442695
    %v621 = vpow.pop %v620
    %v622 = vmul.f32 %v615, 1.442695
    %v623 = vpow.pop %v622
    %v624 = vsel %vm599, %v617, 0.0
    %625 = vadd.xlane.f32.xlu0 %v624
    %v626 = vpop.xlane.xlu0 %625
    %v627 = vsel %vm599, %v619, 0.0
    %628 = vadd.xlane.f32.xlu0 %v627
    %v629 = vpop.xlane.xlu0 %628
    %v630 = vsel %vm599, %v621, 0.0
    %631 = vadd.xlane.f32.xlu0 %v630
    %v632 = vpop.xlane.xlu0 %631
    %v633 = vsel %vm599, %v623, 0.0
    %634 = vadd.xlane.f32.xlu0 %v633
    %v635 = vpop.xlane.xlu0 %634
    %v636 = vrcp.pop %v626
    %v637 = vrcp.pop %v629
    %v638 = vrcp.pop %v632
    %v639 = vrcp.pop %v635
    %v640 = vmul.f32 %v617, %v636
    %v641 = vmul.f32 %v619, %v637
    %v642 = vmul.f32 %v621, %v638
    %v643 = vmul.f32 %v623, %v639
    %644 = vrot.lane.b32.xlu0 %v395, 64
    %v645 = vpop.permute.xlu0 %644
    %646 = vrot.lane.b32.xlu0 %v400, 64
    %v647 = vpop.permute.xlu0 %646
    %v651 = vsel %vm599, %v640, 0
    %v654 = vsel %vm599, %v641, 0
    %656 = vmatprep.subr.mxu0 0.0
    %657 = vmatpush1.msra.mxu0 %v645
    %658 = vmatprep.subr.mxu0 0.0
    %659 = vmatpush1.msra.mxu0 %v647
    %660 = vmatprep.subr.mxu0 0.0
    %661 = vmatpush1.msra.mxu0 0.0
    %662 = vmatprep.subr.mxu0 0.0
    %663 = vmatpush1.msra.mxu0 0.0
    %664 = vmatprep.subr.mxu0 0.0
    %665 = vmatpush1.msra.mxu0 0.0
    %666 = vmatprep.subr.mxu0 0.0
    %667 = vmatpush1.msra.mxu0 0.0
    %668 = vmatprep.subr.mxu0 0.0
    %669 = vmatpush1.msra.mxu0 0.0
    %670 = vmatprep.subr.mxu0 0.0
    %671 = vmatpush1.msra.mxu0 0.0
    %672 = vmatprep.subr.mxu0 0.0
    %673 = vmatpush1.msra.mxu0 0.0
    %674 = vmatprep.subr.mxu0 0.0
    %675 = vmatpush1.msra.mxu0 0.0
    %676 = vmatprep.subr.mxu0 0.0
    %677 = vmatpush1.msra.mxu0 0.0
    %678 = vmatprep.subr.mxu0 0.0
    %679 = vmatpush1.msra.mxu0 0.0
    %680 = vmatprep.subr.mxu0 0.0
    %681 = vmatpush1.msra.mxu0 0.0
    %682 = vmatprep.subr.mxu0 0.0
    %683 = vmatpush1.msra.mxu0 0.0
    %684 = vmatprep.subr.mxu0 0.0
    %685 = vmatpush1.msra.mxu0 0.0
    %686 = vmatprep.subr.mxu0 0.0
    %687 = vmatpush1.msra.mxu0 0.0
    %688 = vmatprep.subr.mxu0 0.0
    %689 = vmatpush1.msra.mxu0 0.0
    %690 = vmatprep.subr.mxu0 0.0
    %691 = vmatpush1.msra.mxu0 0.0
    %692 = vmatprep.subr.mxu0 0.0
    %693 = vmatpush1.msra.mxu0 0.0
    %694 = vmatprep.subr.mxu0 0.0
    %695 = vmatpush1.msra.mxu0 0.0
    %696 = vmatprep.subr.mxu0 0.0
    %697 = vmatpush1.msra.mxu0 0.0
    %698 = vmatprep.subr.mxu0 0.0
    %699 = vmatpush1.msra.mxu0 0.0
    %700 = vmatprep.subr.mxu0 0.0
    %701 = vmatpush1.msra.mxu0 0.0
    %702 = vmatprep.subr.mxu0 0.0
    %703 = vmatpush1.msra.mxu0 0.0
    %704 = vmatprep.subr.mxu0 0.0
    %705 = vmatpush1.msra.mxu0 0.0
    %706 = vmatprep.subr.mxu0 0.0
    %707 = vmatpush1.msra.mxu0 0.0
    %708 = vmatprep.subr.mxu0 0.0
    %709 = vmatpush1.msra.mxu0 0.0
    %710 = vmatprep.subr.mxu0 0.0
    %711 = vmatpush1.msra.mxu0 0.0
    %712 = vmatprep.subr.mxu0 0.0
    %713 = vmatpush1.msra.mxu0 0.0
    %714 = vmatprep.subr.mxu0 0.0
    %715 = vmatpush1.msra.mxu0 0.0
    %716 = vmatprep.subr.mxu0 0.0
    %717 = vmatpush1.msra.mxu0 0.0
    %718 = vmatprep.subr.mxu0 0.0
    %719 = vmatpush1.msra.mxu0 0.0
    %720 = vmatprep.mubr.f32.mxu0 0.0
    %721 = vmatmul.mubr.f32.gmra.mrb[0].mxu0 %v651
    %v722 = vpop.f32.mrb[0].mxu0
    %v723 = vadd.f32 0.0, %v722
    %v724 = vpop.f32.mrb[0].mxu0
    %725 = vmatprep.mubr.f32.mxu0 0.0
    %726 = vmatmul.mubr.f32.gmra.mrb[0].mxu0 %v654
    %v727 = vpop.f32.mrb[0].mxu0
    %v728 = vadd.f32 0.0, %v727
    %v729 = vpop.f32.mrb[0].mxu0
    %730 = vdwg.mxu0
    %731 = vrot.lane.b32.xlu0 %v405, 64
    %v732 = vpop.permute.xlu0 %731
    %733 = vrot.lane.b32.xlu0 %v410, 64
    %v734 = vpop.permute.xlu0 %733
    %v738 = vsel %vm599, %v642, 0
    %v741 = vsel %vm599, %v643, 0
    %743 = vmatprep.subr.mxu0 0.0
    %744 = vmatpush1.msra.mxu0 %v732
    %745 = vmatprep.subr.mxu0 0.0
    %746 = vmatpush1.msra.mxu0 %v734
    %747 = vmatprep.subr.mxu0 0.0
    %748 = vmatpush1.msra.mxu0 0.0
    %749 = vmatprep.subr.mxu0 0.0
    %750 = vmatpush1.msra.mxu0 0.0
    %751 = vmatprep.subr.mxu0 0.0
    %752 = vmatpush1.msra.mxu0 0.0
    %753 = vmatprep.subr.mxu0 0.0
    %754 = vmatpush1.msra.mxu0 0.0
    %755 = vmatprep.subr.mxu0 0.0
    %756 = vmatpush1.msra.mxu0 0.0
    %757 = vmatprep.subr.mxu0 0.0
    %758 = vmatpush1.msra.mxu0 0.0
    %759 = vmatprep.subr.mxu0 0.0
    %760 = vmatpush1.msra.mxu0 0.0
    %761 = vmatprep.subr.mxu0 0.0
    %762 = vmatpush1.msra.mxu0 0.0
    %763 = vmatprep.subr.mxu0 0.0
    %764 = vmatpush1.msra.mxu0 0.0
    %765 = vmatprep.subr.mxu0 0.0
    %766 = vmatpush1.msra.mxu0 0.0
    %767 = vmatprep.subr.mxu0 0.0
    %768 = vmatpush1.msra.mxu0 0.0
    %769 = vmatprep.subr.mxu0 0.0
    %770 = vmatpush1.msra.mxu0 0.0
    %771 = vmatprep.subr.mxu0 0.0
    %772 = vmatpush1.msra.mxu0 0.0
    %773 = vmatprep.subr.mxu0 0.0
    %774 = vmatpush1.msra.mxu0 0.0
    %775 = vmatprep.subr.mxu0 0.0
    %776 = vmatpush1.msra.mxu0 0.0
    %777 = vmatprep.subr.mxu0 0.0
    %778 = vmatpush1.msra.mxu0 0.0
    %779 = vmatprep.subr.mxu0 0.0
    %780 = vmatpush1.msra.mxu0 0.0
    %781 = vmatprep.subr.mxu0 0.0
    %782 = vmatpush1.msra.mxu0 0.0
    %783 = vmatprep.subr.mxu0 0.0
    %784 = vmatpush1.msra.mxu0 0.0
    %785 = vmatprep.subr.mxu0 0.0
    %786 = vmatpush1.msra.mxu0 0.0
    %787 = vmatprep.subr.mxu0 0.0
    %788 = vmatpush1.msra.mxu0 0.0
    %789 = vmatprep.subr.mxu0 0.0
    %790 = vmatpush1.msra.mxu0 0.0
    %791 = vmatprep.subr.mxu0 0.0
    %792 = vmatpush1.msra.mxu0 0.0
    %793 = vmatprep.subr.mxu0 0.0
    %794 = vmatpush1.msra.mxu0 0.0
    %795 = vmatprep.subr.mxu0 0.0
    %796 = vmatpush1.msra.mxu0 0.0
    %797 = vmatprep.subr.mxu0 0.0
    %798 = vmatpush1.msra.mxu0 0.0
    %799 = vmatprep.subr.mxu0 0.0
    %800 = vmatpush1.msra.mxu0 0.0
    %801 = vmatprep.subr.mxu0 0.0
    %802 = vmatpush1.msra.mxu0 0.0
    %803 = vmatprep.subr.mxu0 0.0
    %804 = vmatpush1.msra.mxu0 0.0
    %805 = vmatprep.subr.mxu0 0.0
    %806 = vmatpush1.msra.mxu0 0.0
    %807 = vmatprep.mubr.f32.mxu0 0.0
    %808 = vmatmul.mubr.f32.gmra.mrb[0].mxu0 %v738
    %v809 = vpop.f32.mrb[0].mxu0
    %v810 = vadd.f32 0.0, %v809
    %v811 = vpop.f32.mrb[0].mxu0
    %812 = vmatprep.mubr.f32.mxu0 0.0
    %813 = vmatmul.mubr.f32.gmra.mrb[0].mxu0 %v741
    %v814 = vpop.f32.mrb[0].mxu0
    %v815 = vadd.f32 0.0, %v814
    %v816 = vpop.f32.mrb[0].mxu0
    %817 = vdwg.mxu0
    %v819 = vsel %vm132, %v723, 0
    %v822 = vsel %vm132, %v728, 0
    %v825 = vsel %vm132, %v810, 0
    %v828 = vsel %vm132, %v815, 0
    %830 = vmatprep.subr.mxu0 0.0
    %831 = vmatpush1.msra.mxu0 %v413
    %832 = vmatprep.subr.mxu0 0.0
    %833 = vmatpush1.msra.mxu0 0.0
    %834 = vmatprep.subr.mxu0 0.0
    %835 = vmatpush1.msra.mxu0 0.0
    %836 = vmatprep.subr.mxu0 0.0
    %837 = vmatpush1.msra.mxu0 0.0
    %838 = vmatprep.subr.mxu0 0.0
    %839 = vmatpush1.msra.mxu0 0.0
    %840 = vmatprep.subr.mxu0 0.0
    %841 = vmatpush1.msra.mxu0 0.0
    %842 = vmatprep.subr.mxu0 0.0
    %843 = vmatpush1.msra.mxu0 0.0
    %844 = vmatprep.subr.mxu0 0.0
    %845 = vmatpush1.msra.mxu0 0.0
    %846 = vmatprep.subr.mxu0 0.0
    %847 = vmatpush1.msra.mxu0 0.0
    %848 = vmatprep.subr.mxu0 0.0
    %849 = vmatpush1.msra.mxu0 0.0
    %850 = vmatprep.subr.mxu0 0.0
    %851 = vmatpush1.msra.mxu0 0.0
    %852 = vmatprep.subr.mxu0 0.0
    %853 = vmatpush1.msra.mxu0 0.0
    %854 = vmatprep.subr.mxu0 0.0
    %855 = vmatpush1.msra.mxu0 0.0
    %856 = vmatprep.subr.mxu0 0.0
    %857 = vmatpush1.msra.mxu0 0.0
    %858 = vmatprep.subr.mxu0 0.0
    %859 = vmatpush1.msra.mxu0 0.0
    %860 = vmatprep.subr.mxu0 0.0
    %861 = vmatpush1.msra.mxu0 0.0
    %862 = vmatprep.subr.mxu0 0.0
    %863 = vmatpush1.msra.mxu0 0.0
    %864 = vmatprep.subr.mxu0 0.0
    %865 = vmatpush1.msra.mxu0 0.0
    %866 = vmatprep.subr.mxu0 0.0
    %867 = vmatpush1.msra.mxu0 0.0
    %868 = vmatprep.subr.mxu0 0.0
    %869 = vmatpush1.msra.mxu0 0.0
    %870 = vmatprep.subr.mxu0 0.0
    %871 = vmatpush1.msra.mxu0 0.0
    %872 = vmatprep.subr.mxu0 0.0
    %873 = vmatpush1.msra.mxu0 0.0
    %874 = vmatprep.subr.mxu0 0.0
    %875 = vmatpush1.msra.mxu0 0.0
    %876 = vmatprep.subr.mxu0 0.0
    %877 = vmatpush1.msra.mxu0 0.0
    %878 = vmatprep.subr.mxu0 0.0
    %879 = vmatpush1.msra.mxu0 0.0
    %880 = vmatprep.subr.mxu0 0.0
    %881 = vmatpush1.msra.mxu0 0.0
    %882 = vmatprep.subr.mxu0 0.0
    %883 = vmatpush1.msra.mxu0 0.0
    %884 = vmatprep.subr.mxu0 0.0
    %885 = vmatpush1.msra.mxu0 0.0
    %886 = vmatprep.subr.mxu0 0.0
    %887 = vmatpush1.msra.mxu0 0.0
    %888 = vmatprep.subr.mxu0 0.0
    %889 = vmatpush1.msra.mxu0 0.0
    %890 = vmatprep.subr.mxu0 0.0
    %891 = vmatpush1.msra.mxu0 0.0
    %892 = vmatprep.subr.mxu0 0.0
    %893 = vmatpush1.msra.mxu0 0.0
    %894 = vmatprep.mubr.f32.mxu0 0.0
    %895 = vmatmul.mubr.f32.gmra.mrb[0].mxu0 %v819
    %v896 = vpop.f32.mrb[0].mxu0
    %v897 = vadd.f32 0.0, %v896
    %v898 = vpop.f32.mrb[0].mxu0
    %899 = vmatprep.mubr.f32.mxu0 0.0
    %900 = vmatmul.mubr.f32.gmra.mrb[0].mxu0 %v822
    %v901 = vpop.f32.mrb[0].mxu0
    %v902 = vadd.f32 0.0, %v901
    %v903 = vpop.f32.mrb[0].mxu0
    %904 = vmatprep.mubr.f32.mxu0 0.0
    %905 = vmatmul.mubr.f32.gmra.mrb[0].mxu0 %v825
    %v906 = vpop.f32.mrb[0].mxu0
    %v907 = vadd.f32 0.0, %v906
    %v908 = vpop.f32.mrb[0].mxu0
    %909 = vmatprep.mubr.f32.mxu0 0.0
    %910 = vmatmul.mubr.f32.gmra.mrb[0].mxu0 %v828
    %v911 = vpop.f32.mrb[0].mxu0
    %v912 = vadd.f32 0.0, %v911
    %v913 = vpop.f32.mrb[0].mxu0
    %914 = vdwg.mxu0
    %915 = vrot.lane.b32.xlu0 %v395, 120
    %v916 = vpop.permute.xlu0 %915
    %917 = vrot.lane.b32.xlu0 %v400, 120
    %v918 = vpop.permute.xlu0 %917
    %919 = vrot.lane.b32.xlu0 %v395, 88
    %v920 = vpop.permute.xlu0 %919
    %921 = vrot.lane.b32.xlu0 %v400, 88
    %v922 = vpop.permute.xlu0 %921
    %v923 = vsel %vm132, %v916, 0
    %v925 = vsel %vm132, %v918, 0
    %v927 = vsel %vm132, %v920, 0
    %v929 = vsel %vm132, %v922, 0
    %931 = vmatprep.subr.mxu0 0.0
    %932 = vmatpush1.xpose.msra.mxu0 %v927
    %933 = vmatprep.subr.mxu0 0.0
    %934 = vmatpush1.xpose.msra.mxu0 %v929
    %935 = vmatprep.subr.mxu0 0.0
    %936 = vmatpush1.xpose.msra.mxu0 0.0
    %937 = vmatprep.subr.mxu0 0.0
    %938 = vmatpush1.xpose.msra.mxu0 0.0
    %939 = vmatprep.subr.mxu0 0.0
    %940 = vmatpush1.xpose.msra.mxu0 0.0
    %941 = vmatprep.subr.mxu0 0.0
    %942 = vmatpush1.xpose.msra.mxu0 0.0
    %943 = vmatprep.subr.mxu0 0.0
    %944 = vmatpush1.xpose.msra.mxu0 0.0
    %945 = vmatprep.subr.mxu0 0.0
    %946 = vmatpush1.xpose.msra.mxu0 0.0
    %947 = vmatprep.subr.mxu0 0.0
    %948 = vmatpush1.xpose.msra.mxu0 0.0
    %949 = vmatprep.subr.mxu0 0.0
    %950 = vmatpush1.xpose.msra.mxu0 0.0
    %951 = vmatprep.subr.mxu0 0.0
    %952 = vmatpush1.xpose.msra.mxu0 0.0
    %953 = vmatprep.subr.mxu0 0.0
    %954 = vmatpush1.xpose.msra.mxu0 0.0
    %955 = vmatprep.subr.mxu0 0.0
    %956 = vmatpush1.xpose.msra.mxu0 0.0
    %957 = vmatprep.subr.mxu0 0.0
    %958 = vmatpush1.xpose.msra.mxu0 0.0
    %959 = vmatprep.subr.mxu0 0.0
    %960 = vmatpush1.xpose.msra.mxu0 0.0
    %961 = vmatprep.subr.mxu0 0.0
    %962 = vmatpush1.xpose.msra.mxu0 0.0
    %963 = vmatprep.subr.mxu0 0.0
    %964 = vmatpush1.xpose.msra.mxu0 0.0
    %965 = vmatprep.subr.mxu0 0.0
    %966 = vmatpush1.xpose.msra.mxu0 0.0
    %967 = vmatprep.subr.mxu0 0.0
    %968 = vmatpush1.xpose.msra.mxu0 0.0
    %969 = vmatprep.subr.mxu0 0.0
    %970 = vmatpush1.xpose.msra.mxu0 0.0
    %971 = vmatprep.subr.mxu0 0.0
    %972 = vmatpush1.xpose.msra.mxu0 0.0
    %973 = vmatprep.subr.mxu0 0.0
    %974 = vmatpush1.xpose.msra.mxu0 0.0
    %975 = vmatprep.subr.mxu0 0.0
    %976 = vmatpush1.xpose.msra.mxu0 0.0
    %977 = vmatprep.subr.mxu0 0.0
    %978 = vmatpush1.xpose.msra.mxu0 0.0
    %979 = vmatprep.subr.mxu0 0.0
    %980 = vmatpush1.xpose.msra.mxu0 0.0
    %981 = vmatprep.subr.mxu0 0.0
    %982 = vmatpush1.xpose.msra.mxu0 0.0
    %983 = vmatprep.subr.mxu0 0.0
    %984 = vmatpush1.xpose.msra.mxu0 0.0
    %985 = vmatprep.subr.mxu0 0.0
    %986 = vmatpush1.xpose.msra.mxu0 0.0
    %987 = vmatprep.subr.mxu0 0.0
    %988 = vmatpush1.xpose.msra.mxu0 0.0
    %989 = vmatprep.subr.mxu0 0.0
    %990 = vmatpush1.xpose.msra.mxu0 0.0
    %991 = vmatprep.subr.mxu0 0.0
    %992 = vmatpush1.xpose.msra.mxu0 0.0
    %993 = vmatprep.subr.mxu0 0.0
    %994 = vmatpush1.xpose.msra.mxu0 0.0
    %995 = vmatprep.mubr.f32.mxu0 0.0
    %996 = vmatmul.mubr.f32.gmra.mrb[0].mxu0 %v923
    %v997 = vpop.f32.mrb[0].mxu0
    %v998 = vadd.f32 0.0, %v997
    %v999 = vpop.f32.mrb[0].mxu0
    %1000 = vmatprep.mubr.f32.mxu0 0.0
    %1001 = vmatmul.mubr.f32.gmra.mrb[0].mxu0 %v925
    %v1002 = vpop.f32.mrb[0].mxu0
    %v1003 = vadd.f32 0.0, %v1002
    %v1004 = vpop.f32.mrb[0].mxu0
    %1005 = vdwg.mxu0
    %1006 = vrot.lane.b32.xlu0 %v405, 120
    %v1007 = vpop.permute.xlu0 %1006
    %1008 = vrot.lane.b32.xlu0 %v410, 120
    %v1009 = vpop.permute.xlu0 %1008
    %1010 = vrot.lane.b32.xlu0 %v405, 88
    %v1011 = vpop.permute.xlu0 %1010
    %1012 = vrot.lane.b32.xlu0 %v410, 88
    %v1013 = vpop.permute.xlu0 %1012
    %v1014 = vsel %vm132, %v1007, 0
    %v1016 = vsel %vm132, %v1009, 0
    %v1018 = vsel %vm132, %v1011, 0
    %v1020 = vsel %vm132, %v1013, 0
    %1022 = vmatprep.subr.mxu0 0.0
    %1023 = vmatpush1.xpose.msra.mxu0 %v1018
    %1024 = vmatprep.subr.mxu0 0.0
    %1025 = vmatpush1.xpose.msra.mxu0 %v1020
    %1026 = vmatprep.subr.mxu0 0.0
    %1027 = vmatpush1.xpose.msra.mxu0 0.0
    %1028 = vmatprep.subr.mxu0 0.0
    %1029 = vmatpush1.xpose.msra.mxu0 0.0
    %1030 = vmatprep.subr.mxu0 0.0
    %1031 = vmatpush1.xpose.msra.mxu0 0.0
    %1032 = vmatprep.subr.mxu0 0.0
    %1033 = vmatpush1.xpose.msra.mxu0 0.0
    %1034 = vmatprep.subr.mxu0 0.0
    %1035 = vmatpush1.xpose.msra.mxu0 0.0
    %1036 = vmatprep.subr.mxu0 0.0
    %1037 = vmatpush1.xpose.msra.mxu0 0.0
    %1038 = vmatprep.subr.mxu0 0.0
    %1039 = vmatpush1.xpose.msra.mxu0 0.0
    %1040 = vmatprep.subr.mxu0 0.0
    %1041 = vmatpush1.xpose.msra.mxu0 0.0
    %1042 = vmatprep.subr.mxu0 0.0
    %1043 = vmatpush1.xpose.msra.mxu0 0.0
    %1044 = vmatprep.subr.mxu0 0.0
    %1045 = vmatpush1.xpose.msra.mxu0 0.0
    %1046 = vmatprep.subr.mxu0 0.0
    %1047 = vmatpush1.xpose.msra.mxu0 0.0
    %1048 = vmatprep.subr.mxu0 0.0
    %1049 = vmatpush1.xpose.msra.mxu0 0.0
    %1050 = vmatprep.subr.mxu0 0.0
    %1051 = vmatpush1.xpose.msra.mxu0 0.0
    %1052 = vmatprep.subr.mxu0 0.0
    %1053 = vmatpush1.xpose.msra.mxu0 0.0
    %1054 = vmatprep.subr.mxu0 0.0
    %1055 = vmatpush1.xpose.msra.mxu0 0.0
    %1056 = vmatprep.subr.mxu0 0.0
    %1057 = vmatpush1.xpose.msra.mxu0 0.0
    %1058 = vmatprep.subr.mxu0 0.0
    %1059 = vmatpush1.xpose.msra.mxu0 0.0
    %1060 = vmatprep.subr.mxu0 0.0
    %1061 = vmatpush1.xpose.msra.mxu0 0.0
    %1062 = vmatprep.subr.mxu0 0.0
    %1063 = vmatpush1.xpose.msra.mxu0 0.0
    %1064 = vmatprep.subr.mxu0 0.0
    %1065 = vmatpush1.xpose.msra.mxu0 0.0
    %1066 = vmatprep.subr.mxu0 0.0
    %1067 = vmatpush1.xpose.msra.mxu0 0.0
    %1068 = vmatprep.subr.mxu0 0.0
    %1069 = vmatpush1.xpose.msra.mxu0 0.0
    %1070 = vmatprep.subr.mxu0 0.0
    %1071 = vmatpush1.xpose.msra.mxu0 0.0
    %1072 = vmatprep.subr.mxu0 0.0
    %1073 = vmatpush1.xpose.msra.mxu0 0.0
    %1074 = vmatprep.subr.mxu0 0.0
    %1075 = vmatpush1.xpose.msra.mxu0 0.0
    %1076 = vmatprep.subr.mxu0 0.0
    %1077 = vmatpush1.xpose.msra.mxu0 0.0
    %1078 = vmatprep.subr.mxu0 0.0
    %1079 = vmatpush1.xpose.msra.mxu0 0.0
    %1080 = vmatprep.subr.mxu0 0.0
    %1081 = vmatpush1.xpose.msra.mxu0 0.0
    %1082 = vmatprep.subr.mxu0 0.0
    %1083 = vmatpush1.xpose.msra.mxu0 0.0
    %1084 = vmatprep.subr.mxu0 0.0
    %1085 = vmatpush1.xpose.msra.mxu0 0.0
    %1086 = vmatprep.mubr.f32.mxu0 0.0
    %1087 = vmatmul.mubr.f32.gmra.mrb[0].mxu0 %v1014
    %v1088 = vpop.f32.mrb[0].mxu0
    %v1089 = vadd.f32 0.0, %v1088
    %v1090 = vpop.f32.mrb[0].mxu0
    %1091 = vmatprep.mubr.f32.mxu0 0.0
    %1092 = vmatmul.mubr.f32.gmra.mrb[0].mxu0 %v1016
    %v1093 = vpop.f32.mrb[0].mxu0
    %v1094 = vadd.f32 0.0, %v1093
    %v1095 = vpop.f32.mrb[0].mxu0
    %1096 = vdwg.mxu0
    %v1097 = vmul.f32 %v998, 0.35355338
    %v1098 = vmul.f32 %v1003, 0.35355338
    %v1099 = vmul.f32 %v1089, 0.35355338
    %v1100 = vmul.f32 %v1094, 0.35355338
    %v1101 = vsel %vm599, %v1097, -inf
    %1102 = vmax.xlane.f32.xlu0 %v1101
    %v1103 = vpop.xlane.xlu0 %1102
    %v1104 = vsel %vm599, %v1098, -inf
    %1105 = vmax.xlane.f32.xlu0 %v1104
    %v1106 = vpop.xlane.xlu0 %1105
    %v1107 = vsel %vm599, %v1099, -inf
    %1108 = vmax.xlane.f32.xlu0 %v1107
    %v1109 = vpop.xlane.xlu0 %1108
    %v1110 = vsel %vm599, %v1100, -inf
    %1111 = vmax.xlane.f32.xlu0 %v1110
    %v1112 = vpop.xlane.xlu0 %1111
    %v1113 = vsub.f32 %v1097, %v1103
    %v1114 = vsub.f32 %v1098, %v1106
    %v1115 = vsub.f32 %v1099, %v1109
    %v1116 = vsub.f32 %v1100, %v1112
    %v1117 = vmul.f32 %v1113, 1.442695
    %v1118 = vpow.pop %v1117
    %v1119 = vmul.f32 %v1114, 1.442695
    %v1120 = vpow.pop %v1119
    %v1121 = vmul.f32 %v1115, 1.442695
    %v1122 = vpow.pop %v1121
    %v1123 = vmul.f32 %v1116, 1.442695
    %v1124 = vpow.pop %v1123
    %v1125 = vsel %vm599, %v1118, 0.0
    %1126 = vadd.xlane.f32.xlu0 %v1125
    %v1127 = vpop.xlane.xlu0 %1126
    %v1128 = vsel %vm599, %v1120, 0.0
    %1129 = vadd.xlane.f32.xlu0 %v1128
    %v1130 = vpop.xlane.xlu0 %1129
    %v1131 = vsel %vm599, %v1122, 0.0
    %1132 = vadd.xlane.f32.xlu0 %v1131
    %v1133 = vpop.xlane.xlu0 %1132
    %v1134 = vsel %vm599, %v1124, 0.0
    %1135 = vadd.xlane.f32.xlu0 %v1134
    %v1136 = vpop.xlane.xlu0 %1135
    %v1137 = vrcp.pop %v1127
    %v1138 = vrcp.pop %v1130
    %v1139 = vrcp.pop %v1133
    %v1140 = vrcp.pop %v1136
    %v1141 = vmul.f32 %v1118, %v1137
    %v1142 = vmul.f32 %v1120, %v1138
    %v1143 = vmul.f32 %v1122, %v1139
    %v1144 = vmul.f32 %v1124, %v1140
    %1145 = vrot.lane.b32.xlu0 %v395, 56
    %v1146 = vpop.permute.xlu0 %1145
    %1147 = vrot.lane.b32.xlu0 %v400, 56
    %v1148 = vpop.permute.xlu0 %1147
    %v1152 = vsel %vm599, %v1141, 0
    %v1155 = vsel %vm599, %v1142, 0
    %1157 = vmatprep.subr.mxu0 0.0
    %1158 = vmatpush1.msra.mxu0 %v1146
    %1159 = vmatprep.subr.mxu0 0.0
    %1160 = vmatpush1.msra.mxu0 %v1148
    %1161 = vmatprep.subr.mxu0 0.0
    %1162 = vmatpush1.msra.mxu0 0.0
    %1163 = vmatprep.subr.mxu0 0.0
    %1164 = vmatpush1.msra.mxu0 0.0
    %1165 = vmatprep.subr.mxu0 0.0
    %1166 = vmatpush1.msra.mxu0 0.0
    %1167 = vmatprep.subr.mxu0 0.0
    %1168 = vmatpush1.msra.mxu0 0.0
    %1169 = vmatprep.subr.mxu0 0.0
    %1170 = vmatpush1.msra.mxu0 0.0
    %1171 = vmatprep.subr.mxu0 0.0
    %1172 = vmatpush1.msra.mxu0 0.0
    %1173 = vmatprep.subr.mxu0 0.0
    %1174 = vmatpush1.msra.mxu0 0.0
    %1175 = vmatprep.subr.mxu0 0.0
    %1176 = vmatpush1.msra.mxu0 0.0
    %1177 = vmatprep.subr.mxu0 0.0
    %1178 = vmatpush1.msra.mxu0 0.0
    %1179 = vmatprep.subr.mxu0 0.0
    %1180 = vmatpush1.msra.mxu0 0.0
    %1181 = vmatprep.subr.mxu0 0.0
    %1182 = vmatpush1.msra.mxu0 0.0
    %1183 = vmatprep.subr.mxu0 0.0
    %1184 = vmatpush1.msra.mxu0 0.0
    %1185 = vmatprep.subr.mxu0 0.0
    %1186 = vmatpush1.msra.mxu0 0.0
    %1187 = vmatprep.subr.mxu0 0.0
    %1188 = vmatpush1.msra.mxu0 0.0
    %1189 = vmatprep.subr.mxu0 0.0
    %1190 = vmatpush1.msra.mxu0 0.0
    %1191 = vmatprep.subr.mxu0 0.0
    %1192 = vmatpush1.msra.mxu0 0.0
    %1193 = vmatprep.subr.mxu0 0.0
    %1194 = vmatpush1.msra.mxu0 0.0
    %1195 = vmatprep.subr.mxu0 0.0
    %1196 = vmatpush1.msra.mxu0 0.0
    %1197 = vmatprep.subr.mxu0 0.0
    %1198 = vmatpush1.msra.mxu0 0.0
    %1199 = vmatprep.subr.mxu0 0.0
    %1200 = vmatpush1.msra.mxu0 0.0
    %1201 = vmatprep.subr.mxu0 0.0
    %1202 = vmatpush1.msra.mxu0 0.0
    %1203 = vmatprep.subr.mxu0 0.0
    %1204 = vmatpush1.msra.mxu0 0.0
    %1205 = vmatprep.subr.mxu0 0.0
    %1206 = vmatpush1.msra.mxu0 0.0
    %1207 = vmatprep.subr.mxu0 0.0
    %1208 = vmatpush1.msra.mxu0 0.0
    %1209 = vmatprep.subr.mxu0 0.0
    %1210 = vmatpush1.msra.mxu0 0.0
    %1211 = vmatprep.subr.mxu0 0.0
    %1212 = vmatpush1.msra.mxu0 0.0
    %1213 = vmatprep.subr.mxu0 0.0
    %1214 = vmatpush1.msra.mxu0 0.0
    %1215 = vmatprep.subr.mxu0 0.0
    %1216 = vmatpush1.msra.mxu0 0.0
    %1217 = vmatprep.subr.mxu0 0.0
    %1218 = vmatpush1.msra.mxu0 0.0
    %1219 = vmatprep.subr.mxu0 0.0
    %1220 = vmatpush1.msra.mxu0 0.0
    %1221 = vmatprep.mubr.f32.mxu0 0.0
    %1222 = vmatmul.mubr.f32.gmra.mrb[0].mxu0 %v1152
    %v1223 = vpop.f32.mrb[0].mxu0
    %v1224 = vadd.f32 0.0, %v1223
    %v1225 = vpop.f32.mrb[0].mxu0
    %1226 = vmatprep.mubr.f32.mxu0 0.0
    %1227 = vmatmul.mubr.f32.gmra.mrb[0].mxu0 %v1155
    %v1228 = vpop.f32.mrb[0].mxu0
    %v1229 = vadd.f32 0.0, %v1228
    %v1230 = vpop.f32.mrb[0].mxu0
    %1231 = vdwg.mxu0
    %1232 = vrot.lane.b32.xlu0 %v405, 56
    %v1233 = vpop.permute.xlu0 %1232
    %1234 = vrot.lane.b32.xlu0 %v410, 56
    %v1235 = vpop.permute.xlu0 %1234
    %v1239 = vsel %vm599, %v1143, 0
    %v1242 = vsel %vm599, %v1144, 0
    %1244 = vmatprep.subr.mxu0 0.0
    %1245 = vmatpush1.msra.mxu0 %v1233
    %1246 = vmatprep.subr.mxu0 0.0
    %1247 = vmatpush1.msra.mxu0 %v1235
    %1248 = vmatprep.subr.mxu0 0.0
    %1249 = vmatpush1.msra.mxu0 0.0
    %1250 = vmatprep.subr.mxu0 0.0
    %1251 = vmatpush1.msra.mxu0 0.0
    %1252 = vmatprep.subr.mxu0 0.0
    %1253 = vmatpush1.msra.mxu0 0.0
    %1254 = vmatprep.subr.mxu0 0.0
    %1255 = vmatpush1.msra.mxu0 0.0
    %1256 = vmatprep.subr.mxu0 0.0
    %1257 = vmatpush1.msra.mxu0 0.0
    %1258 = vmatprep.subr.mxu0 0.0
    %1259 = vmatpush1.msra.mxu0 0.0
    %1260 = vmatprep.subr.mxu0 0.0
    %1261 = vmatpush1.msra.mxu0 0.0
    %1262 = vmatprep.subr.mxu0 0.0
    %1263 = vmatpush1.msra.mxu0 0.0
    %1264 = vmatprep.subr.mxu0 0.0
    %1265 = vmatpush1.msra.mxu0 0.0
    %1266 = vmatprep.subr.mxu0 0.0
    %1267 = vmatpush1.msra.mxu0 0.0
    %1268 = vmatprep.subr.mxu0 0.0
    %1269 = vmatpush1.msra.mxu0 0.0
    %1270 = vmatprep.subr.mxu0 0.0
    %1271 = vmatpush1.msra.mxu0 0.0
    %1272 = vmatprep.subr.mxu0 0.0
    %1273 = vmatpush1.msra.mxu0 0.0
    %1274 = vmatprep.subr.mxu0 0.0
    %1275 = vmatpush1.msra.mxu0 0.0
    %1276 = vmatprep.subr.mxu0 0.0
    %1277 = vmatpush1.msra.mxu0 0.0
    %1278 = vmatprep.subr.mxu0 0.0
    %1279 = vmatpush1.msra.mxu0 0.0
    %1280 = vmatprep.subr.mxu0 0.0
    %1281 = vmatpush1.msra.mxu0 0.0
    %1282 = vmatprep.subr.mxu0 0.0
    %1283 = vmatpush1.msra.mxu0 0.0
    %1284 = vmatprep.subr.mxu0 0.0
    %1285 = vmatpush1.msra.mxu0 0.0
    %1286 = vmatprep.subr.mxu0 0.0
    %1287 = vmatpush1.msra.mxu0 0.0
    %1288 = vmatprep.subr.mxu0 0.0
    %1289 = vmatpush1.msra.mxu0 0.0
    %1290 = vmatprep.subr.mxu0 0.0
    %1291 = vmatpush1.msra.mxu0 0.0
    %1292 = vmatprep.subr.mxu0 0.0
    %1293 = vmatpush1.msra.mxu0 0.0
    %1294 = vmatprep.subr.mxu0 0.0
    %1295 = vmatpush1.msra.mxu0 0.0
    %1296 = vmatprep.subr.mxu0 0.0
    %1297 = vmatpush1.msra.mxu0 0.0
    %1298 = vmatprep.subr.mxu0 0.0
    %1299 = vmatpush1.msra.mxu0 0.0
    %1300 = vmatprep.subr.mxu0 0.0
    %1301 = vmatpush1.msra.mxu0 0.0
    %1302 = vmatprep.subr.mxu0 0.0
    %1303 = vmatpush1.msra.mxu0 0.0
    %1304 = vmatprep.subr.mxu0 0.0
    %1305 = vmatpush1.msra.mxu0 0.0
    %1306 = vmatprep.subr.mxu0 0.0
    %1307 = vmatpush1.msra.mxu0 0.0
    %1308 = vmatprep.mubr.f32.mxu0 0.0
    %1309 = vmatmul.mubr.f32.gmra.mrb[0].mxu0 %v1239
    %v1310 = vpop.f32.mrb[0].mxu0
    %v1311 = vadd.f32 0.0, %v1310
    %v1312 = vpop.f32.mrb[0].mxu0
    %1313 = vmatprep.mubr.f32.mxu0 0.0
    %1314 = vmatmul.mubr.f32.gmra.mrb[0].mxu0 %v1242
    %v1315 = vpop.f32.mrb[0].mxu0
    %v1316 = vadd.f32 0.0, %v1315
    %v1317 = vpop.f32.mrb[0].mxu0
    %1318 = vdwg.mxu0
    %v1320 = vsel %vm132, %v1224, 0
    %v1323 = vsel %vm132, %v1229, 0
    %v1326 = vsel %vm132, %v1311, 0
    %v1329 = vsel %vm132, %v1316, 0
    %1331 = vmatprep.subr.mxu0 0.0
    %1332 = vmatpush1.msra.mxu0 %v414
    %1333 = vmatprep.subr.mxu0 0.0
    %1334 = vmatpush1.msra.mxu0 0.0
    %1335 = vmatprep.subr.mxu0 0.0
    %1336 = vmatpush1.msra.mxu0 0.0
    %1337 = vmatprep.subr.mxu0 0.0
    %1338 = vmatpush1.msra.mxu0 0.0
    %1339 = vmatprep.subr.mxu0 0.0
    %1340 = vmatpush1.msra.mxu0 0.0
    %1341 = vmatprep.subr.mxu0 0.0
    %1342 = vmatpush1.msra.mxu0 0.0
    %1343 = vmatprep.subr.mxu0 0.0
    %1344 = vmatpush1.msra.mxu0 0.0
    %1345 = vmatprep.subr.mxu0 0.0
    %1346 = vmatpush1.msra.mxu0 0.0
    %1347 = vmatprep.subr.mxu0 0.0
    %1348 = vmatpush1.msra.mxu0 0.0
    %1349 = vmatprep.subr.mxu0 0.0
    %1350 = vmatpush1.msra.mxu0 0.0
    %1351 = vmatprep.subr.mxu0 0.0
    %1352 = vmatpush1.msra.mxu0 0.0
    %1353 = vmatprep.subr.mxu0 0.0
    %1354 = vmatpush1.msra.mxu0 0.0
    %1355 = vmatprep.subr.mxu0 0.0
    %1356 = vmatpush1.msra.mxu0 0.0
    %1357 = vmatprep.subr.mxu0 0.0
    %1358 = vmatpush1.msra.mxu0 0.0
    %1359 = vmatprep.subr.mxu0 0.0
    %1360 = vmatpush1.msra.mxu0 0.0
    %1361 = vmatprep.subr.mxu0 0.0
    %1362 = vmatpush1.msra.mxu0 0.0
    %1363 = vmatprep.subr.mxu0 0.0
    %1364 = vmatpush1.msra.mxu0 0.0
    %1365 = vmatprep.subr.mxu0 0.0
    %1366 = vmatpush1.msra.mxu0 0.0
    %1367 = vmatprep.subr.mxu0 0.0
    %1368 = vmatpush1.msra.mxu0 0.0
    %1369 = vmatprep.subr.mxu0 0.0
    %1370 = vmatpush1.msra.mxu0 0.0
    %1371 = vmatprep.subr.mxu0 0.0
    %1372 = vmatpush1.msra.mxu0 0.0
    %1373 = vmatprep.subr.mxu0 0.0
    %1374 = vmatpush1.msra.mxu0 0.0
    %1375 = vmatprep.subr.mxu0 0.0
    %1376 = vmatpush1.msra.mxu0 0.0
    %1377 = vmatprep.subr.mxu0 0.0
    %1378 = vmatpush1.msra.mxu0 0.0
    %1379 = vmatprep.subr.mxu0 0.0
    %1380 = vmatpush1.msra.mxu0 0.0
    %1381 = vmatprep.subr.mxu0 0.0
    %1382 = vmatpush1.msra.mxu0 0.0
    %1383 = vmatprep.subr.mxu0 0.0
    %1384 = vmatpush1.msra.mxu0 0.0
    %1385 = vmatprep.subr.mxu0 0.0
    %1386 = vmatpush1.msra.mxu0 0.0
    %1387 = vmatprep.subr.mxu0 0.0
    %1388 = vmatpush1.msra.mxu0 0.0
    %1389 = vmatprep.subr.mxu0 0.0
    %1390 = vmatpush1.msra.mxu0 0.0
    %1391 = vmatprep.subr.mxu0 0.0
    %1392 = vmatpush1.msra.mxu0 0.0
    %1393 = vmatprep.subr.mxu0 0.0
    %1394 = vmatpush1.msra.mxu0 0.0
    %1395 = vmatprep.mubr.f32.mxu0 0.0
    %1396 = vmatmul.mubr.f32.gmra.mrb[0].mxu0 %v1320
    %v1397 = vpop.f32.mrb[0].mxu0
    %v1398 = vadd.f32 0.0, %v1397
    %v1399 = vpop.f32.mrb[0].mxu0
    %1400 = vmatprep.mubr.f32.mxu0 0.0
    %1401 = vmatmul.mubr.f32.gmra.mrb[0].mxu0 %v1323
    %v1402 = vpop.f32.mrb[0].mxu0
    %v1403 = vadd.f32 0.0, %v1402
    %v1404 = vpop.f32.mrb[0].mxu0
    %1405 = vmatprep.mubr.f32.mxu0 0.0
    %1406 = vmatmul.mubr.f32.gmra.mrb[0].mxu0 %v1326
    %v1407 = vpop.f32.mrb[0].mxu0
    %v1408 = vadd.f32 0.0, %v1407
    %v1409 = vpop.f32.mrb[0].mxu0
    %1410 = vmatprep.mubr.f32.mxu0 0.0
    %1411 = vmatmul.mubr.f32.gmra.mrb[0].mxu0 %v1329
    %v1412 = vpop.f32.mrb[0].mxu0
    %v1413 = vadd.f32 0.0, %v1412
    %v1414 = vpop.f32.mrb[0].mxu0
    %1415 = vdwg.mxu0
    %v1416 = vadd.f32 %v897, %v1398
    %v1417 = vadd.f32 %v902, %v1403
    %v1418 = vadd.f32 %v907, %v1408
    %v1419 = vadd.f32 %v912, %v1413
    %1420 = vrot.lane.b32.xlu0 %v395, 112
    %v1421 = vpop.permute.xlu0 %1420
    %1422 = vrot.lane.b32.xlu0 %v400, 112
    %v1423 = vpop.permute.xlu0 %1422
    %1424 = vrot.lane.b32.xlu0 %v395, 80
    %v1425 = vpop.permute.xlu0 %1424
    %1426 = vrot.lane.b32.xlu0 %v400, 80
    %v1427 = vpop.permute.xlu0 %1426
    %v1428 = vsel %vm132, %v1421, 0
    %v1430 = vsel %vm132, %v1423, 0
    %v1432 = vsel %vm132, %v1425, 0
    %v1434 = vsel %vm132, %v1427, 0
    %1436 = vmatprep.subr.mxu0 0.0
    %1437 = vmatpush1.xpose.msra.mxu0 %v1432
    %1438 = vmatprep.subr.mxu0 0.0
    %1439 = vmatpush1.xpose.msra.mxu0 %v1434
    %1440 = vmatprep.subr.mxu0 0.0
    %1441 = vmatpush1.xpose.msra.mxu0 0.0
    %1442 = vmatprep.subr.mxu0 0.0
    %1443 = vmatpush1.xpose.msra.mxu0 0.0
    %1444 = vmatprep.subr.mxu0 0.0
    %1445 = vmatpush1.xpose.msra.mxu0 0.0
    %1446 = vmatprep.subr.mxu0 0.0
    %1447 = vmatpush1.xpose.msra.mxu0 0.0
    %1448 = vmatprep.subr.mxu0 0.0
    %1449 = vmatpush1.xpose.msra.mxu0 0.0
    %1450 = vmatprep.subr.mxu0 0.0
    %1451 = vmatpush1.xpose.msra.mxu0 0.0
    %1452 = vmatprep.subr.mxu0 0.0
    %1453 = vmatpush1.xpose.msra.mxu0 0.0
    %1454 = vmatprep.subr.mxu0 0.0
    %1455 = vmatpush1.xpose.msra.mxu0 0.0
    %1456 = vmatprep.subr.mxu0 0.0
    %1457 = vmatpush1.xpose.msra.mxu0 0.0
    %1458 = vmatprep.subr.mxu0 0.0
    %1459 = vmatpush1.xpose.msra.mxu0 0.0
    %1460 = vmatprep.subr.mxu0 0.0
    %1461 = vmatpush1.xpose.msra.mxu0 0.0
    %1462 = vmatprep.subr.mxu0 0.0
    %1463 = vmatpush1.xpose.msra.mxu0 0.0
    %1464 = vmatprep.subr.mxu0 0.0
    %1465 = vmatpush1.xpose.msra.mxu0 0.0
    %1466 = vmatprep.subr.mxu0 0.0
    %1467 = vmatpush1.xpose.msra.mxu0 0.0
    %1468 = vmatprep.subr.mxu0 0.0
    %1469 = vmatpush1.xpose.msra.mxu0 0.0
    %1470 = vmatprep.subr.mxu0 0.0
    %1471 = vmatpush1.xpose.msra.mxu0 0.0
    %1472 = vmatprep.subr.mxu0 0.0
    %1473 = vmatpush1.xpose.msra.mxu0 0.0
    %1474 = vmatprep.subr.mxu0 0.0
    %1475 = vmatpush1.xpose.msra.mxu0 0.0
    %1476 = vmatprep.subr.mxu0 0.0
    %1477 = vmatpush1.xpose.msra.mxu0 0.0
    %1478 = vmatprep.subr.mxu0 0.0
    %1479 = vmatpush1.xpose.msra.mxu0 0.0
    %1480 = vmatprep.subr.mxu0 0.0
    %1481 = vmatpush1.xpose.msra.mxu0 0.0
    %1482 = vmatprep.subr.mxu0 0.0
    %1483 = vmatpush1.xpose.msra.mxu0 0.0
    %1484 = vmatprep.subr.mxu0 0.0
    %1485 = vmatpush1.xpose.msra.mxu0 0.0
    %1486 = vmatprep.subr.mxu0 0.0
    %1487 = vmatpush1.xpose.msra.mxu0 0.0
    %1488 = vmatprep.subr.mxu0 0.0
    %1489 = vmatpush1.xpose.msra.mxu0 0.0
    %1490 = vmatprep.subr.mxu0 0.0
    %1491 = vmatpush1.xpose.msra.mxu0 0.0
    %1492 = vmatprep.subr.mxu0 0.0
    %1493 = vmatpush1.xpose.msra.mxu0 0.0
    %1494 = vmatprep.subr.mxu0 0.0
    %1495 = vmatpush1.xpose.msra.mxu0 0.0
    %1496 = vmatprep.subr.mxu0 0.0
    %1497 = vmatpush1.xpose.msra.mxu0 0.0
    %1498 = vmatprep.subr.mxu0 0.0
    %1499 = vmatpush1.xpose.msra.mxu0 0.0
    %1500 = vmatprep.mubr.f32.mxu0 0.0
    %1501 = vmatmul.mubr.f32.gmra.mrb[0].mxu0 %v1428
    %v1502 = vpop.f32.mrb[0].mxu0
    %v1503 = vadd.f32 0.0, %v1502
    %v1504 = vpop.f32.mrb[0].mxu0
    %1505 = vmatprep.mubr.f32.mxu0 0.0
    %1506 = vmatmul.mubr.f32.gmra.mrb[0].mxu0 %v1430
    %v1507 = vpop.f32.mrb[0].mxu0
    %v1508 = vadd.f32 0.0, %v1507
    %v1509 = vpop.f32.mrb[0].mxu0
    %1510 = vdwg.mxu0
    %1511 = vrot.lane.b32.xlu0 %v405, 112
    %v1512 = vpop.permute.xlu0 %1511
    %1513 = vrot.lane.b32.xlu0 %v410, 112
    %v1514 = vpop.permute.xlu0 %1513
    %1515 = vrot.lane.b32.xlu0 %v405, 80
    %v1516 = vpop.permute.xlu0 %1515
    %1517 = vrot.lane.b32.xlu0 %v410, 80
    %v1518 = vpop.permute.xlu0 %1517
    %v1519 = vsel %vm132, %v1512, 0
    %v1521 = vsel %vm132, %v1514, 0
    %v1523 = vsel %vm132, %v1516, 0
    %v1525 = vsel %vm132, %v1518, 0
    %1527 = vmatprep.subr.mxu0 0.0
    %1528 = vmatpush1.xpose.msra.mxu0 %v1523
    %1529 = vmatprep.subr.mxu0 0.0
    %1530 = vmatpush1.xpose.msra.mxu0 %v1525
    %1531 = vmatprep.subr.mxu0 0.0
    %1532 = vmatpush1.xpose.msra.mxu0 0.0
    %1533 = vmatprep.subr.mxu0 0.0
    %1534 = vmatpush1.xpose.msra.mxu0 0.0
    %1535 = vmatprep.subr.mxu0 0.0
    %1536 = vmatpush1.xpose.msra.mxu0 0.0
    %1537 = vmatprep.subr.mxu0 0.0
    %1538 = vmatpush1.xpose.msra.mxu0 0.0
    %1539 = vmatprep.subr.mxu0 0.0
    %1540 = vmatpush1.xpose.msra.mxu0 0.0
    %1541 = vmatprep.subr.mxu0 0.0
    %1542 = vmatpush1.xpose.msra.mxu0 0.0
    %1543 = vmatprep.subr.mxu0 0.0
    %1544 = vmatpush1.xpose.msra.mxu0 0.0
    %1545 = vmatprep.subr.mxu0 0.0
    %1546 = vmatpush1.xpose.msra.mxu0 0.0
    %1547 = vmatprep.subr.mxu0 0.0
    %1548 = vmatpush1.xpose.msra.mxu0 0.0
    %1549 = vmatprep.subr.mxu0 0.0
    %1550 = vmatpush1.xpose.msra.mxu0 0.0
    %1551 = vmatprep.subr.mxu0 0.0
    %1552 = vmatpush1.xpose.msra.mxu0 0.0
    %1553 = vmatprep.subr.mxu0 0.0
    %1554 = vmatpush1.xpose.msra.mxu0 0.0
    %1555 = vmatprep.subr.mxu0 0.0
    %1556 = vmatpush1.xpose.msra.mxu0 0.0
    %1557 = vmatprep.subr.mxu0 0.0
    %1558 = vmatpush1.xpose.msra.mxu0 0.0
    %1559 = vmatprep.subr.mxu0 0.0
    %1560 = vmatpush1.xpose.msra.mxu0 0.0
    %1561 = vmatprep.subr.mxu0 0.0
    %1562 = vmatpush1.xpose.msra.mxu0 0.0
    %1563 = vmatprep.subr.mxu0 0.0
    %1564 = vmatpush1.xpose.msra.mxu0 0.0
    %1565 = vmatprep.subr.mxu0 0.0
    %1566 = vmatpush1.xpose.msra.mxu0 0.0
    %1567 = vmatprep.subr.mxu0 0.0
    %1568 = vmatpush1.xpose.msra.mxu0 0.0
    %1569 = vmatprep.subr.mxu0 0.0
    %1570 = vmatpush1.xpose.msra.mxu0 0.0
    %1571 = vmatprep.subr.mxu0 0.0
    %1572 = vmatpush1.xpose.msra.mxu0 0.0
    %1573 = vmatprep.subr.mxu0 0.0
    %1574 = vmatpush1.xpose.msra.mxu0 0.0
    %1575 = vmatprep.subr.mxu0 0.0
    %1576 = vmatpush1.xpose.msra.mxu0 0.0
    %1577 = vmatprep.subr.mxu0 0.0
    %1578 = vmatpush1.xpose.msra.mxu0 0.0
    %1579 = vmatprep.subr.mxu0 0.0
    %1580 = vmatpush1.xpose.msra.mxu0 0.0
    %1581 = vmatprep.subr.mxu0 0.0
    %1582 = vmatpush1.xpose.msra.mxu0 0.0
    %1583 = vmatprep.subr.mxu0 0.0
    %1584 = vmatpush1.xpose.msra.mxu0 0.0
    %1585 = vmatprep.subr.mxu0 0.0
    %1586 = vmatpush1.xpose.msra.mxu0 0.0
    %1587 = vmatprep.subr.mxu0 0.0
    %1588 = vmatpush1.xpose.msra.mxu0 0.0
    %1589 = vmatprep.subr.mxu0 0.0
    %1590 = vmatpush1.xpose.msra.mxu0 0.0
    %1591 = vmatprep.mubr.f32.mxu0 0.0
    %1592 = vmatmul.mubr.f32.gmra.mrb[0].mxu0 %v1519
    %v1593 = vpop.f32.mrb[0].mxu0
    %v1594 = vadd.f32 0.0, %v1593
    %v1595 = vpop.f32.mrb[0].mxu0
    %1596 = vmatprep.mubr.f32.mxu0 0.0
    %1597 = vmatmul.mubr.f32.gmra.mrb[0].mxu0 %v1521
    %v1598 = vpop.f32.mrb[0].mxu0
    %v1599 = vadd.f32 0.0, %v1598
    %v1600 = vpop.f32.mrb[0].mxu0
    %1601 = vdwg.mxu0
    %v1602 = vmul.f32 %v1503, 0.35355338
    %v1603 = vmul.f32 %v1508, 0.35355338
    %v1604 = vmul.f32 %v1594, 0.35355338
    %v1605 = vmul.f32 %v1599, 0.35355338
    %v1606 = vsel %vm599, %v1602, -inf
    %1607 = vmax.xlane.f32.xlu0 %v1606
    %v1608 = vpop.xlane.xlu0 %1607
    %v1609 = vsel %vm599, %v1603, -inf
    %1610 = vmax.xlane.f32.xlu0 %v1609
    %v1611 = vpop.xlane.xlu0 %1610
    %v1612 = vsel %vm599, %v1604, -inf
    %1613 = vmax.xlane.f32.xlu0 %v1612
    %v1614 = vpop.xlane.xlu0 %1613
    %v1615 = vsel %vm599, %v1605, -inf
    %1616 = vmax.xlane.f32.xlu0 %v1615
    %v1617 = vpop.xlane.xlu0 %1616
    %v1618 = vsub.f32 %v1602, %v1608
    %v1619 = vsub.f32 %v1603, %v1611
    %v1620 = vsub.f32 %v1604, %v1614
    %v1621 = vsub.f32 %v1605, %v1617
    %v1622 = vmul.f32 %v1618, 1.442695
    %v1623 = vpow.pop %v1622
    %v1624 = vmul.f32 %v1619, 1.442695
    %v1625 = vpow.pop %v1624
    %v1626 = vmul.f32 %v1620, 1.442695
    %v1627 = vpow.pop %v1626
    %v1628 = vmul.f32 %v1621, 1.442695
    %v1629 = vpow.pop %v1628
    %v1630 = vsel %vm599, %v1623, 0.0
    %1631 = vadd.xlane.f32.xlu0 %v1630
    %v1632 = vpop.xlane.xlu0 %1631
    %v1633 = vsel %vm599, %v1625, 0.0
    %1634 = vadd.xlane.f32.xlu0 %v1633
    %v1635 = vpop.xlane.xlu0 %1634
    %v1636 = vsel %vm599, %v1627, 0.0
    %1637 = vadd.xlane.f32.xlu0 %v1636
    %v1638 = vpop.xlane.xlu0 %1637
    %v1639 = vsel %vm599, %v1629, 0.0
    %1640 = vadd.xlane.f32.xlu0 %v1639
    %v1641 = vpop.xlane.xlu0 %1640
    %v1642 = vrcp.pop %v1632
    %v1643 = vrcp.pop %v1635
    %v1644 = vrcp.pop %v1638
    %v1645 = vrcp.pop %v1641
    %v1646 = vmul.f32 %v1623, %v1642
    %v1647 = vmul.f32 %v1625, %v1643
    %v1648 = vmul.f32 %v1627, %v1644
    %v1649 = vmul.f32 %v1629, %v1645
    %1650 = vrot.lane.b32.xlu0 %v395, 48
    %v1651 = vpop.permute.xlu0 %1650
    %1652 = vrot.lane.b32.xlu0 %v400, 48
    %v1653 = vpop.permute.xlu0 %1652
    %v1657 = vsel %vm599, %v1646, 0
    %v1660 = vsel %vm599, %v1647, 0
    %1662 = vmatprep.subr.mxu0 0.0
    %1663 = vmatpush1.msra.mxu0 %v1651
    %1664 = vmatprep.subr.mxu0 0.0
    %1665 = vmatpush1.msra.mxu0 %v1653
    %1666 = vmatprep.subr.mxu0 0.0
    %1667 = vmatpush1.msra.mxu0 0.0
    %1668 = vmatprep.subr.mxu0 0.0
    %1669 = vmatpush1.msra.mxu0 0.0
    %1670 = vmatprep.subr.mxu0 0.0
    %1671 = vmatpush1.msra.mxu0 0.0
    %1672 = vmatprep.subr.mxu0 0.0
    %1673 = vmatpush1.msra.mxu0 0.0
    %1674 = vmatprep.subr.mxu0 0.0
    %1675 = vmatpush1.msra.mxu0 0.0
    %1676 = vmatprep.subr.mxu0 0.0
    %1677 = vmatpush1.msra.mxu0 0.0
    %1678 = vmatprep.subr.mxu0 0.0
    %1679 = vmatpush1.msra.mxu0 0.0
    %1680 = vmatprep.subr.mxu0 0.0
    %1681 = vmatpush1.msra.mxu0 0.0
    %1682 = vmatprep.subr.mxu0 0.0
    %1683 = vmatpush1.msra.mxu0 0.0
    %1684 = vmatprep.subr.mxu0 0.0
    %1685 = vmatpush1.msra.mxu0 0.0
    %1686 = vmatprep.subr.mxu0 0.0
    %1687 = vmatpush1.msra.mxu0 0.0
    %1688 = vmatprep.subr.mxu0 0.0
    %1689 = vmatpush1.msra.mxu0 0.0
    %1690 = vmatprep.subr.mxu0 0.0
    %1691 = vmatpush1.msra.mxu0 0.0
    %1692 = vmatprep.subr.mxu0 0.0
    %1693 = vmatpush1.msra.mxu0 0.0
    %1694 = vmatprep.subr.mxu0 0.0
    %1695 = vmatpush1.msra.mxu0 0.0
    %1696 = vmatprep.subr.mxu0 0.0
    %1697 = vmatpush1.msra.mxu0 0.0
    %1698 = vmatprep.subr.mxu0 0.0
    %1699 = vmatpush1.msra.mxu0 0.0
    %1700 = vmatprep.subr.mxu0 0.0
    %1701 = vmatpush1.msra.mxu0 0.0
    %1702 = vmatprep.subr.mxu0 0.0
    %1703 = vmatpush1.msra.mxu0 0.0
    %1704 = vmatprep.subr.mxu0 0.0
    %1705 = vmatpush1.msra.mxu0 0.0
    %1706 = vmatprep.subr.mxu0 0.0
    %1707 = vmatpush1.msra.mxu0 0.0
    %1708 = vmatprep.subr.mxu0 0.0
    %1709 = vmatpush1.msra.mxu0 0.0
    %1710 = vmatprep.subr.mxu0 0.0
    %1711 = vmatpush1.msra.mxu0 0.0
    %1712 = vmatprep.subr.mxu0 0.0
    %1713 = vmatpush1.msra.mxu0 0.0
    %1714 = vmatprep.subr.mxu0 0.0
    %1715 = vmatpush1.msra.mxu0 0.0
    %1716 = vmatprep.subr.mxu0 0.0
    %1717 = vmatpush1.msra.mxu0 0.0
    %1718 = vmatprep.subr.mxu0 0.0
    %1719 = vmatpush1.msra.mxu0 0.0
    %1720 = vmatprep.subr.mxu0 0.0
    %1721 = vmatpush1.msra.mxu0 0.0
    %1722 = vmatprep.subr.mxu0 0.0
    %1723 = vmatpush1.msra.mxu0 0.0
    %1724 = vmatprep.subr.mxu0 0.0
    %1725 = vmatpush1.msra.mxu0 0.0
    %1726 = vmatprep.mubr.f32.mxu0 0.0
    %1727 = vmatmul.mubr.f32.gmra.mrb[0].mxu0 %v1657
    %v1728 = vpop.f32.mrb[0].mxu0
    %v1729 = vadd.f32 0.0, %v1728
    %v1730 = vpop.f32.mrb[0].mxu0
    %1731 = vmatprep.mubr.f32.mxu0 0.0
    %1732 = vmatmul.mubr.f32.gmra.mrb[0].mxu0 %v1660
    %v1733 = vpop.f32.mrb[0].mxu0
    %v1734 = vadd.f32 0.0, %v1733
    %v1735 = vpop.f32.mrb[0].mxu0
    %1736 = vdwg.mxu0
    %1737 = vrot.lane.b32.xlu0 %v405, 48
    %v1738 = vpop.permute.xlu0 %1737
    %1739 = vrot.lane.b32.xlu0 %v410, 48
    %v1740 = vpop.permute.xlu0 %1739
    %v1744 = vsel %vm599, %v1648, 0
    %v1747 = vsel %vm599, %v1649, 0
    %1749 = vmatprep.subr.mxu0 0.0
    %1750 = vmatpush1.msra.mxu0 %v1738
    %1751 = vmatprep.subr.mxu0 0.0
    %1752 = vmatpush1.msra.mxu0 %v1740
    %1753 = vmatprep.subr.mxu0 0.0
    %1754 = vmatpush1.msra.mxu0 0.0
    %1755 = vmatprep.subr.mxu0 0.0
    %1756 = vmatpush1.msra.mxu0 0.0
    %1757 = vmatprep.subr.mxu0 0.0
    %1758 = vmatpush1.msra.mxu0 0.0
    %1759 = vmatprep.subr.mxu0 0.0
    %1760 = vmatpush1.msra.mxu0 0.0
    %1761 = vmatprep.subr.mxu0 0.0
    %1762 = vmatpush1.msra.mxu0 0.0
    %1763 = vmatprep.subr.mxu0 0.0
    %1764 = vmatpush1.msra.mxu0 0.0
    %1765 = vmatprep.subr.mxu0 0.0
    %1766 = vmatpush1.msra.mxu0 0.0
    %1767 = vmatprep.subr.mxu0 0.0
    %1768 = vmatpush1.msra.mxu0 0.0
    %1769 = vmatprep.subr.mxu0 0.0
    %1770 = vmatpush1.msra.mxu0 0.0
    %1771 = vmatprep.subr.mxu0 0.0
    %1772 = vmatpush1.msra.mxu0 0.0
    %1773 = vmatprep.subr.mxu0 0.0
    %1774 = vmatpush1.msra.mxu0 0.0
    %1775 = vmatprep.subr.mxu0 0.0
    %1776 = vmatpush1.msra.mxu0 0.0
    %1777 = vmatprep.subr.mxu0 0.0
    %1778 = vmatpush1.msra.mxu0 0.0
    %1779 = vmatprep.subr.mxu0 0.0
    %1780 = vmatpush1.msra.mxu0 0.0
    %1781 = vmatprep.subr.mxu0 0.0
    %1782 = vmatpush1.msra.mxu0 0.0
    %1783 = vmatprep.subr.mxu0 0.0
    %1784 = vmatpush1.msra.mxu0 0.0
    %1785 = vmatprep.subr.mxu0 0.0
    %1786 = vmatpush1.msra.mxu0 0.0
    %1787 = vmatprep.subr.mxu0 0.0
    %1788 = vmatpush1.msra.mxu0 0.0
    %1789 = vmatprep.subr.mxu0 0.0
    %1790 = vmatpush1.msra.mxu0 0.0
    %1791 = vmatprep.subr.mxu0 0.0
    %1792 = vmatpush1.msra.mxu0 0.0
    %1793 = vmatprep.subr.mxu0 0.0
    %1794 = vmatpush1.msra.mxu0 0.0
    %1795 = vmatprep.subr.mxu0 0.0
    %1796 = vmatpush1.msra.mxu0 0.0
    %1797 = vmatprep.subr.mxu0 0.0
    %1798 = vmatpush1.msra.mxu0 0.0
    %1799 = vmatprep.subr.mxu0 0.0
    %1800 = vmatpush1.msra.mxu0 0.0
    %1801 = vmatprep.subr.mxu0 0.0
    %1802 = vmatpush1.msra.mxu0 0.0
    %1803 = vmatprep.subr.mxu0 0.0
    %1804 = vmatpush1.msra.mxu0 0.0
    %1805 = vmatprep.subr.mxu0 0.0
    %1806 = vmatpush1.msra.mxu0 0.0
    %1807 = vmatprep.subr.mxu0 0.0
    %1808 = vmatpush1.msra.mxu0 0.0
    %1809 = vmatprep.subr.mxu0 0.0
    %1810 = vmatpush1.msra.mxu0 0.0
    %1811 = vmatprep.subr.mxu0 0.0
    %1812 = vmatpush1.msra.mxu0 0.0
    %1813 = vmatprep.mubr.f32.mxu0 0.0
    %1814 = vmatmul.mubr.f32.gmra.mrb[0].mxu0 %v1744
    %v1815 = vpop.f32.mrb[0].mxu0
    %v1816 = vadd.f32 0.0, %v1815
    %v1817 = vpop.f32.mrb[0].mxu0
    %1818 = vmatprep.mubr.f32.mxu0 0.0
    %1819 = vmatmul.mubr.f32.gmra.mrb[0].mxu0 %v1747
    %v1820 = vpop.f32.mrb[0].mxu0
    %v1821 = vadd.f32 0.0, %v1820
    %v1822 = vpop.f32.mrb[0].mxu0
    %1823 = vdwg.mxu0
    %v1825 = vsel %vm132, %v1729, 0
    %v1828 = vsel %vm132, %v1734, 0
    %v1831 = vsel %vm132, %v1816, 0
    %v1834 = vsel %vm132, %v1821, 0
    %1836 = vmatprep.subr.mxu0 0.0
    %1837 = vmatpush1.msra.mxu0 %v415
    %1838 = vmatprep.subr.mxu0 0.0
    %1839 = vmatpush1.msra.mxu0 0.0
    %1840 = vmatprep.subr.mxu0 0.0
    %1841 = vmatpush1.msra.mxu0 0.0
    %1842 = vmatprep.subr.mxu0 0.0
    %1843 = vmatpush1.msra.mxu0 0.0
    %1844 = vmatprep.subr.mxu0 0.0
    %1845 = vmatpush1.msra.mxu0 0.0
    %1846 = vmatprep.subr.mxu0 0.0
    %1847 = vmatpush1.msra.mxu0 0.0
    %1848 = vmatprep.subr.mxu0 0.0
    %1849 = vmatpush1.msra.mxu0 0.0
    %1850 = vmatprep.subr.mxu0 0.0
    %1851 = vmatpush1.msra.mxu0 0.0
    %1852 = vmatprep.subr.mxu0 0.0
    %1853 = vmatpush1.msra.mxu0 0.0
    %1854 = vmatprep.subr.mxu0 0.0
    %1855 = vmatpush1.msra.mxu0 0.0
    %1856 = vmatprep.subr.mxu0 0.0
    %1857 = vmatpush1.msra.mxu0 0.0
    %1858 = vmatprep.subr.mxu0 0.0
    %1859 = vmatpush1.msra.mxu0 0.0
    %1860 = vmatprep.subr.mxu0 0.0
    %1861 = vmatpush1.msra.mxu0 0.0
    %1862 = vmatprep.subr.mxu0 0.0
    %1863 = vmatpush1.msra.mxu0 0.0
    %1864 = vmatprep.subr.mxu0 0.0
    %1865 = vmatpush1.msra.mxu0 0.0
    %1866 = vmatprep.subr.mxu0 0.0
    %1867 = vmatpush1.msra.mxu0 0.0
    %1868 = vmatprep.subr.mxu0 0.0
    %1869 = vmatpush1.msra.mxu0 0.0
    %1870 = vmatprep.subr.mxu0 0.0
    %1871 = vmatpush1.msra.mxu0 0.0
    %1872 = vmatprep.subr.mxu0 0.0
    %1873 = vmatpush1.msra.mxu0 0.0
    %1874 = vmatprep.subr.mxu0 0.0
    %1875 = vmatpush1.msra.mxu0 0.0
    %1876 = vmatprep.subr.mxu0 0.0
    %1877 = vmatpush1.msra.mxu0 0.0
    %1878 = vmatprep.subr.mxu0 0.0
    %1879 = vmatpush1.msra.mxu0 0.0
    %1880 = vmatprep.subr.mxu0 0.0
    %1881 = vmatpush1.msra.mxu0 0.0
    %1882 = vmatprep.subr.mxu0 0.0
    %1883 = vmatpush1.msra.mxu0 0.0
    %1884 = vmatprep.subr.mxu0 0.0
    %1885 = vmatpush1.msra.mxu0 0.0
    %1886 = vmatprep.subr.mxu0 0.0
    %1887 = vmatpush1.msra.mxu0 0.0
    %1888 = vmatprep.subr.mxu0 0.0
    %1889 = vmatpush1.msra.mxu0 0.0
    %1890 = vmatprep.subr.mxu0 0.0
    %1891 = vmatpush1.msra.mxu0 0.0
    %1892 = vmatprep.subr.mxu0 0.0
    %1893 = vmatpush1.msra.mxu0 0.0
    %1894 = vmatprep.subr.mxu0 0.0
    %1895 = vmatpush1.msra.mxu0 0.0
    %1896 = vmatprep.subr.mxu0 0.0
    %1897 = vmatpush1.msra.mxu0 0.0
    %1898 = vmatprep.subr.mxu0 0.0
    %1899 = vmatpush1.msra.mxu0 0.0
    %1900 = vmatprep.mubr.f32.mxu0 0.0
    %1901 = vmatmul.mubr.f32.gmra.mrb[0].mxu0 %v1825
    %v1902 = vpop.f32.mrb[0].mxu0
    %v1903 = vadd.f32 0.0, %v1902
    %v1904 = vpop.f32.mrb[0].mxu0
    %1905 = vmatprep.mubr.f32.mxu0 0.0
    %1906 = vmatmul.mubr.f32.gmra.mrb[0].mxu0 %v1828
    %v1907 = vpop.f32.mrb[0].mxu0
    %v1908 = vadd.f32 0.0, %v1907
    %v1909 = vpop.f32.mrb[0].mxu0
    %1910 = vmatprep.mubr.f32.mxu0 0.0
    %1911 = vmatmul.mubr.f32.gmra.mrb[0].mxu0 %v1831
    %v1912 = vpop.f32.mrb[0].mxu0
    %v1913 = vadd.f32 0.0, %v1912
    %v1914 = vpop.f32.mrb[0].mxu0
    %1915 = vmatprep.mubr.f32.mxu0 0.0
    %1916 = vmatmul.mubr.f32.gmra.mrb[0].mxu0 %v1834
    %v1917 = vpop.f32.mrb[0].mxu0
    %v1918 = vadd.f32 0.0, %v1917
    %v1919 = vpop.f32.mrb[0].mxu0
    %1920 = vdwg.mxu0
    %v1921 = vadd.f32 %v1416, %v1903
    %v1922 = vadd.f32 %v1417, %v1908
    %v1923 = vadd.f32 %v1418, %v1913
    %v1924 = vadd.f32 %v1419, %v1918
    %1925 = vrot.lane.b32.xlu0 %v395, 104
    %v1926 = vpop.permute.xlu0 %1925
    %1927 = vrot.lane.b32.xlu0 %v400, 104
    %v1928 = vpop.permute.xlu0 %1927
    %1929 = vrot.lane.b32.xlu0 %v395, 72
    %v1930 = vpop.permute.xlu0 %1929
    %1931 = vrot.lane.b32.xlu0 %v400, 72
    %v1932 = vpop.permute.xlu0 %1931
    %v1933 = vsel %vm132, %v1926, 0
    %v1935 = vsel %vm132, %v1928, 0
    %v1937 = vsel %vm132, %v1930, 0
    %v1939 = vsel %vm132, %v1932, 0
    %1941 = vmatprep.subr.mxu0 0.0
    %1942 = vmatpush1.xpose.msra.mxu0 %v1937
    %1943 = vmatprep.subr.mxu0 0.0
    %1944 = vmatpush1.xpose.msra.mxu0 %v1939
    %1945 = vmatprep.subr.mxu0 0.0
    %1946 = vmatpush1.xpose.msra.mxu0 0.0
    %1947 = vmatprep.subr.mxu0 0.0
    %1948 = vmatpush1.xpose.msra.mxu0 0.0
    %1949 = vmatprep.subr.mxu0 0.0
    %1950 = vmatpush1.xpose.msra.mxu0 0.0
    %1951 = vmatprep.subr.mxu0 0.0
    %1952 = vmatpush1.xpose.msra.mxu0 0.0
    %1953 = vmatprep.subr.mxu0 0.0
    %1954 = vmatpush1.xpose.msra.mxu0 0.0
    %1955 = vmatprep.subr.mxu0 0.0
    %1956 = vmatpush1.xpose.msra.mxu0 0.0
    %1957 = vmatprep.subr.mxu0 0.0
    %1958 = vmatpush1.xpose.msra.mxu0 0.0
    %1959 = vmatprep.subr.mxu0 0.0
    %1960 = vmatpush1.xpose.msra.mxu0 0.0
    %1961 = vmatprep.subr.mxu0 0.0
    %1962 = vmatpush1.xpose.msra.mxu0 0.0
    %1963 = vmatprep.subr.mxu0 0.0
    %1964 = vmatpush1.xpose.msra.mxu0 0.0
    %1965 = vmatprep.subr.mxu0 0.0
    %1966 = vmatpush1.xpose.msra.mxu0 0.0
    %1967 = vmatprep.subr.mxu0 0.0
    %1968 = vmatpush1.xpose.msra.mxu0 0.0
    %1969 = vmatprep.subr.mxu0 0.0
    %1970 = vmatpush1.xpose.msra.mxu0 0.0
    %1971 = vmatprep.subr.mxu0 0.0
    %1972 = vmatpush1.xpose.msra.mxu0 0.0
    %1973 = vmatprep.subr.mxu0 0.0
    %1974 = vmatpush1.xpose.msra.mxu0 0.0
    %1975 = vmatprep.subr.mxu0 0.0
    %1976 = vmatpush1.xpose.msra.mxu0 0.0
    %1977 = vmatprep.subr.mxu0 0.0
    %1978 = vmatpush1.xpose.msra.mxu0 0.0
    %1979 = vmatprep.subr.mxu0 0.0
    %1980 = vmatpush1.xpose.msra.mxu0 0.0
    %1981 = vmatprep.subr.mxu0 0.0
    %1982 = vmatpush1.xpose.msra.mxu0 0.0
    %1983 = vmatprep.subr.mxu0 0.0
    %1984 = vmatpush1.xpose.msra.mxu0 0.0
    %1985 = vmatprep.subr.mxu0 0.0
    %1986 = vmatpush1.xpose.msra.mxu0 0.0
    %1987 = vmatprep.subr.mxu0 0.0
    %1988 = vmatpush1.xpose.msra.mxu0 0.0
    %1989 = vmatprep.subr.mxu0 0.0
    %1990 = vmatpush1.xpose.msra.mxu0 0.0
    %1991 = vmatprep.subr.mxu0 0.0
    %1992 = vmatpush1.xpose.msra.mxu0 0.0
    %1993 = vmatprep.subr.mxu0 0.0
    %1994 = vmatpush1.xpose.msra.mxu0 0.0
    %1995 = vmatprep.subr.mxu0 0.0
    %1996 = vmatpush1.xpose.msra.mxu0 0.0
    %1997 = vmatprep.subr.mxu0 0.0
    %1998 = vmatpush1.xpose.msra.mxu0 0.0
    %1999 = vmatprep.subr.mxu0 0.0
    %2000 = vmatpush1.xpose.msra.mxu0 0.0
    %2001 = vmatprep.subr.mxu0 0.0
    %2002 = vmatpush1.xpose.msra.mxu0 0.0
    %2003 = vmatprep.subr.mxu0 0.0
    %2004 = vmatpush1.xpose.msra.mxu0 0.0
    %2005 = vmatprep.mubr.f32.mxu0 0.0
    %2006 = vmatmul.mubr.f32.gmra.mrb[0].mxu0 %v1933
    %v2007 = vpop.f32.mrb[0].mxu0
    %v2008 = vadd.f32 0.0, %v2007
    %v2009 = vpop.f32.mrb[0].mxu0
    %2010 = vmatprep.mubr.f32.mxu0 0.0
    %2011 = vmatmul.mubr.f32.gmra.mrb[0].mxu0 %v1935
    %v2012 = vpop.f32.mrb[0].mxu0
    %v2013 = vadd.f32 0.0, %v2012
    %v2014 = vpop.f32.mrb[0].mxu0
    %2015 = vdwg.mxu0
    %2016 = vrot.lane.b32.xlu0 %v405, 104
    %v2017 = vpop.permute.xlu0 %2016
    %2018 = vrot.lane.b32.xlu0 %v410, 104
    %v2019 = vpop.permute.xlu0 %2018
    %2020 = vrot.lane.b32.xlu0 %v405, 72
    %v2021 = vpop.permute.xlu0 %2020
    %2022 = vrot.lane.b32.xlu0 %v410, 72
    %v2023 = vpop.permute.xlu0 %2022
    %v2024 = vsel %vm132, %v2017, 0
    %v2026 = vsel %vm132, %v2019, 0
    %v2028 = vsel %vm132, %v2021, 0
    %v2030 = vsel %vm132, %v2023, 0
    %2032 = vmatprep.subr.mxu0 0.0
    %2033 = vmatpush1.xpose.msra.mxu0 %v2028
    %2034 = vmatprep.subr.mxu0 0.0
    %2035 = vmatpush1.xpose.msra.mxu0 %v2030
    %2036 = vmatprep.subr.mxu0 0.0
    %2037 = vmatpush1.xpose.msra.mxu0 0.0
    %2038 = vmatprep.subr.mxu0 0.0
    %2039 = vmatpush1.xpose.msra.mxu0 0.0
    %2040 = vmatprep.subr.mxu0 0.0
    %2041 = vmatpush1.xpose.msra.mxu0 0.0
    %2042 = vmatprep.subr.mxu0 0.0
    %2043 = vmatpush1.xpose.msra.mxu0 0.0
    %2044 = vmatprep.subr.mxu0 0.0
    %2045 = vmatpush1.xpose.msra.mxu0 0.0
    %2046 = vmatprep.subr.mxu0 0.0
    %2047 = vmatpush1.xpose.msra.mxu0 0.0
    %2048 = vmatprep.subr.mxu0 0.0
    %2049 = vmatpush1.xpose.msra.mxu0 0.0
    %2050 = vmatprep.subr.mxu0 0.0
    %2051 = vmatpush1.xpose.msra.mxu0 0.0
    %2052 = vmatprep.subr.mxu0 0.0
    %2053 = vmatpush1.xpose.msra.mxu0 0.0
    %2054 = vmatprep.subr.mxu0 0.0
    %2055 = vmatpush1.xpose.msra.mxu0 0.0
    %2056 = vmatprep.subr.mxu0 0.0
    %2057 = vmatpush1.xpose.msra.mxu0 0.0
    %2058 = vmatprep.subr.mxu0 0.0
    %2059 = vmatpush1.xpose.msra.mxu0 0.0
    %2060 = vmatprep.subr.mxu0 0.0
    %2061 = vmatpush1.xpose.msra.mxu0 0.0
    %2062 = vmatprep.subr.mxu0 0.0
    %2063 = vmatpush1.xpose.msra.mxu0 0.0
    %2064 = vmatprep.subr.mxu0 0.0
    %2065 = vmatpush1.xpose.msra.mxu0 0.0
    %2066 = vmatprep.subr.mxu0 0.0
    %2067 = vmatpush1.xpose.msra.mxu0 0.0
    %2068 = vmatprep.subr.mxu0 0.0
    %2069 = vmatpush1.xpose.msra.mxu0 0.0
    %2070 = vmatprep.subr.mxu0 0.0
    %2071 = vmatpush1.xpose.msra.mxu0 0.0
    %2072 = vmatprep.subr.mxu0 0.0
    %2073 = vmatpush1.xpose.msra.mxu0 0.0
    %2074 = vmatprep.subr.mxu0 0.0
    %2075 = vmatpush1.xpose.msra.mxu0 0.0
    %2076 = vmatprep.subr.mxu0 0.0
    %2077 = vmatpush1.xpose.msra.mxu0 0.0
    %2078 = vmatprep.subr.mxu0 0.0
    %2079 = vmatpush1.xpose.msra.mxu0 0.0
    %2080 = vmatprep.subr.mxu0 0.0
    %2081 = vmatpush1.xpose.msra.mxu0 0.0
    %2082 = vmatprep.subr.mxu0 0.0
    %2083 = vmatpush1.xpose.msra.mxu0 0.0
    %2084 = vmatprep.subr.mxu0 0.0
    %2085 = vmatpush1.xpose.msra.mxu0 0.0
    %2086 = vmatprep.subr.mxu0 0.0
    %2087 = vmatpush1.xpose.msra.mxu0 0.0
    %2088 = vmatprep.subr.mxu0 0.0
    %2089 = vmatpush1.xpose.msra.mxu0 0.0
    %2090 = vmatprep.subr.mxu0 0.0
    %2091 = vmatpush1.xpose.msra.mxu0 0.0
    %2092 = vmatprep.subr.mxu0 0.0
    %2093 = vmatpush1.xpose.msra.mxu0 0.0
    %2094 = vmatprep.subr.mxu0 0.0
    %2095 = vmatpush1.xpose.msra.mxu0 0.0
    %2096 = vmatprep.mubr.f32.mxu0 0.0
    %2097 = vmatmul.mubr.f32.gmra.mrb[0].mxu0 %v2024
    %v2098 = vpop.f32.mrb[0].mxu0
    %v2099 = vadd.f32 0.0, %v2098
    %v2100 = vpop.f32.mrb[0].mxu0
    %2101 = vmatprep.mubr.f32.mxu0 0.0
    %2102 = vmatmul.mubr.f32.gmra.mrb[0].mxu0 %v2026
    %v2103 = vpop.f32.mrb[0].mxu0
    %v2104 = vadd.f32 0.0, %v2103
    %v2105 = vpop.f32.mrb[0].mxu0
    %2106 = vdwg.mxu0
    %v2107 = vmul.f32 %v2008, 0.35355338
    %v2108 = vmul.f32 %v2013, 0.35355338
    %v2109 = vmul.f32 %v2099, 0.35355338
    %v2110 = vmul.f32 %v2104, 0.35355338
    %v2111 = vsel %vm599, %v2107, -inf
    %2112 = vmax.xlane.f32.xlu0 %v2111
    %v2113 = vpop.xlane.xlu0 %2112
    %v2114 = vsel %vm599, %v2108, -inf
    %2115 = vmax.xlane.f32.xlu0 %v2114
    %v2116 = vpop.xlane.xlu0 %2115
    %v2117 = vsel %vm599, %v2109, -inf
    %2118 = vmax.xlane.f32.xlu0 %v2117
    %v2119 = vpop.xlane.xlu0 %2118
    %v2120 = vsel %vm599, %v2110, -inf
    %2121 = vmax.xlane.f32.xlu0 %v2120
    %v2122 = vpop.xlane.xlu0 %2121
    %v2123 = vsub.f32 %v2107, %v2113
    %v2124 = vsub.f32 %v2108, %v2116
    %v2125 = vsub.f32 %v2109, %v2119
    %v2126 = vsub.f32 %v2110, %v2122
    %v2127 = vmul.f32 %v2123, 1.442695
    %v2128 = vpow.pop %v2127
    %v2129 = vmul.f32 %v2124, 1.442695
    %v2130 = vpow.pop %v2129
    %v2131 = vmul.f32 %v2125, 1.442695
    %v2132 = vpow.pop %v2131
    %v2133 = vmul.f32 %v2126, 1.442695
    %v2134 = vpow.pop %v2133
    %v2135 = vsel %vm599, %v2128, 0.0
    %2136 = vadd.xlane.f32.xlu0 %v2135
    %v2137 = vpop.xlane.xlu0 %2136
    %v2138 = vsel %vm599, %v2130, 0.0
    %2139 = vadd.xlane.f32.xlu0 %v2138
    %v2140 = vpop.xlane.xlu0 %2139
    %v2141 = vsel %vm599, %v2132, 0.0
    %2142 = vadd.xlane.f32.xlu0 %v2141
    %v2143 = vpop.xlane.xlu0 %2142
    %v2144 = vsel %vm599, %v2134, 0.0
    %2145 = vadd.xlane.f32.xlu0 %v2144
    %v2146 = vpop.xlane.xlu0 %2145
    %v2147 = vrcp.pop %v2137
    %v2148 = vrcp.pop %v2140
    %v2149 = vrcp.pop %v2143
    %v2150 = vrcp.pop %v2146
    %v2151 = vmul.f32 %v2128, %v2147
    %v2152 = vmul.f32 %v2130, %v2148
    %v2153 = vmul.f32 %v2132, %v2149
    %v2154 = vmul.f32 %v2134, %v2150
    %2155 = vrot.lane.b32.xlu0 %v395, 40
    %v2156 = vpop.permute.xlu0 %2155
    %2157 = vrot.lane.b32.xlu0 %v400, 40
    %v2158 = vpop.permute.xlu0 %2157
    %v2162 = vsel %vm599, %v2151, 0
    %v2165 = vsel %vm599, %v2152, 0
    %2167 = vmatprep.subr.mxu0 0.0
    %2168 = vmatpush1.msra.mxu0 %v2156
    %2169 = vmatprep.subr.mxu0 0.0
    %2170 = vmatpush1.msra.mxu0 %v2158
    %2171 = vmatprep.subr.mxu0 0.0
    %2172 = vmatpush1.msra.mxu0 0.0
    %2173 = vmatprep.subr.mxu0 0.0
    %2174 = vmatpush1.msra.mxu0 0.0
    %2175 = vmatprep.subr.mxu0 0.0
    %2176 = vmatpush1.msra.mxu0 0.0
    %2177 = vmatprep.subr.mxu0 0.0
    %2178 = vmatpush1.msra.mxu0 0.0
    %2179 = vmatprep.subr.mxu0 0.0
    %2180 = vmatpush1.msra.mxu0 0.0
    %2181 = vmatprep.subr.mxu0 0.0
    %2182 = vmatpush1.msra.mxu0 0.0
    %2183 = vmatprep.subr.mxu0 0.0
    %2184 = vmatpush1.msra.mxu0 0.0
    %2185 = vmatprep.subr.mxu0 0.0
    %2186 = vmatpush1.msra.mxu0 0.0
    %2187 = vmatprep.subr.mxu0 0.0
    %2188 = vmatpush1.msra.mxu0 0.0
    %2189 = vmatprep.subr.mxu0 0.0
    %2190 = vmatpush1.msra.mxu0 0.0
    %2191 = vmatprep.subr.mxu0 0.0
    %2192 = vmatpush1.msra.mxu0 0.0
    %2193 = vmatprep.subr.mxu0 0.0
    %2194 = vmatpush1.msra.mxu0 0.0
    %2195 = vmatprep.subr.mxu0 0.0
    %2196 = vmatpush1.msra.mxu0 0.0
    %2197 = vmatprep.subr.mxu0 0.0
    %2198 = vmatpush1.msra.mxu0 0.0
    %2199 = vmatprep.subr.mxu0 0.0
    %2200 = vmatpush1.msra.mxu0 0.0
    %2201 = vmatprep.subr.mxu0 0.0
    %2202 = vmatpush1.msra.mxu0 0.0
    %2203 = vmatprep.subr.mxu0 0.0
    %2204 = vmatpush1.msra.mxu0 0.0
    %2205 = vmatprep.subr.mxu0 0.0
    %2206 = vmatpush1.msra.mxu0 0.0
    %2207 = vmatprep.subr.mxu0 0.0
    %2208 = vmatpush1.msra.mxu0 0.0
    %2209 = vmatprep.subr.mxu0 0.0
    %2210 = vmatpush1.msra.mxu0 0.0
    %2211 = vmatprep.subr.mxu0 0.0
    %2212 = vmatpush1.msra.mxu0 0.0
    %2213 = vmatprep.subr.mxu0 0.0
    %2214 = vmatpush1.msra.mxu0 0.0
    %2215 = vmatprep.subr.mxu0 0.0
    %2216 = vmatpush1.msra.mxu0 0.0
    %2217 = vmatprep.subr.mxu0 0.0
    %2218 = vmatpush1.msra.mxu0 0.0
    %2219 = vmatprep.subr.mxu0 0.0
    %2220 = vmatpush1.msra.mxu0 0.0
    %2221 = vmatprep.subr.mxu0 0.0
    %2222 = vmatpush1.msra.mxu0 0.0
    %2223 = vmatprep.subr.mxu0 0.0
    %2224 = vmatpush1.msra.mxu0 0.0
    %2225 = vmatprep.subr.mxu0 0.0
    %2226 = vmatpush1.msra.mxu0 0.0
    %2227 = vmatprep.subr.mxu0 0.0
    %2228 = vmatpush1.msra.mxu0 0.0
    %2229 = vmatprep.subr.mxu0 0.0
    %2230 = vmatpush1.msra.mxu0 0.0
    %2231 = vmatprep.mubr.f32.mxu0 0.0
    %2232 = vmatmul.mubr.f32.gmra.mrb[0].mxu0 %v2162
    %v2233 = vpop.f32.mrb[0].mxu0
    %v2234 = vadd.f32 0.0, %v2233
    %v2235 = vpop.f32.mrb[0].mxu0
    %2236 = vmatprep.mubr.f32.mxu0 0.0
    %2237 = vmatmul.mubr.f32.gmra.mrb[0].mxu0 %v2165
    %v2238 = vpop.f32.mrb[0].mxu0
    %v2239 = vadd.f32 0.0, %v2238
    %v2240 = vpop.f32.mrb[0].mxu0
    %2241 = vdwg.mxu0
    %2242 = vrot.lane.b32.xlu0 %v405, 40
    %v2243 = vpop.permute.xlu0 %2242
    %2244 = vrot.lane.b32.xlu0 %v410, 40
    %v2245 = vpop.permute.xlu0 %2244
    %v2249 = vsel %vm599, %v2153, 0
    %v2252 = vsel %vm599, %v2154, 0
    %2254 = vmatprep.subr.mxu0 0.0
    %2255 = vmatpush1.msra.mxu0 %v2243
    %2256 = vmatprep.subr.mxu0 0.0
    %2257 = vmatpush1.msra.mxu0 %v2245
    %2258 = vmatprep.subr.mxu0 0.0
    %2259 = vmatpush1.msra.mxu0 0.0
    %2260 = vmatprep.subr.mxu0 0.0
    %2261 = vmatpush1.msra.mxu0 0.0
    %2262 = vmatprep.subr.mxu0 0.0
    %2263 = vmatpush1.msra.mxu0 0.0
    %2264 = vmatprep.subr.mxu0 0.0
    %2265 = vmatpush1.msra.mxu0 0.0
    %2266 = vmatprep.subr.mxu0 0.0
    %2267 = vmatpush1.msra.mxu0 0.0
    %2268 = vmatprep.subr.mxu0 0.0
    %2269 = vmatpush1.msra.mxu0 0.0
    %2270 = vmatprep.subr.mxu0 0.0
    %2271 = vmatpush1.msra.mxu0 0.0
    %2272 = vmatprep.subr.mxu0 0.0
    %2273 = vmatpush1.msra.mxu0 0.0
    %2274 = vmatprep.subr.mxu0 0.0
    %2275 = vmatpush1.msra.mxu0 0.0
    %2276 = vmatprep.subr.mxu0 0.0
    %2277 = vmatpush1.msra.mxu0 0.0
    %2278 = vmatprep.subr.mxu0 0.0
    %2279 = vmatpush1.msra.mxu0 0.0
    %2280 = vmatprep.subr.mxu0 0.0
    %2281 = vmatpush1.msra.mxu0 0.0
    %2282 = vmatprep.subr.mxu0 0.0
    %2283 = vmatpush1.msra.mxu0 0.0
    %2284 = vmatprep.subr.mxu0 0.0
    %2285 = vmatpush1.msra.mxu0 0.0
    %2286 = vmatprep.subr.mxu0 0.0
    %2287 = vmatpush1.msra.mxu0 0.0
    %2288 = vmatprep.subr.mxu0 0.0
    %2289 = vmatpush1.msra.mxu0 0.0
    %2290 = vmatprep.subr.mxu0 0.0
    %2291 = vmatpush1.msra.mxu0 0.0
    %2292 = vmatprep.subr.mxu0 0.0
    %2293 = vmatpush1.msra.mxu0 0.0
    %2294 = vmatprep.subr.mxu0 0.0
    %2295 = vmatpush1.msra.mxu0 0.0
    %2296 = vmatprep.subr.mxu0 0.0
    %2297 = vmatpush1.msra.mxu0 0.0
    %2298 = vmatprep.subr.mxu0 0.0
    %2299 = vmatpush1.msra.mxu0 0.0
    %2300 = vmatprep.subr.mxu0 0.0
    %2301 = vmatpush1.msra.mxu0 0.0
    %2302 = vmatprep.subr.mxu0 0.0
    %2303 = vmatpush1.msra.mxu0 0.0
    %2304 = vmatprep.subr.mxu0 0.0
    %2305 = vmatpush1.msra.mxu0 0.0
    %2306 = vmatprep.subr.mxu0 0.0
    %2307 = vmatpush1.msra.mxu0 0.0
    %2308 = vmatprep.subr.mxu0 0.0
    %2309 = vmatpush1.msra.mxu0 0.0
    %2310 = vmatprep.subr.mxu0 0.0
    %2311 = vmatpush1.msra.mxu0 0.0
    %2312 = vmatprep.subr.mxu0 0.0
    %2313 = vmatpush1.msra.mxu0 0.0
    %2314 = vmatprep.subr.mxu0 0.0
    %2315 = vmatpush1.msra.mxu0 0.0
    %2316 = vmatprep.subr.mxu0 0.0
    %2317 = vmatpush1.msra.mxu0 0.0
    %2318 = vmatprep.mubr.f32.mxu0 0.0
    %2319 = vmatmul.mubr.f32.gmra.mrb[0].mxu0 %v2249
    %v2320 = vpop.f32.mrb[0].mxu0
    %v2321 = vadd.f32 0.0, %v2320
    %v2322 = vpop.f32.mrb[0].mxu0
    %2323 = vmatprep.mubr.f32.mxu0 0.0
    %2324 = vmatmul.mubr.f32.gmra.mrb[0].mxu0 %v2252
    %v2325 = vpop.f32.mrb[0].mxu0
    %v2326 = vadd.f32 0.0, %v2325
    %v2327 = vpop.f32.mrb[0].mxu0
    %2328 = vdwg.mxu0
    %v2330 = vsel %vm132, %v2234, 0
    %v2333 = vsel %vm132, %v2239, 0
    %v2336 = vsel %vm132, %v2321, 0
    %v2339 = vsel %vm132, %v2326, 0
    %2341 = vmatprep.subr.mxu0 0.0
    %2342 = vmatpush1.msra.mxu0 %v416
    %2343 = vmatprep.subr.mxu0 0.0
    %2344 = vmatpush1.msra.mxu0 0.0
    %2345 = vmatprep.subr.mxu0 0.0
    %2346 = vmatpush1.msra.mxu0 0.0
    %2347 = vmatprep.subr.mxu0 0.0
    %2348 = vmatpush1.msra.mxu0 0.0
    %2349 = vmatprep.subr.mxu0 0.0
    %2350 = vmatpush1.msra.mxu0 0.0
    %2351 = vmatprep.subr.mxu0 0.0
    %2352 = vmatpush1.msra.mxu0 0.0
    %2353 = vmatprep.subr.mxu0 0.0
    %2354 = vmatpush1.msra.mxu0 0.0
    %2355 = vmatprep.subr.mxu0 0.0
    %2356 = vmatpush1.msra.mxu0 0.0
    %2357 = vmatprep.subr.mxu0 0.0
    %2358 = vmatpush1.msra.mxu0 0.0
    %2359 = vmatprep.subr.mxu0 0.0
    %2360 = vmatpush1.msra.mxu0 0.0
    %2361 = vmatprep.subr.mxu0 0.0
    %2362 = vmatpush1.msra.mxu0 0.0
    %2363 = vmatprep.subr.mxu0 0.0
    %2364 = vmatpush1.msra.mxu0 0.0
    %2365 = vmatprep.subr.mxu0 0.0
    %2366 = vmatpush1.msra.mxu0 0.0
    %2367 = vmatprep.subr.mxu0 0.0
    %2368 = vmatpush1.msra.mxu0 0.0
    %2369 = vmatprep.subr.mxu0 0.0
    %2370 = vmatpush1.msra.mxu0 0.0
    %2371 = vmatprep.subr.mxu0 0.0
    %2372 = vmatpush1.msra.mxu0 0.0
    %2373 = vmatprep.subr.mxu0 0.0
    %2374 = vmatpush1.msra.mxu0 0.0
    %2375 = vmatprep.subr.mxu0 0.0
    %2376 = vmatpush1.msra.mxu0 0.0
    %2377 = vmatprep.subr.mxu0 0.0
    %2378 = vmatpush1.msra.mxu0 0.0
    %2379 = vmatprep.subr.mxu0 0.0
    %2380 = vmatpush1.msra.mxu0 0.0
    %2381 = vmatprep.subr.mxu0 0.0
    %2382 = vmatpush1.msra.mxu0 0.0
    %2383 = vmatprep.subr.mxu0 0.0
    %2384 = vmatpush1.msra.mxu0 0.0
    %2385 = vmatprep.subr.mxu0 0.0
    %2386 = vmatpush1.msra.mxu0 0.0
    %2387 = vmatprep.subr.mxu0 0.0
    %2388 = vmatpush1.msra.mxu0 0.0
    %2389 = vmatprep.subr.mxu0 0.0
    %2390 = vmatpush1.msra.mxu0 0.0
    %2391 = vmatprep.subr.mxu0 0.0
    %2392 = vmatpush1.msra.mxu0 0.0
    %2393 = vmatprep.subr.mxu0 0.0
    %2394 = vmatpush1.msra.mxu0 0.0
    %2395 = vmatprep.subr.mxu0 0.0
    %2396 = vmatpush1.msra.mxu0 0.0
    %2397 = vmatprep.subr.mxu0 0.0
    %2398 = vmatpush1.msra.mxu0 0.0
    %2399 = vmatprep.subr.mxu0 0.0
    %2400 = vmatpush1.msra.mxu0 0.0
    %2401 = vmatprep.subr.mxu0 0.0
    %2402 = vmatpush1.msra.mxu0 0.0
    %2403 = vmatprep.subr.mxu0 0.0
    %2404 = vmatpush1.msra.mxu0 0.0
    %2405 = vmatprep.mubr.f32.mxu0 0.0
    %2406 = vmatmul.mubr.f32.gmra.mrb[0].mxu0 %v2330
    %v2407 = vpop.f32.mrb[0].mxu0
    %v2408 = vadd.f32 0.0, %v2407
    %v2409 = vpop.f32.mrb[0].mxu0
    %2410 = vmatprep.mubr.f32.mxu0 0.0
    %2411 = vmatmul.mubr.f32.gmra.mrb[0].mxu0 %v2333
    %v2412 = vpop.f32.mrb[0].mxu0
    %v2413 = vadd.f32 0.0, %v2412
    %v2414 = vpop.f32.mrb[0].mxu0
    %2415 = vmatprep.mubr.f32.mxu0 0.0
    %2416 = vmatmul.mubr.f32.gmra.mrb[0].mxu0 %v2336
    %v2417 = vpop.f32.mrb[0].mxu0
    %v2418 = vadd.f32 0.0, %v2417
    %v2419 = vpop.f32.mrb[0].mxu0
    %2420 = vmatprep.mubr.f32.mxu0 0.0
    %2421 = vmatmul.mubr.f32.gmra.mrb[0].mxu0 %v2339
    %v2422 = vpop.f32.mrb[0].mxu0
    %v2423 = vadd.f32 0.0, %v2422
    %v2424 = vpop.f32.mrb[0].mxu0
    %2425 = vdwg.mxu0
    %v2426 = vadd.f32 %v1921, %v2408
    %v2427 = vadd.f32 %v1922, %v2413
    %v2428 = vadd.f32 %v1923, %v2418
    %v2429 = vadd.f32 %v1924, %v2423
    %v2430 = vadd.f32 %v232, %v2426
    %v2431 = vadd.f32 %v233, %v2427
    %v2432 = vadd.f32 %v234, %v2428
    %v2433 = vadd.f32 %v235, %v2429
    %v2434 = vld [vmem:[#allocation6] sm:$0x1]
    %v2435 = vld [vmem:[#allocation7] sm:$0x1]
    %v2436 = vsel %vm238, %v2430, 0.0
    %2437 = vadd.xlane.f32.xlu0 %v2436
    %v2438 = vpop.xlane.xlu0 %2437
    %v2439 = vsel %vm238, %v2431, 0.0
    %2440 = vadd.xlane.f32.xlu0 %v2439
    %v2441 = vpop.xlane.xlu0 %2440
    %v2442 = vsel %vm238, %v2432, 0.0
    %2443 = vadd.xlane.f32.xlu0 %v2442
    %v2444 = vpop.xlane.xlu0 %2443
    %v2445 = vsel %vm238, %v2433, 0.0
    %2446 = vadd.xlane.f32.xlu0 %v2445
    %v2447 = vpop.xlane.xlu0 %2446
    %v2448 = vmul.f32 %v2438, %v251
    %v2449 = vmul.f32 %v2441, %v251
    %v2450 = vmul.f32 %v2444, %v251
    %v2451 = vmul.f32 %v2447, %v251
    %v2452 = vsub.f32 %v2430, %v2448
    %v2453 = vsub.f32 %v2431, %v2449
    %v2454 = vsub.f32 %v2432, %v2450
    %v2455 = vsub.f32 %v2433, %v2451
    %v2456 = vmul.f32 %v2452, %v2452
    %v2457 = vmul.f32 %v2453, %v2453
    %v2458 = vmul.f32 %v2454, %v2454
    %v2459 = vmul.f32 %v2455, %v2455
    %v2460 = vsel %vm238, %v2456, 0.0
    %2461 = vadd.xlane.f32.xlu0 %v2460
    %v2462 = vpop.xlane.xlu0 %2461
    %v2463 = vsel %vm238, %v2457, 0.0
    %2464 = vadd.xlane.f32.xlu0 %v2463
    %v2465 = vpop.xlane.xlu0 %2464
    %v2466 = vsel %vm238, %v2458, 0.0
    %2467 = vadd.xlane.f32.xlu0 %v2466
    %v2468 = vpop.xlane.xlu0 %2467
    %v2469 = vsel %vm238, %v2459, 0.0
    %2470 = vadd.xlane.f32.xlu0 %v2469
    %v2471 = vpop.xlane.xlu0 %2470
    %v2472 = vmul.f32 %v2462, %v251
    %v2473 = vmul.f32 %v2465, %v251
    %v2474 = vmul.f32 %v2468, %v251
    %v2475 = vmul.f32 %v2471, %v251
    %v2476 = vadd.f32 %v2472, 1e-05
    %v2477 = vadd.f32 %v2473, 1e-05
    %v2478 = vadd.f32 %v2474, 1e-05
    %v2479 = vadd.f32 %v2475, 1e-05
    %v2480 = vrsqrt.pop %v2476
    %v2481 = vrsqrt.pop %v2477
    %v2482 = vrsqrt.pop %v2478
    %v2483 = vrsqrt.pop %v2479
    %v2484 = vmul.f32 %v2452, %v2480
    %v2485 = vmul.f32 %v2453, %v2481
    %v2486 = vmul.f32 %v2454, %v2482
    %v2487 = vmul.f32 %v2455, %v2483
    %v2489 = vlaneseq
    %v2490 = vshrl.u32 %v2489, 7
    %v2491 = vsub.s32 0, %v2490
    %v2492 = vrot.slane %v2434, %v2491
    %v2494 = vmul.f32 %v2484, %v2492
    %v2495 = vmul.f32 %v2485, %v2492
    %v2496 = vmul.f32 %v2486, %v2492
    %v2497 = vmul.f32 %v2487, %v2492
    %v2499 = vlaneseq
    %v2500 = vshrl.u32 %v2499, 7
    %v2501 = vsub.s32 0, %v2500
    %v2502 = vrot.slane %v2435, %v2501
    %v2504 = vadd.f32 %v2494, %v2502
    %v2505 = vadd.f32 %v2495, %v2502
    %v2506 = vadd.f32 %v2496, %v2502
    %v2507 = vadd.f32 %v2497, %v2502
    %v2508 = vld [vmem:[%s9] sm:$0xff]
    %v2509 = vld [vmem:[%s9 + $0x8] sm:$0xff]
    %v2510 = vld [vmem:[%s9 + $0x10] sm:$0xff]
    %v2511 = vld [vmem:[%s9 + $0x18] sm:$0xff]
    %v2513 = vsel %vm238, %v2504, 0
    %v2516 = vsel %vm238, %v2505, 0
    %v2519 = vsel %vm238, %v2506, 0
    %v2522 = vsel %vm238, %v2507, 0
    %2524 = vmatprep.subr.mxu0 0.0
    %2525 = vmatpush1.msra.mxu0 %v2508
    %2526 = vmatprep.subr.mxu0 0.0
    %2527 = vmatpush1.msra.mxu0 %v2509
    %2528 = vmatprep.subr.mxu0 0.0
    %2529 = vmatpush1.msra.mxu0 %v2510
    %2530 = vmatprep.subr.mxu0 0.0
    %2531 = vmatpush1.msra.mxu0 %v2511
    %2532 = vmatprep.subr.mxu0 0.0
    %2533 = vmatpush1.msra.mxu0 0.0
    %2534 = vmatprep.subr.mxu0 0.0
    %2535 = vmatpush1.msra.mxu0 0.0
    %2536 = vmatprep.subr.mxu0 0.0
    %2537 = vmatpush1.msra.mxu0 0.0
    %2538 = vmatprep.subr.mxu0 0.0
    %2539 = vmatpush1.msra.mxu0 0.0
    %2540 = vmatprep.subr.mxu0 0.0
    %2541 = vmatpush1.msra.mxu0 0.0
    %2542 = vmatprep.subr.mxu0 0.0
    %2543 = vmatpush1.msra.mxu0 0.0
    %2544 = vmatprep.subr.mxu0 0.0
    %2545 = vmatpush1.msra.mxu0 0.0
    %2546 = vmatprep.subr.mxu0 0.0
    %2547 = vmatpush1.msra.mxu0 0.0
    %2548 = vmatprep.subr.mxu0 0.0
    %2549 = vmatpush1.msra.mxu0 0.0
    %2550 = vmatprep.subr.mxu0 0.0
    %2551 = vmatpush1.msra.mxu0 0.0
    %2552 = vmatprep.subr.mxu0 0.0
    %2553 = vmatpush1.msra.mxu0 0.0
    %2554 = vmatprep.subr.mxu0 0.0
    %2555 = vmatpush1.msra.mxu0 0.0
    %2556 = vmatprep.subr.mxu0 0.0
    %2557 = vmatpush1.msra.mxu0 0.0
    %2558 = vmatprep.subr.mxu0 0.0
    %2559 = vmatpush1.msra.mxu0 0.0
    %2560 = vmatprep.subr.mxu0 0.0
    %2561 = vmatpush1.msra.mxu0 0.0
    %2562 = vmatprep.subr.mxu0 0.0
    %2563 = vmatpush1.msra.mxu0 0.0
    %2564 = vmatprep.subr.mxu0 0.0
    %2565 = vmatpush1.msra.mxu0 0.0
    %2566 = vmatprep.subr.mxu0 0.0
    %2567 = vmatpush1.msra.mxu0 0.0
    %2568 = vmatprep.subr.mxu0 0.0
    %2569 = vmatpush1.msra.mxu0 0.0
    %2570 = vmatprep.subr.mxu0 0.0
    %2571 = vmatpush1.msra.mxu0 0.0
    %2572 = vmatprep.subr.mxu0 0.0
    %2573 = vmatpush1.msra.mxu0 0.0
    %2574 = vmatprep.subr.mxu0 0.0
    %2575 = vmatpush1.msra.mxu0 0.0
    %2576 = vmatprep.subr.mxu0 0.0
    %2577 = vmatpush1.msra.mxu0 0.0
    %2578 = vmatprep.subr.mxu0 0.0
    %2579 = vmatpush1.msra.mxu0 0.0
    %2580 = vmatprep.subr.mxu0 0.0
    %2581 = vmatpush1.msra.mxu0 0.0
    %2582 = vmatprep.subr.mxu0 0.0
    %2583 = vmatpush1.msra.mxu0 0.0
    %2584 = vmatprep.subr.mxu0 0.0
    %2585 = vmatpush1.msra.mxu0 0.0
    %2586 = vmatprep.subr.mxu0 0.0
    %2587 = vmatpush1.msra.mxu0 0.0
    %2588 = vmatprep.mubr.f32.mxu0 0.0
    %2589 = vmatmul.mubr.f32.gmra.mrb[0].mxu0 %v2513
    %v2590 = vpop.f32.mrb[0].mxu0
    %v2591 = vadd.f32 0.0, %v2590
    %v2592 = vpop.f32.mrb[0].mxu0
    %2593 = vmatprep.mubr.f32.mxu0 0.0
    %2594 = vmatmul.mubr.f32.gmra.mrb[0].mxu0 %v2516
    %v2595 = vpop.f32.mrb[0].mxu0
    %v2596 = vadd.f32 0.0, %v2595
    %v2597 = vpop.f32.mrb[0].mxu0
    %2598 = vmatprep.mubr.f32.mxu0 0.0
    %2599 = vmatmul.mubr.f32.gmra.mrb[0].mxu0 %v2519
    %v2600 = vpop.f32.mrb[0].mxu0
    %v2601 = vadd.f32 0.0, %v2600
    %v2602 = vpop.f32.mrb[0].mxu0
    %2603 = vmatprep.mubr.f32.mxu0 0.0
    %2604 = vmatmul.mubr.f32.gmra.mrb[0].mxu0 %v2522
    %v2605 = vpop.f32.mrb[0].mxu0
    %v2606 = vadd.f32 0.0, %v2605
    %v2607 = vpop.f32.mrb[0].mxu0
    %2608 = vdwg.mxu0
    %v2609 = vxor.u32 %v2591, 2147483648
    %v2610 = vxor.u32 %v2596, 2147483648
    %v2611 = vxor.u32 %v2601, 2147483648
    %v2612 = vxor.u32 %v2606, 2147483648
    %v2613 = vmul.f32 %v2609, 1.442695
    %v2614 = vpow.pop %v2613
    %v2615 = vmul.f32 %v2610, 1.442695
    %v2616 = vpow.pop %v2615
    %v2617 = vmul.f32 %v2611, 1.442695
    %v2618 = vpow.pop %v2617
    %v2619 = vmul.f32 %v2612, 1.442695
    %v2620 = vpow.pop %v2619
    %v2621 = vadd.f32 %v2614, 1.0
    %v2622 = vadd.f32 %v2616, 1.0
    %v2623 = vadd.f32 %v2618, 1.0
    %v2624 = vadd.f32 %v2620, 1.0
    %v2625 = vrcp.pop %v2621
    %v2626 = vmul.f32 1.0, %v2625
    %v2627 = vrcp.pop %v2622
    %v2628 = vmul.f32 1.0, %v2627
    %v2629 = vrcp.pop %v2623
    %v2630 = vmul.f32 1.0, %v2629
    %v2631 = vrcp.pop %v2624
    %v2632 = vmul.f32 1.0, %v2631
    %v2633 = vmul.f32 %v2591, %v2626
    %v2634 = vmul.f32 %v2596, %v2628
    %v2635 = vmul.f32 %v2601, %v2630
    %v2636 = vmul.f32 %v2606, %v2632
    %2641 = vrot.lane.b32.xlu0 %v2591, 64
    %v2642 = vpop.permute.xlu0 %2641
    %2643 = vrot.lane.b32.xlu0 %v2596, 64
    %v2644 = vpop.permute.xlu0 %2643
    %2645 = vrot.lane.b32.xlu0 %v2601, 64
    %v2646 = vpop.permute.xlu0 %2645
    %2647 = vrot.lane.b32.xlu0 %v2606, 64
    %v2648 = vpop.permute.xlu0 %2647
    %v2653 = vmul.f32 %v2633, %v2642
    %v2654 = vmul.f32 %v2634, %v2644
    %v2655 = vmul.f32 %v2635, %v2646
    %v2656 = vmul.f32 %v2636, %v2648
    %v2657 = vld [vmem:[%s10] sm:$0xff]
    %v2658 = vld [vmem:[%s10 + $0x8] sm:$0xff]
    %v2659 = vld [vmem:[%s10 + $0x10] sm:$0xff]
    %v2660 = vld [vmem:[%s10 + $0x18] sm:$0xff]
    %v2661 = vld [vmem:[%s10 + $0x20] sm:$0xff]
    %v2662 = vld [vmem:[%s10 + $0x28] sm:$0xff]
    %v2663 = vld [vmem:[%s10 + $0x30] sm:$0xff]
    %v2664 = vld [vmem:[%s10 + $0x38] sm:$0xff]
    %vm2665 = vcmask 523264
    %v2667 = vsel %vm2665, %v2653, 0
    %v2670 = vsel %vm2665, %v2654, 0
    %v2673 = vsel %vm2665, %v2655, 0
    %v2676 = vsel %vm2665, %v2656, 0
    %2678 = vmatprep.subr.mxu0 0.0
    %2679 = vmatpush1.msra.mxu0 %v2657
    %2680 = vmatprep.subr.mxu0 0.0
    %2681 = vmatpush1.msra.mxu0 %v2658
    %2682 = vmatprep.subr.mxu0 0.0
    %2683 = vmatpush1.msra.mxu0 %v2659
    %2684 = vmatprep.subr.mxu0 0.0
    %2685 = vmatpush1.msra.mxu0 %v2660
    %2686 = vmatprep.subr.mxu0 0.0
    %2687 = vmatpush1.msra.mxu0 %v2661
    %2688 = vmatprep.subr.mxu0 0.0
    %2689 = vmatpush1.msra.mxu0 %v2662
    %2690 = vmatprep.subr.mxu0 0.0
    %2691 = vmatpush1.msra.mxu0 %v2663
    %2692 = vmatprep.subr.mxu0 0.0
    %2693 = vmatpush1.msra.mxu0 %v2664
    %2694 = vmatprep.subr.mxu0 0.0
    %2695 = vmatpush1.msra.mxu0 0.0
    %2696 = vmatprep.subr.mxu0 0.0
    %2697 = vmatpush1.msra.mxu0 0.0
    %2698 = vmatprep.subr.mxu0 0.0
    %2699 = vmatpush1.msra.mxu0 0.0
    %2700 = vmatprep.subr.mxu0 0.0
    %2701 = vmatpush1.msra.mxu0 0.0
    %2702 = vmatprep.subr.mxu0 0.0
    %2703 = vmatpush1.msra.mxu0 0.0
    %2704 = vmatprep.subr.mxu0 0.0
    %2705 = vmatpush1.msra.mxu0 0.0
    %2706 = vmatprep.subr.mxu0 0.0
    %2707 = vmatpush1.msra.mxu0 0.0
    %2708 = vmatprep.subr.mxu0 0.0
    %2709 = vmatpush1.msra.mxu0 0.0
    %2710 = vmatprep.subr.mxu0 0.0
    %2711 = vmatpush1.msra.mxu0 0.0
    %2712 = vmatprep.subr.mxu0 0.0
    %2713 = vmatpush1.msra.mxu0 0.0
    %2714 = vmatprep.subr.mxu0 0.0
    %2715 = vmatpush1.msra.mxu0 0.0
    %2716 = vmatprep.subr.mxu0 0.0
    %2717 = vmatpush1.msra.mxu0 0.0
    %2718 = vmatprep.subr.mxu0 0.0
    %2719 = vmatpush1.msra.mxu0 0.0
    %2720 = vmatprep.subr.mxu0 0.0
    %2721 = vmatpush1.msra.mxu0 0.0
    %2722 = vmatprep.subr.mxu0 0.0
    %2723 = vmatpush1.msra.mxu0 0.0
    %2724 = vmatprep.subr.mxu0 0.0
    %2725 = vmatpush1.msra.mxu0 0.0
    %2726 = vmatprep.subr.mxu0 0.0
    %2727 = vmatpush1.msra.mxu0 0.0
    %2728 = vmatprep.subr.mxu0 0.0
    %2729 = vmatpush1.msra.mxu0 0.0
    %2730 = vmatprep.subr.mxu0 0.0
    %2731 = vmatpush1.msra.mxu0 0.0
    %2732 = vmatprep.subr.mxu0 0.0
    %2733 = vmatpush1.msra.mxu0 0.0
    %2734 = vmatprep.subr.mxu0 0.0
    %2735 = vmatpush1.msra.mxu0 0.0
    %2736 = vmatprep.subr.mxu0 0.0
    %2737 = vmatpush1.msra.mxu0 0.0
    %2738 = vmatprep.subr.mxu0 0.0
    %2739 = vmatpush1.msra.mxu0 0.0
    %2740 = vmatprep.subr.mxu0 0.0
    %2741 = vmatpush1.msra.mxu0 0.0
    %2742 = vmatprep.mubr.f32.mxu0 0.0
    %2743 = vmatmul.mubr.f32.gmra.mrb[0].mxu0 %v2667
    %v2744 = vpop.f32.mrb[0].mxu0
    %v2745 = vadd.f32 0.0, %v2744
    %v2746 = vpop.f32.mrb[0].mxu0
    %2747 = vmatprep.mubr.f32.mxu0 0.0
    %2748 = vmatmul.mubr.f32.gmra.mrb[0].mxu0 %v2670
    %v2749 = vpop.f32.mrb[0].mxu0
    %v2750 = vadd.f32 0.0, %v2749
    %v2751 = vpop.f32.mrb[0].mxu0
    %2752 = vmatprep.mubr.f32.mxu0 0.0
    %2753 = vmatmul.mubr.f32.gmra.mrb[0].mxu0 %v2673
    %v2754 = vpop.f32.mrb[0].mxu0
    %v2755 = vadd.f32 0.0, %v2754
    %v2756 = vpop.f32.mrb[0].mxu0
    %2757 = vmatprep.mubr.f32.mxu0 0.0
    %2758 = vmatmul.mubr.f32.gmra.mrb[0].mxu0 %v2676
    %v2759 = vpop.f32.mrb[0].mxu0
    %v2760 = vadd.f32 0.0, %v2759
    %v2761 = vpop.f32.mrb[0].mxu0
    %2762 = vdwg.mxu0
    %v2763 = vadd.f32 %v2430, %v2745
    %v2764 = vadd.f32 %v2431, %v2750
    %v2765 = vadd.f32 %v2432, %v2755
    %v2766 = vadd.f32 %v2433, %v2760
    %s2767 = scalar_lea.vmem [#allocation2], 1
    %v2768 = vld [vmem:[%s2767] sm:$0x1]
    %s2769 = scalar_lea.vmem [#allocation4], 1
    %v2770 = vld [vmem:[%s2769] sm:$0x1]
    %v2771 = vsel %vm238, %v2763, 0.0
    %2772 = vadd.xlane.f32.xlu0 %v2771
    %v2773 = vpop.xlane.xlu0 %2772
    %v2774 = vsel %vm238, %v2764, 0.0
    %2775 = vadd.xlane.f32.xlu0 %v2774
    %v2776 = vpop.xlane.xlu0 %2775
    %v2777 = vsel %vm238, %v2765, 0.0
    %2778 = vadd.xlane.f32.xlu0 %v2777
    %v2779 = vpop.xlane.xlu0 %2778
    %v2780 = vsel %vm238, %v2766, 0.0
    %2781 = vadd.xlane.f32.xlu0 %v2780
    %v2782 = vpop.xlane.xlu0 %2781
    %v2783 = vmul.f32 %v2773, %v251
    %v2784 = vmul.f32 %v2776, %v251
    %v2785 = vmul.f32 %v2779, %v251
    %v2786 = vmul.f32 %v2782, %v251
    %v2787 = vsub.f32 %v2763, %v2783
    %v2788 = vsub.f32 %v2764, %v2784
    %v2789 = vsub.f32 %v2765, %v2785
    %v2790 = vsub.f32 %v2766, %v2786
    %v2791 = vmul.f32 %v2787, %v2787
    %v2792 = vmul.f32 %v2788, %v2788
    %v2793 = vmul.f32 %v2789, %v2789
    %v2794 = vmul.f32 %v2790, %v2790
    %v2795 = vsel %vm238, %v2791, 0.0
    %2796 = vadd.xlane.f32.xlu0 %v2795
    %v2797 = vpop.xlane.xlu0 %2796
    %v2798 = vsel %vm238, %v2792, 0.0
    %2799 = vadd.xlane.f32.xlu0 %v2798
    %v2800 = vpop.xlane.xlu0 %2799
    %v2801 = vsel %vm238, %v2793, 0.0
    %2802 = vadd.xlane.f32.xlu0 %v2801
    %v2803 = vpop.xlane.xlu0 %2802
    %v2804 = vsel %vm238, %v2794, 0.0
    %2805 = vadd.xlane.f32.xlu0 %v2804
    %v2806 = vpop.xlane.xlu0 %2805
    %v2807 = vmul.f32 %v2797, %v251
    %v2808 = vmul.f32 %v2800, %v251
    %v2809 = vmul.f32 %v2803, %v251
    %v2810 = vmul.f32 %v2806, %v251
    %v2811 = vadd.f32 %v2807, 1e-05
    %v2812 = vadd.f32 %v2808, 1e-05
    %v2813 = vadd.f32 %v2809, 1e-05
    %v2814 = vadd.f32 %v2810, 1e-05
    %v2815 = vrsqrt.pop %v2811
    %v2816 = vrsqrt.pop %v2812
    %v2817 = vrsqrt.pop %v2813
    %v2818 = vrsqrt.pop %v2814
    %v2819 = vmul.f32 %v2787, %v2815
    %v2820 = vmul.f32 %v2788, %v2816
    %v2821 = vmul.f32 %v2789, %v2817
    %v2822 = vmul.f32 %v2790, %v2818
    %v2824 = vlaneseq
    %v2825 = vshrl.u32 %v2824, 7
    %v2826 = vsub.s32 0, %v2825
    %v2827 = vrot.slane %v2768, %v2826
    %v2829 = vmul.f32 %v2819, %v2827
    %v2830 = vmul.f32 %v2820, %v2827
    %v2831 = vmul.f32 %v2821, %v2827
    %v2832 = vmul.f32 %v2822, %v2827
    %v2834 = vlaneseq
    %v2835 = vshrl.u32 %v2834, 7
    %v2836 = vsub.s32 0, %v2835
    %v2837 = vrot.slane %v2770, %v2836
    %v2839 = vadd.f32 %v2829, %v2837
    %v2840 = vadd.f32 %v2830, %v2837
    %v2841 = vadd.f32 %v2831, %v2837
    %v2842 = vadd.f32 %v2832, %v2837
    %s2843 = scalar_lea.vmem %s5, 32
    %v2844 = vld [vmem:[%s2843] sm:$0xff]
    %v2845 = vld [vmem:[%s2843 + $0x8] sm:$0xff]
    %v2846 = vld [vmem:[%s2843 + $0x10] sm:$0xff]
    %v2847 = vld [vmem:[%s2843 + $0x18] sm:$0xff]
    %v2849 = vsel %vm238, %v2839, 0
    %v2852 = vsel %vm238, %v2840, 0
    %v2855 = vsel %vm238, %v2841, 0
    %v2858 = vsel %vm238, %v2842, 0
    %2860 = vmatprep.subr.mxu0 0.0
    %2861 = vmatpush1.msra.mxu0 %v2844
    %2862 = vmatprep.subr.mxu0 0.0
    %2863 = vmatpush1.msra.mxu0 %v2845
    %2864 = vmatprep.subr.mxu0 0.0
    %2865 = vmatpush1.msra.mxu0 %v2846
    %2866 = vmatprep.subr.mxu0 0.0
    %2867 = vmatpush1.msra.mxu0 %v2847
    %2868 = vmatprep.subr.mxu0 0.0
    %2869 = vmatpush1.msra.mxu0 0.0
    %2870 = vmatprep.subr.mxu0 0.0
    %2871 = vmatpush1.msra.mxu0 0.0
    %2872 = vmatprep.subr.mxu0 0.0
    %2873 = vmatpush1.msra.mxu0 0.0
    %2874 = vmatprep.subr.mxu0 0.0
    %2875 = vmatpush1.msra.mxu0 0.0
    %2876 = vmatprep.subr.mxu0 0.0
    %2877 = vmatpush1.msra.mxu0 0.0
    %2878 = vmatprep.subr.mxu0 0.0
    %2879 = vmatpush1.msra.mxu0 0.0
    %2880 = vmatprep.subr.mxu0 0.0
    %2881 = vmatpush1.msra.mxu0 0.0
    %2882 = vmatprep.subr.mxu0 0.0
    %2883 = vmatpush1.msra.mxu0 0.0
    %2884 = vmatprep.subr.mxu0 0.0
    %2885 = vmatpush1.msra.mxu0 0.0
    %2886 = vmatprep.subr.mxu0 0.0
    %2887 = vmatpush1.msra.mxu0 0.0
    %2888 = vmatprep.subr.mxu0 0.0
    %2889 = vmatpush1.msra.mxu0 0.0
    %2890 = vmatprep.subr.mxu0 0.0
    %2891 = vmatpush1.msra.mxu0 0.0
    %2892 = vmatprep.subr.mxu0 0.0
    %2893 = vmatpush1.msra.mxu0 0.0
    %2894 = vmatprep.subr.mxu0 0.0
    %2895 = vmatpush1.msra.mxu0 0.0
    %2896 = vmatprep.subr.mxu0 0.0
    %2897 = vmatpush1.msra.mxu0 0.0
    %2898 = vmatprep.subr.mxu0 0.0
    %2899 = vmatpush1.msra.mxu0 0.0
    %2900 = vmatprep.subr.mxu0 0.0
    %2901 = vmatpush1.msra.mxu0 0.0
    %2902 = vmatprep.subr.mxu0 0.0
    %2903 = vmatpush1.msra.mxu0 0.0
    %2904 = vmatprep.subr.mxu0 0.0
    %2905 = vmatpush1.msra.mxu0 0.0
    %2906 = vmatprep.subr.mxu0 0.0
    %2907 = vmatpush1.msra.mxu0 0.0
    %2908 = vmatprep.subr.mxu0 0.0
    %2909 = vmatpush1.msra.mxu0 0.0
    %2910 = vmatprep.subr.mxu0 0.0
    %2911 = vmatpush1.msra.mxu0 0.0
    %2912 = vmatprep.subr.mxu0 0.0
    %2913 = vmatpush1.msra.mxu0 0.0
    %2914 = vmatprep.subr.mxu0 0.0
    %2915 = vmatpush1.msra.mxu0 0.0
    %2916 = vmatprep.subr.mxu0 0.0
    %2917 = vmatpush1.msra.mxu0 0.0
    %2918 = vmatprep.subr.mxu0 0.0
    %2919 = vmatpush1.msra.mxu0 0.0
    %2920 = vmatprep.subr.mxu0 0.0
    %2921 = vmatpush1.msra.mxu0 0.0
    %2922 = vmatprep.subr.mxu0 0.0
    %2923 = vmatpush1.msra.mxu0 0.0
    %2924 = vmatprep.mubr.f32.mxu0 0.0
    %2925 = vmatmul.mubr.f32.gmra.mrb[0].mxu0 %v2849
    %v2926 = vpop.f32.mrb[0].mxu0
    %v2927 = vadd.f32 0.0, %v2926
    %v2928 = vpop.f32.mrb[0].mxu0
    %2929 = vmatprep.mubr.f32.mxu0 0.0
    %2930 = vmatmul.mubr.f32.gmra.mrb[0].mxu0 %v2852
    %v2931 = vpop.f32.mrb[0].mxu0
    %v2932 = vadd.f32 0.0, %v2931
    %v2933 = vpop.f32.mrb[0].mxu0
    %2934 = vmatprep.mubr.f32.mxu0 0.0
    %2935 = vmatmul.mubr.f32.gmra.mrb[0].mxu0 %v2855
    %v2936 = vpop.f32.mrb[0].mxu0
    %v2937 = vadd.f32 0.0, %v2936
    %v2938 = vpop.f32.mrb[0].mxu0
    %2939 = vmatprep.mubr.f32.mxu0 0.0
    %2940 = vmatmul.mubr.f32.gmra.mrb[0].mxu0 %v2858
    %v2941 = vpop.f32.mrb[0].mxu0
    %v2942 = vadd.f32 0.0, %v2941
    %v2943 = vpop.f32.mrb[0].mxu0
    %2944 = vdwg.mxu0
    %s2945 = scalar_lea.vmem %s6, 32
    %v2946 = vld [vmem:[%s2945] sm:$0xff]
    %v2947 = vld [vmem:[%s2945 + $0x8] sm:$0xff]
    %v2948 = vld [vmem:[%s2945 + $0x10] sm:$0xff]
    %v2949 = vld [vmem:[%s2945 + $0x18] sm:$0xff]
    %2952 = vrot.lane.b32.xlu0 %v2927, 96
    %v2953 = vpop.permute.xlu0 %2952
    %2954 = vrot.lane.b32.xlu0 %v2932, 96
    %v2955 = vpop.permute.xlu0 %2954
    %v2956 = vsel %vm132, %v2927, 0
    %v2958 = vsel %vm132, %v2932, 0
    %v2960 = vsel %vm132, %v2953, 0
    %v2962 = vsel %vm132, %v2955, 0
    %2964 = vmatprep.subr.mxu0 0.0
    %2965 = vmatpush1.xpose.msra.mxu0 %v2960
    %2966 = vmatprep.subr.mxu0 0.0
    %2967 = vmatpush1.xpose.msra.mxu0 %v2962
    %2968 = vmatprep.subr.mxu0 0.0
    %2969 = vmatpush1.xpose.msra.mxu0 0.0
    %2970 = vmatprep.subr.mxu0 0.0
    %2971 = vmatpush1.xpose.msra.mxu0 0.0
    %2972 = vmatprep.subr.mxu0 0.0
    %2973 = vmatpush1.xpose.msra.mxu0 0.0
    %2974 = vmatprep.subr.mxu0 0.0
    %2975 = vmatpush1.xpose.msra.mxu0 0.0
    %2976 = vmatprep.subr.mxu0 0.0
    %2977 = vmatpush1.xpose.msra.mxu0 0.0
    %2978 = vmatprep.subr.mxu0 0.0
    %2979 = vmatpush1.xpose.msra.mxu0 0.0
    %2980 = vmatprep.subr.mxu0 0.0
    %2981 = vmatpush1.xpose.msra.mxu0 0.0
    %2982 = vmatprep.subr.mxu0 0.0
    %2983 = vmatpush1.xpose.msra.mxu0 0.0
    %2984 = vmatprep.subr.mxu0 0.0
    %2985 = vmatpush1.xpose.msra.mxu0 0.0
    %2986 = vmatprep.subr.mxu0 0.0
    %2987 = vmatpush1.xpose.msra.mxu0 0.0
    %2988 = vmatprep.subr.mxu0 0.0
    %2989 = vmatpush1.xpose.msra.mxu0 0.0
    %2990 = vmatprep.subr.mxu0 0.0
    %2991 = vmatpush1.xpose.msra.mxu0 0.0
    %2992 = vmatprep.subr.mxu0 0.0
    %2993 = vmatpush1.xpose.msra.mxu0 0.0
    %2994 = vmatprep.subr.mxu0 0.0
    %2995 = vmatpush1.xpose.msra.mxu0 0.0
    %2996 = vmatprep.subr.mxu0 0.0
    %2997 = vmatpush1.xpose.msra.mxu0 0.0
    %2998 = vmatprep.subr.mxu0 0.0
    %2999 = vmatpush1.xpose.msra.mxu0 0.0
    %3000 = vmatprep.subr.mxu0 0.0
    %3001 = vmatpush1.xpose.msra.mxu0 0.0
    %3002 = vmatprep.subr.mxu0 0.0
    %3003 = vmatpush1.xpose.msra.mxu0 0.0
    %3004 = vmatprep.subr.mxu0 0.0
    %3005 = vmatpush1.xpose.msra.mxu0 0.0
    %3006 = vmatprep.subr.mxu0 0.0
    %3007 = vmatpush1.xpose.msra.mxu0 0.0
    %3008 = vmatprep.subr.mxu0 0.0
    %3009 = vmatpush1.xpose.msra.mxu0 0.0
    %3010 = vmatprep.subr.mxu0 0.0
    %3011 = vmatpush1.xpose.msra.mxu0 0.0
    %3012 = vmatprep.subr.mxu0 0.0
    %3013 = vmatpush1.xpose.msra.mxu0 0.0
    %3014 = vmatprep.subr.mxu0 0.0
    %3015 = vmatpush1.xpose.msra.mxu0 0.0
    %3016 = vmatprep.subr.mxu0 0.0
    %3017 = vmatpush1.xpose.msra.mxu0 0.0
    %3018 = vmatprep.subr.mxu0 0.0
    %3019 = vmatpush1.xpose.msra.mxu0 0.0
    %3020 = vmatprep.subr.mxu0 0.0
    %3021 = vmatpush1.xpose.msra.mxu0 0.0
    %3022 = vmatprep.subr.mxu0 0.0
    %3023 = vmatpush1.xpose.msra.mxu0 0.0
    %3024 = vmatprep.subr.mxu0 0.0
    %3025 = vmatpush1.xpose.msra.mxu0 0.0
    %3026 = vmatprep.subr.mxu0 0.0
    %3027 = vmatpush1.xpose.msra.mxu0 0.0
    %3028 = vmatprep.mubr.f32.mxu0 0.0
    %3029 = vmatmul.mubr.f32.gmra.mrb[0].mxu0 %v2956
    %v3030 = vpop.f32.mrb[0].mxu0
    %v3031 = vadd.f32 0.0, %v3030
    %v3032 = vpop.f32.mrb[0].mxu0
    %3033 = vmatprep.mubr.f32.mxu0 0.0
    %3034 = vmatmul.mubr.f32.gmra.mrb[0].mxu0 %v2958
    %v3035 = vpop.f32.mrb[0].mxu0
    %v3036 = vadd.f32 0.0, %v3035
    %v3037 = vpop.f32.mrb[0].mxu0
    %3038 = vdwg.mxu0
    %3041 = vrot.lane.b32.xlu0 %v2937, 96
    %v3042 = vpop.permute.xlu0 %3041
    %3043 = vrot.lane.b32.xlu0 %v2942, 96
    %v3044 = vpop.permute.xlu0 %3043
    %v3045 = vsel %vm132, %v2937, 0
    %v3047 = vsel %vm132, %v2942, 0
    %v3049 = vsel %vm132, %v3042, 0
    %v3051 = vsel %vm132, %v3044, 0
    %3053 = vmatprep.subr.mxu0 0.0
    %3054 = vmatpush1.xpose.msra.mxu0 %v3049
    %3055 = vmatprep.subr.mxu0 0.0
    %3056 = vmatpush1.xpose.msra.mxu0 %v3051
    %3057 = vmatprep.subr.mxu0 0.0
    %3058 = vmatpush1.xpose.msra.mxu0 0.0
    %3059 = vmatprep.subr.mxu0 0.0
    %3060 = vmatpush1.xpose.msra.mxu0 0.0
    %3061 = vmatprep.subr.mxu0 0.0
    %3062 = vmatpush1.xpose.msra.mxu0 0.0
    %3063 = vmatprep.subr.mxu0 0.0
    %3064 = vmatpush1.xpose.msra.mxu0 0.0
    %3065 = vmatprep.subr.mxu0 0.0
    %3066 = vmatpush1.xpose.msra.mxu0 0.0
    %3067 = vmatprep.subr.mxu0 0.0
    %3068 = vmatpush1.xpose.msra.mxu0 0.0
    %3069 = vmatprep.subr.mxu0 0.0
    %3070 = vmatpush1.xpose.msra.mxu0 0.0
    %3071 = vmatprep.subr.mxu0 0.0
    %3072 = vmatpush1.xpose.msra.mxu0 0.0
    %3073 = vmatprep.subr.mxu0 0.0
    %3074 = vmatpush1.xpose.msra.mxu0 0.0
    %3075 = vmatprep.subr.mxu0 0.0
    %3076 = vmatpush1.xpose.msra.mxu0 0.0
    %3077 = vmatprep.subr.mxu0 0.0
    %3078 = vmatpush1.xpose.msra.mxu0 0.0
    %3079 = vmatprep.subr.mxu0 0.0
    %3080 = vmatpush1.xpose.msra.mxu0 0.0
    %3081 = vmatprep.subr.mxu0 0.0
    %3082 = vmatpush1.xpose.msra.mxu0 0.0
    %3083 = vmatprep.subr.mxu0 0.0
    %3084 = vmatpush1.xpose.msra.mxu0 0.0
    %3085 = vmatprep.subr.mxu0 0.0
    %3086 = vmatpush1.xpose.msra.mxu0 0.0
    %3087 = vmatprep.subr.mxu0 0.0
    %3088 = vmatpush1.xpose.msra.mxu0 0.0
    %3089 = vmatprep.subr.mxu0 0.0
    %3090 = vmatpush1.xpose.msra.mxu0 0.0
    %3091 = vmatprep.subr.mxu0 0.0
    %3092 = vmatpush1.xpose.msra.mxu0 0.0
    %3093 = vmatprep.subr.mxu0 0.0
    %3094 = vmatpush1.xpose.msra.mxu0 0.0
    %3095 = vmatprep.subr.mxu0 0.0
    %3096 = vmatpush1.xpose.msra.mxu0 0.0
    %3097 = vmatprep.subr.mxu0 0.0
    %3098 = vmatpush1.xpose.msra.mxu0 0.0
    %3099 = vmatprep.subr.mxu0 0.0
    %3100 = vmatpush1.xpose.msra.mxu0 0.0
    %3101 = vmatprep.subr.mxu0 0.0
    %3102 = vmatpush1.xpose.msra.mxu0 0.0
    %3103 = vmatprep.subr.mxu0 0.0
    %3104 = vmatpush1.xpose.msra.mxu0 0.0
    %3105 = vmatprep.subr.mxu0 0.0
    %3106 = vmatpush1.xpose.msra.mxu0 0.0
    %3107 = vmatprep.subr.mxu0 0.0
    %3108 = vmatpush1.xpose.msra.mxu0 0.0
    %3109 = vmatprep.subr.mxu0 0.0
    %3110 = vmatpush1.xpose.msra.mxu0 0.0
    %3111 = vmatprep.subr.mxu0 0.0
    %3112 = vmatpush1.xpose.msra.mxu0 0.0
    %3113 = vmatprep.subr.mxu0 0.0
    %3114 = vmatpush1.xpose.msra.mxu0 0.0
    %3115 = vmatprep.subr.mxu0 0.0
    %3116 = vmatpush1.xpose.msra.mxu0 0.0
    %3117 = vmatprep.mubr.f32.mxu0 0.0
    %3118 = vmatmul.mubr.f32.gmra.mrb[0].mxu0 %v3045
    %v3119 = vpop.f32.mrb[0].mxu0
    %v3120 = vadd.f32 0.0, %v3119
    %v3121 = vpop.f32.mrb[0].mxu0
    %3122 = vmatprep.mubr.f32.mxu0 0.0
    %3123 = vmatmul.mubr.f32.gmra.mrb[0].mxu0 %v3047
    %v3124 = vpop.f32.mrb[0].mxu0
    %v3125 = vadd.f32 0.0, %v3124
    %v3126 = vpop.f32.mrb[0].mxu0
    %3127 = vdwg.mxu0
    %v3128 = vmul.f32 %v3031, 0.35355338
    %v3129 = vmul.f32 %v3036, 0.35355338
    %v3130 = vmul.f32 %v3120, 0.35355338
    %v3131 = vmul.f32 %v3125, 0.35355338
    %v3132 = vsel %vm599, %v3128, -inf
    %3133 = vmax.xlane.f32.xlu0 %v3132
    %v3134 = vpop.xlane.xlu0 %3133
    %v3135 = vsel %vm599, %v3129, -inf
    %3136 = vmax.xlane.f32.xlu0 %v3135
    %v3137 = vpop.xlane.xlu0 %3136
    %v3138 = vsel %vm599, %v3130, -inf
    %3139 = vmax.xlane.f32.xlu0 %v3138
    %v3140 = vpop.xlane.xlu0 %3139
    %v3141 = vsel %vm599, %v3131, -inf
    %3142 = vmax.xlane.f32.xlu0 %v3141
    %v3143 = vpop.xlane.xlu0 %3142
    %v3144 = vsub.f32 %v3128, %v3134
    %v3145 = vsub.f32 %v3129, %v3137
    %v3146 = vsub.f32 %v3130, %v3140
    %v3147 = vsub.f32 %v3131, %v3143
    %v3148 = vmul.f32 %v3144, 1.442695
    %v3149 = vpow.pop %v3148
    %v3150 = vmul.f32 %v3145, 1.442695
    %v3151 = vpow.pop %v3150
    %v3152 = vmul.f32 %v3146, 1.442695
    %v3153 = vpow.pop %v3152
    %v3154 = vmul.f32 %v3147, 1.442695
    %v3155 = vpow.pop %v3154
    %v3156 = vsel %vm599, %v3149, 0.0
    %3157 = vadd.xlane.f32.xlu0 %v3156
    %v3158 = vpop.xlane.xlu0 %3157
    %v3159 = vsel %vm599, %v3151, 0.0
    %3160 = vadd.xlane.f32.xlu0 %v3159
    %v3161 = vpop.xlane.xlu0 %3160
    %v3162 = vsel %vm599, %v3153, 0.0
    %3163 = vadd.xlane.f32.xlu0 %v3162
    %v3164 = vpop.xlane.xlu0 %3163
    %v3165 = vsel %vm599, %v3155, 0.0
    %3166 = vadd.xlane.f32.xlu0 %v3165
    %v3167 = vpop.xlane.xlu0 %3166
    %v3168 = vrcp.pop %v3158
    %v3169 = vrcp.pop %v3161
    %v3170 = vrcp.pop %v3164
    %v3171 = vrcp.pop %v3167
    %v3172 = vmul.f32 %v3149, %v3168
    %v3173 = vmul.f32 %v3151, %v3169
    %v3174 = vmul.f32 %v3153, %v3170
    %v3175 = vmul.f32 %v3155, %v3171
    %3176 = vrot.lane.b32.xlu0 %v2927, 64
    %v3177 = vpop.permute.xlu0 %3176
    %3178 = vrot.lane.b32.xlu0 %v2932, 64
    %v3179 = vpop.permute.xlu0 %3178
    %v3183 = vsel %vm599, %v3172, 0
    %v3186 = vsel %vm599, %v3173, 0
    %3188 = vmatprep.subr.mxu0 0.0
    %3189 = vmatpush1.msra.mxu0 %v3177
    %3190 = vmatprep.subr.mxu0 0.0
    %3191 = vmatpush1.msra.mxu0 %v3179
    %3192 = vmatprep.subr.mxu0 0.0
    %3193 = vmatpush1.msra.mxu0 0.0
    %3194 = vmatprep.subr.mxu0 0.0
    %3195 = vmatpush1.msra.mxu0 0.0
    %3196 = vmatprep.subr.mxu0 0.0
    %3197 = vmatpush1.msra.mxu0 0.0
    %3198 = vmatprep.subr.mxu0 0.0
    %3199 = vmatpush1.msra.mxu0 0.0
    %3200 = vmatprep.subr.mxu0 0.0
    %3201 = vmatpush1.msra.mxu0 0.0
    %3202 = vmatprep.subr.mxu0 0.0
    %3203 = vmatpush1.msra.mxu0 0.0
    %3204 = vmatprep.subr.mxu0 0.0
    %3205 = vmatpush1.msra.mxu0 0.0
    %3206 = vmatprep.subr.mxu0 0.0
    %3207 = vmatpush1.msra.mxu0 0.0
    %3208 = vmatprep.subr.mxu0 0.0
    %3209 = vmatpush1.msra.mxu0 0.0
    %3210 = vmatprep.subr.mxu0 0.0
    %3211 = vmatpush1.msra.mxu0 0.0
    %3212 = vmatprep.subr.mxu0 0.0
    %3213 = vmatpush1.msra.mxu0 0.0
    %3214 = vmatprep.subr.mxu0 0.0
    %3215 = vmatpush1.msra.mxu0 0.0
    %3216 = vmatprep.subr.mxu0 0.0
    %3217 = vmatpush1.msra.mxu0 0.0
    %3218 = vmatprep.subr.mxu0 0.0
    %3219 = vmatpush1.msra.mxu0 0.0
    %3220 = vmatprep.subr.mxu0 0.0
    %3221 = vmatpush1.msra.mxu0 0.0
    %3222 = vmatprep.subr.mxu0 0.0
    %3223 = vmatpush1.msra.mxu0 0.0
    %3224 = vmatprep.subr.mxu0 0.0
    %3225 = vmatpush1.msra.mxu0 0.0
    %3226 = vmatprep.subr.mxu0 0.0
    %3227 = vmatpush1.msra.mxu0 0.0
    %3228 = vmatprep.subr.mxu0 0.0
    %3229 = vmatpush1.msra.mxu0 0.0
    %3230 = vmatprep.subr.mxu0 0.0
    %3231 = vmatpush1.msra.mxu0 0.0
    %3232 = vmatprep.subr.mxu0 0.0
    %3233 = vmatpush1.msra.mxu0 0.0
    %3234 = vmatprep.subr.mxu0 0.0
    %3235 = vmatpush1.msra.mxu0 0.0
    %3236 = vmatprep.subr.mxu0 0.0
    %3237 = vmatpush1.msra.mxu0 0.0
    %3238 = vmatprep.subr.mxu0 0.0
    %3239 = vmatpush1.msra.mxu0 0.0
    %3240 = vmatprep.subr.mxu0 0.0
    %3241 = vmatpush1.msra.mxu0 0.0
    %3242 = vmatprep.subr.mxu0 0.0
    %3243 = vmatpush1.msra.mxu0 0.0
    %3244 = vmatprep.subr.mxu0 0.0
    %3245 = vmatpush1.msra.mxu0 0.0
    %3246 = vmatprep.subr.mxu0 0.0
    %3247 = vmatpush1.msra.mxu0 0.0
    %3248 = vmatprep.subr.mxu0 0.0
    %3249 = vmatpush1.msra.mxu0 0.0
    %3250 = vmatprep.subr.mxu0 0.0
    %3251 = vmatpush1.msra.mxu0 0.0
    %3252 = vmatprep.mubr.f32.mxu0 0.0
    %3253 = vmatmul.mubr.f32.gmra.mrb[0].mxu0 %v3183
    %v3254 = vpop.f32.mrb[0].mxu0
    %v3255 = vadd.f32 0.0, %v3254
    %v3256 = vpop.f32.mrb[0].mxu0
    %3257 = vmatprep.mubr.f32.mxu0 0.0
    %3258 = vmatmul.mubr.f32.gmra.mrb[0].mxu0 %v3186
    %v3259 = vpop.f32.mrb[0].mxu0
    %v3260 = vadd.f32 0.0, %v3259
    %v3261 = vpop.f32.mrb[0].mxu0
    %3262 = vdwg.mxu0
    %3263 = vrot.lane.b32.xlu0 %v2937, 64
    %v3264 = vpop.permute.xlu0 %3263
    %3265 = vrot.lane.b32.xlu0 %v2942, 64
    %v3266 = vpop.permute.xlu0 %3265
    %v3270 = vsel %vm599, %v3174, 0
    %v3273 = vsel %vm599, %v3175, 0
    %3275 = vmatprep.subr.mxu0 0.0
    %3276 = vmatpush1.msra.mxu0 %v3264
    %3277 = vmatprep.subr.mxu0 0.0
    %3278 = vmatpush1.msra.mxu0 %v3266
    %3279 = vmatprep.subr.mxu0 0.0
    %3280 = vmatpush1.msra.mxu0 0.0
    %3281 = vmatprep.subr.mxu0 0.0
    %3282 = vmatpush1.msra.mxu0 0.0
    %3283 = vmatprep.subr.mxu0 0.0
    %3284 = vmatpush1.msra.mxu0 0.0
    %3285 = vmatprep.subr.mxu0 0.0
    %3286 = vmatpush1.msra.mxu0 0.0
    %3287 = vmatprep.subr.mxu0 0.0
    %3288 = vmatpush1.msra.mxu0 0.0
    %3289 = vmatprep.subr.mxu0 0.0
    %3290 = vmatpush1.msra.mxu0 0.0
    %3291 = vmatprep.subr.mxu0 0.0
    %3292 = vmatpush1.msra.mxu0 0.0
    %3293 = vmatprep.subr.mxu0 0.0
    %3294 = vmatpush1.msra.mxu0 0.0
    %3295 = vmatprep.subr.mxu0 0.0
    %3296 = vmatpush1.msra.mxu0 0.0
    %3297 = vmatprep.subr.mxu0 0.0
    %3298 = vmatpush1.msra.mxu0 0.0
    %3299 = vmatprep.subr.mxu0 0.0
    %3300 = vmatpush1.msra.mxu0 0.0
    %3301 = vmatprep.subr.mxu0 0.0
    %3302 = vmatpush1.msra.mxu0 0.0
    %3303 = vmatprep.subr.mxu0 0.0
    %3304 = vmatpush1.msra.mxu0 0.0
    %3305 = vmatprep.subr.mxu0 0.0
    %3306 = vmatpush1.msra.mxu0 0.0
    %3307 = vmatprep.subr.mxu0 0.0
    %3308 = vmatpush1.msra.mxu0 0.0
    %3309 = vmatprep.subr.mxu0 0.0
    %3310 = vmatpush1.msra.mxu0 0.0
    %3311 = vmatprep.subr.mxu0 0.0
    %3312 = vmatpush1.msra.mxu0 0.0
    %3313 = vmatprep.subr.mxu0 0.0
    %3314 = vmatpush1.msra.mxu0 0.0
    %3315 = vmatprep.subr.mxu0 0.0
    %3316 = vmatpush1.msra.mxu0 0.0
    %3317 = vmatprep.subr.mxu0 0.0
    %3318 = vmatpush1.msra.mxu0 0.0
    %3319 = vmatprep.subr.mxu0 0.0
    %3320 = vmatpush1.msra.mxu0 0.0
    %3321 = vmatprep.subr.mxu0 0.0
    %3322 = vmatpush1.msra.mxu0 0.0
    %3323 = vmatprep.subr.mxu0 0.0
    %3324 = vmatpush1.msra.mxu0 0.0
    %3325 = vmatprep.subr.mxu0 0.0
    %3326 = vmatpush1.msra.mxu0 0.0
    %3327 = vmatprep.subr.mxu0 0.0
    %3328 = vmatpush1.msra.mxu0 0.0
    %3329 = vmatprep.subr.mxu0 0.0
    %3330 = vmatpush1.msra.mxu0 0.0
    %3331 = vmatprep.subr.mxu0 0.0
    %3332 = vmatpush1.msra.mxu0 0.0
    %3333 = vmatprep.subr.mxu0 0.0
    %3334 = vmatpush1.msra.mxu0 0.0
    %3335 = vmatprep.subr.mxu0 0.0
    %3336 = vmatpush1.msra.mxu0 0.0
    %3337 = vmatprep.subr.mxu0 0.0
    %3338 = vmatpush1.msra.mxu0 0.0
    %3339 = vmatprep.mubr.f32.mxu0 0.0
    %3340 = vmatmul.mubr.f32.gmra.mrb[0].mxu0 %v3270
    %v3341 = vpop.f32.mrb[0].mxu0
    %v3342 = vadd.f32 0.0, %v3341
    %v3343 = vpop.f32.mrb[0].mxu0
    %3344 = vmatprep.mubr.f32.mxu0 0.0
    %3345 = vmatmul.mubr.f32.gmra.mrb[0].mxu0 %v3273
    %v3346 = vpop.f32.mrb[0].mxu0
    %v3347 = vadd.f32 0.0, %v3346
    %v3348 = vpop.f32.mrb[0].mxu0
    %3349 = vdwg.mxu0
    %v3351 = vsel %vm132, %v3255, 0
    %v3354 = vsel %vm132, %v3260, 0
    %v3357 = vsel %vm132, %v3342, 0
    %v3360 = vsel %vm132, %v3347, 0
    %3362 = vmatprep.subr.mxu0 0.0
    %3363 = vmatpush1.msra.mxu0 %v2946
    %3364 = vmatprep.subr.mxu0 0.0
    %3365 = vmatpush1.msra.mxu0 0.0
    %3366 = vmatprep.subr.mxu0 0.0
    %3367 = vmatpush1.msra.mxu0 0.0
    %3368 = vmatprep.subr.mxu0 0.0
    %3369 = vmatpush1.msra.mxu0 0.0
    %3370 = vmatprep.subr.mxu0 0.0
    %3371 = vmatpush1.msra.mxu0 0.0
    %3372 = vmatprep.subr.mxu0 0.0
    %3373 = vmatpush1.msra.mxu0 0.0
    %3374 = vmatprep.subr.mxu0 0.0
    %3375 = vmatpush1.msra.mxu0 0.0
    %3376 = vmatprep.subr.mxu0 0.0
    %3377 = vmatpush1.msra.mxu0 0.0
    %3378 = vmatprep.subr.mxu0 0.0
    %3379 = vmatpush1.msra.mxu0 0.0
    %3380 = vmatprep.subr.mxu0 0.0
    %3381 = vmatpush1.msra.mxu0 0.0
    %3382 = vmatprep.subr.mxu0 0.0
    %3383 = vmatpush1.msra.mxu0 0.0
    %3384 = vmatprep.subr.mxu0 0.0
    %3385 = vmatpush1.msra.mxu0 0.0
    %3386 = vmatprep.subr.mxu0 0.0
    %3387 = vmatpush1.msra.mxu0 0.0
    %3388 = vmatprep.subr.mxu0 0.0
    %3389 = vmatpush1.msra.mxu0 0.0
    %3390 = vmatprep.subr.mxu0 0.0
    %3391 = vmatpush1.msra.mxu0 0.0
    %3392 = vmatprep.subr.mxu0 0.0
    %3393 = vmatpush1.msra.mxu0 0.0
    %3394 = vmatprep.subr.mxu0 0.0
    %3395 = vmatpush1.msra.mxu0 0.0
    %3396 = vmatprep.subr.mxu0 0.0
    %3397 = vmatpush1.msra.mxu0 0.0
    %3398 = vmatprep.subr.mxu0 0.0
    %3399 = vmatpush1.msra.mxu0 0.0
    %3400 = vmatprep.subr.mxu0 0.0
    %3401 = vmatpush1.msra.mxu0 0.0
    %3402 = vmatprep.subr.mxu0 0.0
    %3403 = vmatpush1.msra.mxu0 0.0
    %3404 = vmatprep.subr.mxu0 0.0
    %3405 = vmatpush1.msra.mxu0 0.0
    %3406 = vmatprep.subr.mxu0 0.0
    %3407 = vmatpush1.msra.mxu0 0.0
    %3408 = vmatprep.subr.mxu0 0.0
    %3409 = vmatpush1.msra.mxu0 0.0
    %3410 = vmatprep.subr.mxu0 0.0
    %3411 = vmatpush1.msra.mxu0 0.0
    %3412 = vmatprep.subr.mxu0 0.0
    %3413 = vmatpush1.msra.mxu0 0.0
    %3414 = vmatprep.subr.mxu0 0.0
    %3415 = vmatpush1.msra.mxu0 0.0
    %3416 = vmatprep.subr.mxu0 0.0
    %3417 = vmatpush1.msra.mxu0 0.0
    %3418 = vmatprep.subr.mxu0 0.0
    %3419 = vmatpush1.msra.mxu0 0.0
    %3420 = vmatprep.subr.mxu0 0.0
    %3421 = vmatpush1.msra.mxu0 0.0
    %3422 = vmatprep.subr.mxu0 0.0
    %3423 = vmatpush1.msra.mxu0 0.0
    %3424 = vmatprep.subr.mxu0 0.0
    %3425 = vmatpush1.msra.mxu0 0.0
    %3426 = vmatprep.mubr.f32.mxu0 0.0
    %3427 = vmatmul.mubr.f32.gmra.mrb[0].mxu0 %v3351
    %v3428 = vpop.f32.mrb[0].mxu0
    %v3429 = vadd.f32 0.0, %v3428
    %v3430 = vpop.f32.mrb[0].mxu0
    %3431 = vmatprep.mubr.f32.mxu0 0.0
    %3432 = vmatmul.mubr.f32.gmra.mrb[0].mxu0 %v3354
    %v3433 = vpop.f32.mrb[0].mxu0
    %v3434 = vadd.f32 0.0, %v3433
    %v3435 = vpop.f32.mrb[0].mxu0
    %3436 = vmatprep.mubr.f32.mxu0 0.0
    %3437 = vmatmul.mubr.f32.gmra.mrb[0].mxu0 %v3357
    %v3438 = vpop.f32.mrb[0].mxu0
    %v3439 = vadd.f32 0.0, %v3438
    %v3440 = vpop.f32.mrb[0].mxu0
    %3441 = vmatprep.mubr.f32.mxu0 0.0
    %3442 = vmatmul.mubr.f32.gmra.mrb[0].mxu0 %v3360
    %v3443 = vpop.f32.mrb[0].mxu0
    %v3444 = vadd.f32 0.0, %v3443
    %v3445 = vpop.f32.mrb[0].mxu0
    %3446 = vdwg.mxu0
    %3447 = vrot.lane.b32.xlu0 %v2927, 120
    %v3448 = vpop.permute.xlu0 %3447
    %3449 = vrot.lane.b32.xlu0 %v2932, 120
    %v3450 = vpop.permute.xlu0 %3449
    %3451 = vrot.lane.b32.xlu0 %v2927, 88
    %v3452 = vpop.permute.xlu0 %3451
    %3453 = vrot.lane.b32.xlu0 %v2932, 88
    %v3454 = vpop.permute.xlu0 %3453
    %v3455 = vsel %vm132, %v3448, 0
    %v3457 = vsel %vm132, %v3450, 0
    %v3459 = vsel %vm132, %v3452, 0
    %v3461 = vsel %vm132, %v3454, 0
    %3463 = vmatprep.subr.mxu0 0.0
    %3464 = vmatpush1.xpose.msra.mxu0 %v3459
    %3465 = vmatprep.subr.mxu0 0.0
    %3466 = vmatpush1.xpose.msra.mxu0 %v3461
    %3467 = vmatprep.subr.mxu0 0.0
    %3468 = vmatpush1.xpose.msra.mxu0 0.0
    %3469 = vmatprep.subr.mxu0 0.0
    %3470 = vmatpush1.xpose.msra.mxu0 0.0
    %3471 = vmatprep.subr.mxu0 0.0
    %3472 = vmatpush1.xpose.msra.mxu0 0.0
    %3473 = vmatprep.subr.mxu0 0.0
    %3474 = vmatpush1.xpose.msra.mxu0 0.0
    %3475 = vmatprep.subr.mxu0 0.0
    %3476 = vmatpush1.xpose.msra.mxu0 0.0
    %3477 = vmatprep.subr.mxu0 0.0
    %3478 = vmatpush1.xpose.msra.mxu0 0.0
    %3479 = vmatprep.subr.mxu0 0.0
    %3480 = vmatpush1.xpose.msra.mxu0 0.0
    %3481 = vmatprep.subr.mxu0 0.0
    %3482 = vmatpush1.xpose.msra.mxu0 0.0
    %3483 = vmatprep.subr.mxu0 0.0
    %3484 = vmatpush1.xpose.msra.mxu0 0.0
    %3485 = vmatprep.subr.mxu0 0.0
    %3486 = vmatpush1.xpose.msra.mxu0 0.0
    %3487 = vmatprep.subr.mxu0 0.0
    %3488 = vmatpush1.xpose.msra.mxu0 0.0
    %3489 = vmatprep.subr.mxu0 0.0
    %3490 = vmatpush1.xpose.msra.mxu0 0.0
    %3491 = vmatprep.subr.mxu0 0.0
    %3492 = vmatpush1.xpose.msra.mxu0 0.0
    %3493 = vmatprep.subr.mxu0 0.0
    %3494 = vmatpush1.xpose.msra.mxu0 0.0
    %3495 = vmatprep.subr.mxu0 0.0
    %3496 = vmatpush1.xpose.msra.mxu0 0.0
    %3497 = vmatprep.subr.mxu0 0.0
    %3498 = vmatpush1.xpose.msra.mxu0 0.0
    %3499 = vmatprep.subr.mxu0 0.0
    %3500 = vmatpush1.xpose.msra.mxu0 0.0
    %3501 = vmatprep.subr.mxu0 0.0
    %3502 = vmatpush1.xpose.msra.mxu0 0.0
    %3503 = vmatprep.subr.mxu0 0.0
    %3504 = vmatpush1.xpose.msra.mxu0 0.0
    %3505 = vmatprep.subr.mxu0 0.0
    %3506 = vmatpush1.xpose.msra.mxu0 0.0
    %3507 = vmatprep.subr.mxu0 0.0
    %3508 = vmatpush1.xpose.msra.mxu0 0.0
    %3509 = vmatprep.subr.mxu0 0.0
    %3510 = vmatpush1.xpose.msra.mxu0 0.0
    %3511 = vmatprep.subr.mxu0 0.0
    %3512 = vmatpush1.xpose.msra.mxu0 0.0
    %3513 = vmatprep.subr.mxu0 0.0
    %3514 = vmatpush1.xpose.msra.mxu0 0.0
    %3515 = vmatprep.subr.mxu0 0.0
    %3516 = vmatpush1.xpose.msra.mxu0 0.0
    %3517 = vmatprep.subr.mxu0 0.0
    %3518 = vmatpush1.xpose.msra.mxu0 0.0
    %3519 = vmatprep.subr.mxu0 0.0
    %3520 = vmatpush1.xpose.msra.mxu0 0.0
    %3521 = vmatprep.subr.mxu0 0.0
    %3522 = vmatpush1.xpose.msra.mxu0 0.0
    %3523 = vmatprep.subr.mxu0 0.0
    %3524 = vmatpush1.xpose.msra.mxu0 0.0
    %3525 = vmatprep.subr.mxu0 0.0
    %3526 = vmatpush1.xpose.msra.mxu0 0.0
    %3527 = vmatprep.mubr.f32.mxu0 0.0
    %3528 = vmatmul.mubr.f32.gmra.mrb[0].mxu0 %v3455
    %v3529 = vpop.f32.mrb[0].mxu0
    %v3530 = vadd.f32 0.0, %v3529
    %v3531 = vpop.f32.mrb[0].mxu0
    %3532 = vmatprep.mubr.f32.mxu0 0.0
    %3533 = vmatmul.mubr.f32.gmra.mrb[0].mxu0 %v3457
    %v3534 = vpop.f32.mrb[0].mxu0
    %v3535 = vadd.f32 0.0, %v3534
    %v3536 = vpop.f32.mrb[0].mxu0
    %3537 = vdwg.mxu0
    %3538 = vrot.lane.b32.xlu0 %v2937, 120
    %v3539 = vpop.permute.xlu0 %3538
    %3540 = vrot.lane.b32.xlu0 %v2942, 120
    %v3541 = vpop.permute.xlu0 %3540
    %3542 = vrot.lane.b32.xlu0 %v2937, 88
    %v3543 = vpop.permute.xlu0 %3542
    %3544 = vrot.lane.b32.xlu0 %v2942, 88
    %v3545 = vpop.permute.xlu0 %3544
    %v3546 = vsel %vm132, %v3539, 0
    %v3548 = vsel %vm132, %v3541, 0
    %v3550 = vsel %vm132, %v3543, 0
    %v3552 = vsel %vm132, %v3545, 0
    %3554 = vmatprep.subr.mxu0 0.0
    %3555 = vmatpush1.xpose.msra.mxu0 %v3550
    %3556 = vmatprep.subr.mxu0 0.0
    %3557 = vmatpush1.xpose.msra.mxu0 %v3552
    %3558 = vmatprep.subr.mxu0 0.0
    %3559 = vmatpush1.xpose.msra.mxu0 0.0
    %3560 = vmatprep.subr.mxu0 0.0
    %3561 = vmatpush1.xpose.msra.mxu0 0.0
    %3562 = vmatprep.subr.mxu0 0.0
    %3563 = vmatpush1.xpose.msra.mxu0 0.0
    %3564 = vmatprep.subr.mxu0 0.0
    %3565 = vmatpush1.xpose.msra.mxu0 0.0
    %3566 = vmatprep.subr.mxu0 0.0
    %3567 = vmatpush1.xpose.msra.mxu0 0.0
    %3568 = vmatprep.subr.mxu0 0.0
    %3569 = vmatpush1.xpose.msra.mxu0 0.0
    %3570 = vmatprep.subr.mxu0 0.0
    %3571 = vmatpush1.xpose.msra.mxu0 0.0
    %3572 = vmatprep.subr.mxu0 0.0
    %3573 = vmatpush1.xpose.msra.mxu0 0.0
    %3574 = vmatprep.subr.mxu0 0.0
    %3575 = vmatpush1.xpose.msra.mxu0 0.0
    %3576 = vmatprep.subr.mxu0 0.0
    %3577 = vmatpush1.xpose.msra.mxu0 0.0
    %3578 = vmatprep.subr.mxu0 0.0
    %3579 = vmatpush1.xpose.msra.mxu0 0.0
    %3580 = vmatprep.subr.mxu0 0.0
    %3581 = vmatpush1.xpose.msra.mxu0 0.0
    %3582 = vmatprep.subr.mxu0 0.0
    %3583 = vmatpush1.xpose.msra.mxu0 0.0
    %3584 = vmatprep.subr.mxu0 0.0
    %3585 = vmatpush1.xpose.msra.mxu0 0.0
    %3586 = vmatprep.subr.mxu0 0.0
    %3587 = vmatpush1.xpose.msra.mxu0 0.0
    %3588 = vmatprep.subr.mxu0 0.0
    %3589 = vmatpush1.xpose.msra.mxu0 0.0
    %3590 = vmatprep.subr.mxu0 0.0
    %3591 = vmatpush1.xpose.msra.mxu0 0.0
    %3592 = vmatprep.subr.mxu0 0.0
    %3593 = vmatpush1.xpose.msra.mxu0 0.0
    %3594 = vmatprep.subr.mxu0 0.0
    %3595 = vmatpush1.xpose.msra.mxu0 0.0
    %3596 = vmatprep.subr.mxu0 0.0
    %3597 = vmatpush1.xpose.msra.mxu0 0.0
    %3598 = vmatprep.subr.mxu0 0.0
    %3599 = vmatpush1.xpose.msra.mxu0 0.0
    %3600 = vmatprep.subr.mxu0 0.0
    %3601 = vmatpush1.xpose.msra.mxu0 0.0
    %3602 = vmatprep.subr.mxu0 0.0
    %3603 = vmatpush1.xpose.msra.mxu0 0.0
    %3604 = vmatprep.subr.mxu0 0.0
    %3605 = vmatpush1.xpose.msra.mxu0 0.0
    %3606 = vmatprep.subr.mxu0 0.0
    %3607 = vmatpush1.xpose.msra.mxu0 0.0
    %3608 = vmatprep.subr.mxu0 0.0
    %3609 = vmatpush1.xpose.msra.mxu0 0.0
    %3610 = vmatprep.subr.mxu0 0.0
    %3611 = vmatpush1.xpose.msra.mxu0 0.0
    %3612 = vmatprep.subr.mxu0 0.0
    %3613 = vmatpush1.xpose.msra.mxu0 0.0
    %3614 = vmatprep.subr.mxu0 0.0
    %3615 = vmatpush1.xpose.msra.mxu0 0.0
    %3616 = vmatprep.subr.mxu0 0.0
    %3617 = vmatpush1.xpose.msra.mxu0 0.0
    %3618 = vmatprep.mubr.f32.mxu0 0.0
    %3619 = vmatmul.mubr.f32.gmra.mrb[0].mxu0 %v3546
    %v3620 = vpop.f32.mrb[0].mxu0
    %v3621 = vadd.f32 0.0, %v3620
    %v3622 = vpop.f32.mrb[0].mxu0
    %3623 = vmatprep.mubr.f32.mxu0 0.0
    %3624 = vmatmul.mubr.f32.gmra.mrb[0].mxu0 %v3548
    %v3625 = vpop.f32.mrb[0].mxu0
    %v3626 = vadd.f32 0.0, %v3625
    %v3627 = vpop.f32.mrb[0].mxu0
    %3628 = vdwg.mxu0
    %v3629 = vmul.f32 %v3530, 0.35355338
    %v3630 = vmul.f32 %v3535, 0.35355338
    %v3631 = vmul.f32 %v3621, 0.35355338
    %v3632 = vmul.f32 %v3626, 0.35355338
    %v3633 = vsel %vm599, %v3629, -inf
    %3634 = vmax.xlane.f32.xlu0 %v3633
    %v3635 = vpop.xlane.xlu0 %3634
    %v3636 = vsel %vm599, %v3630, -inf
    %3637 = vmax.xlane.f32.xlu0 %v3636
    %v3638 = vpop.xlane.xlu0 %3637
    %v3639 = vsel %vm599, %v3631, -inf
    %3640 = vmax.xlane.f32.xlu0 %v3639
    %v3641 = vpop.xlane.xlu0 %3640
    %v3642 = vsel %vm599, %v3632, -inf
    %3643 = vmax.xlane.f32.xlu0 %v3642
    %v3644 = vpop.xlane.xlu0 %3643
    %v3645 = vsub.f32 %v3629, %v3635
    %v3646 = vsub.f32 %v3630, %v3638
    %v3647 = vsub.f32 %v3631, %v3641
    %v3648 = vsub.f32 %v3632, %v3644
    %v3649 = vmul.f32 %v3645, 1.442695
    %v3650 = vpow.pop %v3649
    %v3651 = vmul.f32 %v3646, 1.442695
    %v3652 = vpow.pop %v3651
    %v3653 = vmul.f32 %v3647, 1.442695
    %v3654 = vpow.pop %v3653
    %v3655 = vmul.f32 %v3648, 1.442695
    %v3656 = vpow.pop %v3655
    %v3657 = vsel %vm599, %v3650, 0.0
    %3658 = vadd.xlane.f32.xlu0 %v3657
    %v3659 = vpop.xlane.xlu0 %3658
    %v3660 = vsel %vm599, %v3652, 0.0
    %3661 = vadd.xlane.f32.xlu0 %v3660
    %v3662 = vpop.xlane.xlu0 %3661
    %v3663 = vsel %vm599, %v3654, 0.0
    %3664 = vadd.xlane.f32.xlu0 %v3663
    %v3665 = vpop.xlane.xlu0 %3664
    %v3666 = vsel %vm599, %v3656, 0.0
    %3667 = vadd.xlane.f32.xlu0 %v3666
    %v3668 = vpop.xlane.xlu0 %3667
    %v3669 = vrcp.pop %v3659
    %v3670 = vrcp.pop %v3662
    %v3671 = vrcp.pop %v3665
    %v3672 = vrcp.pop %v3668
    %v3673 = vmul.f32 %v3650, %v3669
    %v3674 = vmul.f32 %v3652, %v3670
    %v3675 = vmul.f32 %v3654, %v3671
    %v3676 = vmul.f32 %v3656, %v3672
    %3677 = vrot.lane.b32.xlu0 %v2927, 56
    %v3678 = vpop.permute.xlu0 %3677
    %3679 = vrot.lane.b32.xlu0 %v2932, 56
    %v3680 = vpop.permute.xlu0 %3679
    %v3684 = vsel %vm599, %v3673, 0
    %v3687 = vsel %vm599, %v3674, 0
    %3689 = vmatprep.subr.mxu0 0.0
    %3690 = vmatpush1.msra.mxu0 %v3678
    %3691 = vmatprep.subr.mxu0 0.0
    %3692 = vmatpush1.msra.mxu0 %v3680
    %3693 = vmatprep.subr.mxu0 0.0
    %3694 = vmatpush1.msra.mxu0 0.0
    %3695 = vmatprep.subr.mxu0 0.0
    %3696 = vmatpush1.msra.mxu0 0.0
    %3697 = vmatprep.subr.mxu0 0.0
    %3698 = vmatpush1.msra.mxu0 0.0
    %3699 = vmatprep.subr.mxu0 0.0
    %3700 = vmatpush1.msra.mxu0 0.0
    %3701 = vmatprep.subr.mxu0 0.0
    %3702 = vmatpush1.msra.mxu0 0.0
    %3703 = vmatprep.subr.mxu0 0.0
    %3704 = vmatpush1.msra.mxu0 0.0
    %3705 = vmatprep.subr.mxu0 0.0
    %3706 = vmatpush1.msra.mxu0 0.0
    %3707 = vmatprep.subr.mxu0 0.0
    %3708 = vmatpush1.msra.mxu0 0.0
    %3709 = vmatprep.subr.mxu0 0.0
    %3710 = vmatpush1.msra.mxu0 0.0
    %3711 = vmatprep.subr.mxu0 0.0
    %3712 = vmatpush1.msra.mxu0 0.0
    %3713 = vmatprep.subr.mxu0 0.0
    %3714 = vmatpush1.msra.mxu0 0.0
    %3715 = vmatprep.subr.mxu0 0.0
    %3716 = vmatpush1.msra.mxu0 0.0
    %3717 = vmatprep.subr.mxu0 0.0
    %3718 = vmatpush1.msra.mxu0 0.0
    %3719 = vmatprep.subr.mxu0 0.0
    %3720 = vmatpush1.msra.mxu0 0.0
    %3721 = vmatprep.subr.mxu0 0.0
    %3722 = vmatpush1.msra.mxu0 0.0
    %3723 = vmatprep.subr.mxu0 0.0
    %3724 = vmatpush1.msra.mxu0 0.0
    %3725 = vmatprep.subr.mxu0 0.0
    %3726 = vmatpush1.msra.mxu0 0.0
    %3727 = vmatprep.subr.mxu0 0.0
    %3728 = vmatpush1.msra.mxu0 0.0
    %3729 = vmatprep.subr.mxu0 0.0
    %3730 = vmatpush1.msra.mxu0 0.0
    %3731 = vmatprep.subr.mxu0 0.0
    %3732 = vmatpush1.msra.mxu0 0.0
    %3733 = vmatprep.subr.mxu0 0.0
    %3734 = vmatpush1.msra.mxu0 0.0
    %3735 = vmatprep.subr.mxu0 0.0
    %3736 = vmatpush1.msra.mxu0 0.0
    %3737 = vmatprep.subr.mxu0 0.0
    %3738 = vmatpush1.msra.mxu0 0.0
    %3739 = vmatprep.subr.mxu0 0.0
    %3740 = vmatpush1.msra.mxu0 0.0
    %3741 = vmatprep.subr.mxu0 0.0
    %3742 = vmatpush1.msra.mxu0 0.0
    %3743 = vmatprep.subr.mxu0 0.0
    %3744 = vmatpush1.msra.mxu0 0.0
    %3745 = vmatprep.subr.mxu0 0.0
    %3746 = vmatpush1.msra.mxu0 0.0
    %3747 = vmatprep.subr.mxu0 0.0
    %3748 = vmatpush1.msra.mxu0 0.0
    %3749 = vmatprep.subr.mxu0 0.0
    %3750 = vmatpush1.msra.mxu0 0.0
    %3751 = vmatprep.subr.mxu0 0.0
    %3752 = vmatpush1.msra.mxu0 0.0
    %3753 = vmatprep.mubr.f32.mxu0 0.0
    %3754 = vmatmul.mubr.f32.gmra.mrb[0].mxu0 %v3684
    %v3755 = vpop.f32.mrb[0].mxu0
    %v3756 = vadd.f32 0.0, %v3755
    %v3757 = vpop.f32.mrb[0].mxu0
    %3758 = vmatprep.mubr.f32.mxu0 0.0
    %3759 = vmatmul.mubr.f32.gmra.mrb[0].mxu0 %v3687
    %v3760 = vpop.f32.mrb[0].mxu0
    %v3761 = vadd.f32 0.0, %v3760
    %v3762 = vpop.f32.mrb[0].mxu0
    %3763 = vdwg.mxu0
    %3764 = vrot.lane.b32.xlu0 %v2937, 56
    %v3765 = vpop.permute.xlu0 %3764
    %3766 = vrot.lane.b32.xlu0 %v2942, 56
    %v3767 = vpop.permute.xlu0 %3766
    %v3771 = vsel %vm599, %v3675, 0
    %v3774 = vsel %vm599, %v3676, 0
    %3776 = vmatprep.subr.mxu0 0.0
    %3777 = vmatpush1.msra.mxu0 %v3765
    %3778 = vmatprep.subr.mxu0 0.0
    %3779 = vmatpush1.msra.mxu0 %v3767
    %3780 = vmatprep.subr.mxu0 0.0
    %3781 = vmatpush1.msra.mxu0 0.0
    %3782 = vmatprep.subr.mxu0 0.0
    %3783 = vmatpush1.msra.mxu0 0.0
    %3784 = vmatprep.subr.mxu0 0.0
    %3785 = vmatpush1.msra.mxu0 0.0
    %3786 = vmatprep.subr.mxu0 0.0
    %3787 = vmatpush1.msra.mxu0 0.0
    %3788 = vmatprep.subr.mxu0 0.0
    %3789 = vmatpush1.msra.mxu0 0.0
    %3790 = vmatprep.subr.mxu0 0.0
    %3791 = vmatpush1.msra.mxu0 0.0
    %3792 = vmatprep.subr.mxu0 0.0
    %3793 = vmatpush1.msra.mxu0 0.0
    %3794 = vmatprep.subr.mxu0 0.0
    %3795 = vmatpush1.msra.mxu0 0.0
    %3796 = vmatprep.subr.mxu0 0.0
    %3797 = vmatpush1.msra.mxu0 0.0
    %3798 = vmatprep.subr.mxu0 0.0
    %3799 = vmatpush1.msra.mxu0 0.0
    %3800 = vmatprep.subr.mxu0 0.0
    %3801 = vmatpush1.msra.mxu0 0.0
    %3802 = vmatprep.subr.mxu0 0.0
    %3803 = vmatpush1.msra.mxu0 0.0
    %3804 = vmatprep.subr.mxu0 0.0
    %3805 = vmatpush1.msra.mxu0 0.0
    %3806 = vmatprep.subr.mxu0 0.0
    %3807 = vmatpush1.msra.mxu0 0.0
    %3808 = vmatprep.subr.mxu0 0.0
    %3809 = vmatpush1.msra.mxu0 0.0
    %3810 = vmatprep.subr.mxu0 0.0
    %3811 = vmatpush1.msra.mxu0 0.0
    %3812 = vmatprep.subr.mxu0 0.0
    %3813 = vmatpush1.msra.mxu0 0.0
    %3814 = vmatprep.subr.mxu0 0.0
    %3815 = vmatpush1.msra.mxu0 0.0
    %3816 = vmatprep.subr.mxu0 0.0
    %3817 = vmatpush1.msra.mxu0 0.0
    %3818 = vmatprep.subr.mxu0 0.0
    %3819 = vmatpush1.msra.mxu0 0.0
    %3820 = vmatprep.subr.mxu0 0.0
    %3821 = vmatpush1.msra.mxu0 0.0
    %3822 = vmatprep.subr.mxu0 0.0
    %3823 = vmatpush1.msra.mxu0 0.0
    %3824 = vmatprep.subr.mxu0 0.0
    %3825 = vmatpush1.msra.mxu0 0.0
    %3826 = vmatprep.subr.mxu0 0.0
    %3827 = vmatpush1.msra.mxu0 0.0
    %3828 = vmatprep.subr.mxu0 0.0
    %3829 = vmatpush1.msra.mxu0 0.0
    %3830 = vmatprep.subr.mxu0 0.0
    %3831 = vmatpush1.msra.mxu0 0.0
    %3832 = vmatprep.subr.mxu0 0.0
    %3833 = vmatpush1.msra.mxu0 0.0
    %3834 = vmatprep.subr.mxu0 0.0
    %3835 = vmatpush1.msra.mxu0 0.0
    %3836 = vmatprep.subr.mxu0 0.0
    %3837 = vmatpush1.msra.mxu0 0.0
    %3838 = vmatprep.subr.mxu0 0.0
    %3839 = vmatpush1.msra.mxu0 0.0
    %3840 = vmatprep.mubr.f32.mxu0 0.0
    %3841 = vmatmul.mubr.f32.gmra.mrb[0].mxu0 %v3771
    %v3842 = vpop.f32.mrb[0].mxu0
    %v3843 = vadd.f32 0.0, %v3842
    %v3844 = vpop.f32.mrb[0].mxu0
    %3845 = vmatprep.mubr.f32.mxu0 0.0
    %3846 = vmatmul.mubr.f32.gmra.mrb[0].mxu0 %v3774
    %v3847 = vpop.f32.mrb[0].mxu0
    %v3848 = vadd.f32 0.0, %v3847
    %v3849 = vpop.f32.mrb[0].mxu0
    %3850 = vdwg.mxu0
    %v3852 = vsel %vm132, %v3756, 0
    %v3855 = vsel %vm132, %v3761, 0
    %v3858 = vsel %vm132, %v3843, 0
    %v3861 = vsel %vm132, %v3848, 0
    %3863 = vmatprep.subr.mxu0 0.0
    %3864 = vmatpush1.msra.mxu0 %v2947
    %3865 = vmatprep.subr.mxu0 0.0
    %3866 = vmatpush1.msra.mxu0 0.0
    %3867 = vmatprep.subr.mxu0 0.0
    %3868 = vmatpush1.msra.mxu0 0.0
    %3869 = vmatprep.subr.mxu0 0.0
    %3870 = vmatpush1.msra.mxu0 0.0
    %3871 = vmatprep.subr.mxu0 0.0
    %3872 = vmatpush1.msra.mxu0 0.0
    %3873 = vmatprep.subr.mxu0 0.0
    %3874 = vmatpush1.msra.mxu0 0.0
    %3875 = vmatprep.subr.mxu0 0.0
    %3876 = vmatpush1.msra.mxu0 0.0
    %3877 = vmatprep.subr.mxu0 0.0
    %3878 = vmatpush1.msra.mxu0 0.0
    %3879 = vmatprep.subr.mxu0 0.0
    %3880 = vmatpush1.msra.mxu0 0.0
    %3881 = vmatprep.subr.mxu0 0.0
    %3882 = vmatpush1.msra.mxu0 0.0
    %3883 = vmatprep.subr.mxu0 0.0
    %3884 = vmatpush1.msra.mxu0 0.0
    %3885 = vmatprep.subr.mxu0 0.0
    %3886 = vmatpush1.msra.mxu0 0.0
    %3887 = vmatprep.subr.mxu0 0.0
    %3888 = vmatpush1.msra.mxu0 0.0
    %3889 = vmatprep.subr.mxu0 0.0
    %3890 = vmatpush1.msra.mxu0 0.0
    %3891 = vmatprep.subr.mxu0 0.0
    %3892 = vmatpush1.msra.mxu0 0.0
    %3893 = vmatprep.subr.mxu0 0.0
    %3894 = vmatpush1.msra.mxu0 0.0
    %3895 = vmatprep.subr.mxu0 0.0
    %3896 = vmatpush1.msra.mxu0 0.0
    %3897 = vmatprep.subr.mxu0 0.0
    %3898 = vmatpush1.msra.mxu0 0.0
    %3899 = vmatprep.subr.mxu0 0.0
    %3900 = vmatpush1.msra.mxu0 0.0
    %3901 = vmatprep.subr.mxu0 0.0
    %3902 = vmatpush1.msra.mxu0 0.0
    %3903 = vmatprep.subr.mxu0 0.0
    %3904 = vmatpush1.msra.mxu0 0.0
    %3905 = vmatprep.subr.mxu0 0.0
    %3906 = vmatpush1.msra.mxu0 0.0
    %3907 = vmatprep.subr.mxu0 0.0
    %3908 = vmatpush1.msra.mxu0 0.0
    %3909 = vmatprep.subr.mxu0 0.0
    %3910 = vmatpush1.msra.mxu0 0.0
    %3911 = vmatprep.subr.mxu0 0.0
    %3912 = vmatpush1.msra.mxu0 0.0
    %3913 = vmatprep.subr.mxu0 0.0
    %3914 = vmatpush1.msra.mxu0 0.0
    %3915 = vmatprep.subr.mxu0 0.0
    %3916 = vmatpush1.msra.mxu0 0.0
    %3917 = vmatprep.subr.mxu0 0.0
    %3918 = vmatpush1.msra.mxu0 0.0
    %3919 = vmatprep.subr.mxu0 0.0
    %3920 = vmatpush1.msra.mxu0 0.0
    %3921 = vmatprep.subr.mxu0 0.0
    %3922 = vmatpush1.msra.mxu0 0.0
    %3923 = vmatprep.subr.mxu0 0.0
    %3924 = vmatpush1.msra.mxu0 0.0
    %3925 = vmatprep.subr.mxu0 0.0
    %3926 = vmatpush1.msra.mxu0 0.0
    %3927 = vmatprep.mubr.f32.mxu0 0.0
    %3928 = vmatmul.mubr.f32.gmra.mrb[0].mxu0 %v3852
    %v3929 = vpop.f32.mrb[0].mxu0
    %v3930 = vadd.f32 0.0, %v3929
    %v3931 = vpop.f32.mrb[0].mxu0
    %3932 = vmatprep.mubr.f32.mxu0 0.0
    %3933 = vmatmul.mubr.f32.gmra.mrb[0].mxu0 %v3855
    %v3934 = vpop.f32.mrb[0].mxu0
    %v3935 = vadd.f32 0.0, %v3934
    %v3936 = vpop.f32.mrb[0].mxu0
    %3937 = vmatprep.mubr.f32.mxu0 0.0
    %3938 = vmatmul.mubr.f32.gmra.mrb[0].mxu0 %v3858
    %v3939 = vpop.f32.mrb[0].mxu0
    %v3940 = vadd.f32 0.0, %v3939
    %v3941 = vpop.f32.mrb[0].mxu0
    %3942 = vmatprep.mubr.f32.mxu0 0.0
    %3943 = vmatmul.mubr.f32.gmra.mrb[0].mxu0 %v3861
    %v3944 = vpop.f32.mrb[0].mxu0
    %v3945 = vadd.f32 0.0, %v3944
    %v3946 = vpop.f32.mrb[0].mxu0
    %3947 = vdwg.mxu0
    %v3948 = vadd.f32 %v3429, %v3930
    %v3949 = vadd.f32 %v3434, %v3935
    %v3950 = vadd.f32 %v3439, %v3940
    %v3951 = vadd.f32 %v3444, %v3945
    %3952 = vrot.lane.b32.xlu0 %v2927, 112
    %v3953 = vpop.permute.xlu0 %3952
    %3954 = vrot.lane.b32.xlu0 %v2932, 112
    %v3955 = vpop.permute.xlu0 %3954
    %3956 = vrot.lane.b32.xlu0 %v2927, 80
    %v3957 = vpop.permute.xlu0 %3956
    %3958 = vrot.lane.b32.xlu0 %v2932, 80
    %v3959 = vpop.permute.xlu0 %3958
    %v3960 = vsel %vm132, %v3953, 0
    %v3962 = vsel %vm132, %v3955, 0
    %v3964 = vsel %vm132, %v3957, 0
    %v3966 = vsel %vm132, %v3959, 0
    %3968 = vmatprep.subr.mxu0 0.0
    %3969 = vmatpush1.xpose.msra.mxu0 %v3964
    %3970 = vmatprep.subr.mxu0 0.0
    %3971 = vmatpush1.xpose.msra.mxu0 %v3966
    %3972 = vmatprep.subr.mxu0 0.0
    %3973 = vmatpush1.xpose.msra.mxu0 0.0
    %3974 = vmatprep.subr.mxu0 0.0
    %3975 = vmatpush1.xpose.msra.mxu0 0.0
    %3976 = vmatprep.subr.mxu0 0.0
    %3977 = vmatpush1.xpose.msra.mxu0 0.0
    %3978 = vmatprep.subr.mxu0 0.0
    %3979 = vmatpush1.xpose.msra.mxu0 0.0
    %3980 = vmatprep.subr.mxu0 0.0
    %3981 = vmatpush1.xpose.msra.mxu0 0.0
    %3982 = vmatprep.subr.mxu0 0.0
    %3983 = vmatpush1.xpose.msra.mxu0 0.0
    %3984 = vmatprep.subr.mxu0 0.0
    %3985 = vmatpush1.xpose.msra.mxu0 0.0
    %3986 = vmatprep.subr.mxu0 0.0
    %3987 = vmatpush1.xpose.msra.mxu0 0.0
    %3988 = vmatprep.subr.mxu0 0.0
    %3989 = vmatpush1.xpose.msra.mxu0 0.0
    %3990 = vmatprep.subr.mxu0 0.0
    %3991 = vmatpush1.xpose.msra.mxu0 0.0
    %3992 = vmatprep.subr.mxu0 0.0
    %3993 = vmatpush1.xpose.msra.mxu0 0.0
    %3994 = vmatprep.subr.mxu0 0.0
    %3995 = vmatpush1.xpose.msra.mxu0 0.0
    %3996 = vmatprep.subr.mxu0 0.0
    %3997 = vmatpush1.xpose.msra.mxu0 0.0
    %3998 = vmatprep.subr.mxu0 0.0
    %3999 = vmatpush1.xpose.msra.mxu0 0.0
    %4000 = vmatprep.subr.mxu0 0.0
    %4001 = vmatpush1.xpose.msra.mxu0 0.0
    %4002 = vmatprep.subr.mxu0 0.0
    %4003 = vmatpush1.xpose.msra.mxu0 0.0
    %4004 = vmatprep.subr.mxu0 0.0
    %4005 = vmatpush1.xpose.msra.mxu0 0.0
    %4006 = vmatprep.subr.mxu0 0.0
    %4007 = vmatpush1.xpose.msra.mxu0 0.0
    %4008 = vmatprep.subr.mxu0 0.0
    %4009 = vmatpush1.xpose.msra.mxu0 0.0
    %4010 = vmatprep.subr.mxu0 0.0
    %4011 = vmatpush1.xpose.msra.mxu0 0.0
    %4012 = vmatprep.subr.mxu0 0.0
    %4013 = vmatpush1.xpose.msra.mxu0 0.0
    %4014 = vmatprep.subr.mxu0 0.0
    %4015 = vmatpush1.xpose.msra.mxu0 0.0
    %4016 = vmatprep.subr.mxu0 0.0
    %4017 = vmatpush1.xpose.msra.mxu0 0.0
    %4018 = vmatprep.subr.mxu0 0.0
    %4019 = vmatpush1.xpose.msra.mxu0 0.0
    %4020 = vmatprep.subr.mxu0 0.0
    %4021 = vmatpush1.xpose.msra.mxu0 0.0
    %4022 = vmatprep.subr.mxu0 0.0
    %4023 = vmatpush1.xpose.msra.mxu0 0.0
    %4024 = vmatprep.subr.mxu0 0.0
    %4025 = vmatpush1.xpose.msra.mxu0 0.0
    %4026 = vmatprep.subr.mxu0 0.0
    %4027 = vmatpush1.xpose.msra.mxu0 0.0
    %4028 = vmatprep.subr.mxu0 0.0
    %4029 = vmatpush1.xpose.msra.mxu0 0.0
    %4030 = vmatprep.subr.mxu0 0.0
    %4031 = vmatpush1.xpose.msra.mxu0 0.0
    %4032 = vmatprep.mubr.f32.mxu0 0.0
    %4033 = vmatmul.mubr.f32.gmra.mrb[0].mxu0 %v3960
    %v4034 = vpop.f32.mrb[0].mxu0
    %v4035 = vadd.f32 0.0, %v4034
    %v4036 = vpop.f32.mrb[0].mxu0
    %4037 = vmatprep.mubr.f32.mxu0 0.0
    %4038 = vmatmul.mubr.f32.gmra.mrb[0].mxu0 %v3962
    %v4039 = vpop.f32.mrb[0].mxu0
    %v4040 = vadd.f32 0.0, %v4039
    %v4041 = vpop.f32.mrb[0].mxu0
    %4042 = vdwg.mxu0
    %4043 = vrot.lane.b32.xlu0 %v2937, 112
    %v4044 = vpop.permute.xlu0 %4043
    %4045 = vrot.lane.b32.xlu0 %v2942, 112
    %v4046 = vpop.permute.xlu0 %4045
    %4047 = vrot.lane.b32.xlu0 %v2937, 80
    %v4048 = vpop.permute.xlu0 %4047
    %4049 = vrot.lane.b32.xlu0 %v2942, 80
    %v4050 = vpop.permute.xlu0 %4049
    %v4051 = vsel %vm132, %v4044, 0
    %v4053 = vsel %vm132, %v4046, 0
    %v4055 = vsel %vm132, %v4048, 0
    %v4057 = vsel %vm132, %v4050, 0
    %4059 = vmatprep.subr.mxu0 0.0
    %4060 = vmatpush1.xpose.msra.mxu0 %v4055
    %4061 = vmatprep.subr.mxu0 0.0
    %4062 = vmatpush1.xpose.msra.mxu0 %v4057
    %4063 = vmatprep.subr.mxu0 0.0
    %4064 = vmatpush1.xpose.msra.mxu0 0.0
    %4065 = vmatprep.subr.mxu0 0.0
    %4066 = vmatpush1.xpose.msra.mxu0 0.0
    %4067 = vmatprep.subr.mxu0 0.0
    %4068 = vmatpush1.xpose.msra.mxu0 0.0
    %4069 = vmatprep.subr.mxu0 0.0
    %4070 = vmatpush1.xpose.msra.mxu0 0.0
    %4071 = vmatprep.subr.mxu0 0.0
    %4072 = vmatpush1.xpose.msra.mxu0 0.0
    %4073 = vmatprep.subr.mxu0 0.0
    %4074 = vmatpush1.xpose.msra.mxu0 0.0
    %4075 = vmatprep.subr.mxu0 0.0
    %4076 = vmatpush1.xpose.msra.mxu0 0.0
    %4077 = vmatprep.subr.mxu0 0.0
    %4078 = vmatpush1.xpose.msra.mxu0 0.0
    %4079 = vmatprep.subr.mxu0 0.0
    %4080 = vmatpush1.xpose.msra.mxu0 0.0
    %4081 = vmatprep.subr.mxu0 0.0
    %4082 = vmatpush1.xpose.msra.mxu0 0.0
    %4083 = vmatprep.subr.mxu0 0.0
    %4084 = vmatpush1.xpose.msra.mxu0 0.0
    %4085 = vmatprep.subr.mxu0 0.0
    %4086 = vmatpush1.xpose.msra.mxu0 0.0
    %4087 = vmatprep.subr.mxu0 0.0
    %4088 = vmatpush1.xpose.msra.mxu0 0.0
    %4089 = vmatprep.subr.mxu0 0.0
    %4090 = vmatpush1.xpose.msra.mxu0 0.0
    %4091 = vmatprep.subr.mxu0 0.0
    %4092 = vmatpush1.xpose.msra.mxu0 0.0
    %4093 = vmatprep.subr.mxu0 0.0
    %4094 = vmatpush1.xpose.msra.mxu0 0.0
    %4095 = vmatprep.subr.mxu0 0.0
    %4096 = vmatpush1.xpose.msra.mxu0 0.0
    %4097 = vmatprep.subr.mxu0 0.0
    %4098 = vmatpush1.xpose.msra.mxu0 0.0
    %4099 = vmatprep.subr.mxu0 0.0
    %4100 = vmatpush1.xpose.msra.mxu0 0.0
    %4101 = vmatprep.subr.mxu0 0.0
    %4102 = vmatpush1.xpose.msra.mxu0 0.0
    %4103 = vmatprep.subr.mxu0 0.0
    %4104 = vmatpush1.xpose.msra.mxu0 0.0
    %4105 = vmatprep.subr.mxu0 0.0
    %4106 = vmatpush1.xpose.msra.mxu0 0.0
    %4107 = vmatprep.subr.mxu0 0.0
    %4108 = vmatpush1.xpose.msra.mxu0 0.0
    %4109 = vmatprep.subr.mxu0 0.0
    %4110 = vmatpush1.xpose.msra.mxu0 0.0
    %4111 = vmatprep.subr.mxu0 0.0
    %4112 = vmatpush1.xpose.msra.mxu0 0.0
    %4113 = vmatprep.subr.mxu0 0.0
    %4114 = vmatpush1.xpose.msra.mxu0 0.0
    %4115 = vmatprep.subr.mxu0 0.0
    %4116 = vmatpush1.xpose.msra.mxu0 0.0
    %4117 = vmatprep.subr.mxu0 0.0
    %4118 = vmatpush1.xpose.msra.mxu0 0.0
    %4119 = vmatprep.subr.mxu0 0.0
    %4120 = vmatpush1.xpose.msra.mxu0 0.0
    %4121 = vmatprep.subr.mxu0 0.0
    %4122 = vmatpush1.xpose.msra.mxu0 0.0
    %4123 = vmatprep.mubr.f32.mxu0 0.0
    %4124 = vmatmul.mubr.f32.gmra.mrb[0].mxu0 %v4051
    %v4125 = vpop.f32.mrb[0].mxu0
    %v4126 = vadd.f32 0.0, %v4125
    %v4127 = vpop.f32.mrb[0].mxu0
    %4128 = vmatprep.mubr.f32.mxu0 0.0
    %4129 = vmatmul.mubr.f32.gmra.mrb[0].mxu0 %v4053
    %v4130 = vpop.f32.mrb[0].mxu0
    %v4131 = vadd.f32 0.0, %v4130
    %v4132 = vpop.f32.mrb[0].mxu0
    %4133 = vdwg.mxu0
    %v4134 = vmul.f32 %v4035, 0.35355338
    %v4135 = vmul.f32 %v4040, 0.35355338
    %v4136 = vmul.f32 %v4126, 0.35355338
    %v4137 = vmul.f32 %v4131, 0.35355338
    %v4138 = vsel %vm599, %v4134, -inf
    %4139 = vmax.xlane.f32.xlu0 %v4138
    %v4140 = vpop.xlane.xlu0 %4139
    %v4141 = vsel %vm599, %v4135, -inf
    %4142 = vmax.xlane.f32.xlu0 %v4141
    %v4143 = vpop.xlane.xlu0 %4142
    %v4144 = vsel %vm599, %v4136, -inf
    %4145 = vmax.xlane.f32.xlu0 %v4144
    %v4146 = vpop.xlane.xlu0 %4145
    %v4147 = vsel %vm599, %v4137, -inf
    %4148 = vmax.xlane.f32.xlu0 %v4147
    %v4149 = vpop.xlane.xlu0 %4148
    %v4150 = vsub.f32 %v4134, %v4140
    %v4151 = vsub.f32 %v4135, %v4143
    %v4152 = vsub.f32 %v4136, %v4146
    %v4153 = vsub.f32 %v4137, %v4149
    %v4154 = vmul.f32 %v4150, 1.442695
    %v4155 = vpow.pop %v4154
    %v4156 = vmul.f32 %v4151, 1.442695
    %v4157 = vpow.pop %v4156
    %v4158 = vmul.f32 %v4152, 1.442695
    %v4159 = vpow.pop %v4158
    %v4160 = vmul.f32 %v4153, 1.442695
    %v4161 = vpow.pop %v4160
    %v4162 = vsel %vm599, %v4155, 0.0
    %4163 = vadd.xlane.f32.xlu0 %v4162
    %v4164 = vpop.xlane.xlu0 %4163
    %v4165 = vsel %vm599, %v4157, 0.0
    %4166 = vadd.xlane.f32.xlu0 %v4165
    %v4167 = vpop.xlane.xlu0 %4166
    %v4168 = vsel %vm599, %v4159, 0.0
    %4169 = vadd.xlane.f32.xlu0 %v4168
    %v4170 = vpop.xlane.xlu0 %4169
    %v4171 = vsel %vm599, %v4161, 0.0
    %4172 = vadd.xlane.f32.xlu0 %v4171
    %v4173 = vpop.xlane.xlu0 %4172
    %v4174 = vrcp.pop %v4164
    %v4175 = vrcp.pop %v4167
    %v4176 = vrcp.pop %v4170
    %v4177 = vrcp.pop %v4173
    %v4178 = vmul.f32 %v4155, %v4174
    %v4179 = vmul.f32 %v4157, %v4175
    %v4180 = vmul.f32 %v4159, %v4176
    %v4181 = vmul.f32 %v4161, %v4177
    %4182 = vrot.lane.b32.xlu0 %v2927, 48
    %v4183 = vpop.permute.xlu0 %4182
    %4184 = vrot.lane.b32.xlu0 %v2932, 48
    %v4185 = vpop.permute.xlu0 %4184
    %v4189 = vsel %vm599, %v4178, 0
    %v4192 = vsel %vm599, %v4179, 0
    %4194 = vmatprep.subr.mxu0 0.0
    %4195 = vmatpush1.msra.mxu0 %v4183
    %4196 = vmatprep.subr.mxu0 0.0
    %4197 = vmatpush1.msra.mxu0 %v4185
    %4198 = vmatprep.subr.mxu0 0.0
    %4199 = vmatpush1.msra.mxu0 0.0
    %4200 = vmatprep.subr.mxu0 0.0
    %4201 = vmatpush1.msra.mxu0 0.0
    %4202 = vmatprep.subr.mxu0 0.0
    %4203 = vmatpush1.msra.mxu0 0.0
    %4204 = vmatprep.subr.mxu0 0.0
    %4205 = vmatpush1.msra.mxu0 0.0
    %4206 = vmatprep.subr.mxu0 0.0
    %4207 = vmatpush1.msra.mxu0 0.0
    %4208 = vmatprep.subr.mxu0 0.0
    %4209 = vmatpush1.msra.mxu0 0.0
    %4210 = vmatprep.subr.mxu0 0.0
    %4211 = vmatpush1.msra.mxu0 0.0
    %4212 = vmatprep.subr.mxu0 0.0
    %4213 = vmatpush1.msra.mxu0 0.0
    %4214 = vmatprep.subr.mxu0 0.0
    %4215 = vmatpush1.msra.mxu0 0.0
    %4216 = vmatprep.subr.mxu0 0.0
    %4217 = vmatpush1.msra.mxu0 0.0
    %4218 = vmatprep.subr.mxu0 0.0
    %4219 = vmatpush1.msra.mxu0 0.0
    %4220 = vmatprep.subr.mxu0 0.0
    %4221 = vmatpush1.msra.mxu0 0.0
    %4222 = vmatprep.subr.mxu0 0.0
    %4223 = vmatpush1.msra.mxu0 0.0
    %4224 = vmatprep.subr.mxu0 0.0
    %4225 = vmatpush1.msra.mxu0 0.0
    %4226 = vmatprep.subr.mxu0 0.0
    %4227 = vmatpush1.msra.mxu0 0.0
    %4228 = vmatprep.subr.mxu0 0.0
    %4229 = vmatpush1.msra.mxu0 0.0
    %4230 = vmatprep.subr.mxu0 0.0
    %4231 = vmatpush1.msra.mxu0 0.0
    %4232 = vmatprep.subr.mxu0 0.0
    %4233 = vmatpush1.msra.mxu0 0.0
    %4234 = vmatprep.subr.mxu0 0.0
    %4235 = vmatpush1.msra.mxu0 0.0
    %4236 = vmatprep.subr.mxu0 0.0
    %4237 = vmatpush1.msra.mxu0 0.0
    %4238 = vmatprep.subr.mxu0 0.0
    %4239 = vmatpush1.msra.mxu0 0.0
    %4240 = vmatprep.subr.mxu0 0.0
    %4241 = vmatpush1.msra.mxu0 0.0
    %4242 = vmatprep.subr.mxu0 0.0
    %4243 = vmatpush1.msra.mxu0 0.0
    %4244 = vmatprep.subr.mxu0 0.0
    %4245 = vmatpush1.msra.mxu0 0.0
    %4246 = vmatprep.subr.mxu0 0.0
    %4247 = vmatpush1.msra.mxu0 0.0
    %4248 = vmatprep.subr.mxu0 0.0
    %4249 = vmatpush1.msra.mxu0 0.0
    %4250 = vmatprep.subr.mxu0 0.0
    %4251 = vmatpush1.msra.mxu0 0.0
    %4252 = vmatprep.subr.mxu0 0.0
    %4253 = vmatpush1.msra.mxu0 0.0
    %4254 = vmatprep.subr.mxu0 0.0
    %4255 = vmatpush1.msra.mxu0 0.0
    %4256 = vmatprep.subr.mxu0 0.0
    %4257 = vmatpush1.msra.mxu0 0.0
    %4258 = vmatprep.mubr.f32.mxu0 0.0
    %4259 = vmatmul.mubr.f32.gmra.mrb[0].mxu0 %v4189
    %v4260 = vpop.f32.mrb[0].mxu0
    %v4261 = vadd.f32 0.0, %v4260
    %v4262 = vpop.f32.mrb[0].mxu0
    %4263 = vmatprep.mubr.f32.mxu0 0.0
    %4264 = vmatmul.mubr.f32.gmra.mrb[0].mxu0 %v4192
    %v4265 = vpop.f32.mrb[0].mxu0
    %v4266 = vadd.f32 0.0, %v4265
    %v4267 = vpop.f32.mrb[0].mxu0
    %4268 = vdwg.mxu0
    %4269 = vrot.lane.b32.xlu0 %v2937, 48
    %v4270 = vpop.permute.xlu0 %4269
    %4271 = vrot.lane.b32.xlu0 %v2942, 48
    %v4272 = vpop.permute.xlu0 %4271
    %v4276 = vsel %vm599, %v4180, 0
    %v4279 = vsel %vm599, %v4181, 0
    %4281 = vmatprep.subr.mxu0 0.0
    %4282 = vmatpush1.msra.mxu0 %v4270
    %4283 = vmatprep.subr.mxu0 0.0
    %4284 = vmatpush1.msra.mxu0 %v4272
    %4285 = vmatprep.subr.mxu0 0.0
    %4286 = vmatpush1.msra.mxu0 0.0
    %4287 = vmatprep.subr.mxu0 0.0
    %4288 = vmatpush1.msra.mxu0 0.0
    %4289 = vmatprep.subr.mxu0 0.0
    %4290 = vmatpush1.msra.mxu0 0.0
    %4291 = vmatprep.subr.mxu0 0.0
    %4292 = vmatpush1.msra.mxu0 0.0
    %4293 = vmatprep.subr.mxu0 0.0
    %4294 = vmatpush1.msra.mxu0 0.0
    %4295 = vmatprep.subr.mxu0 0.0
    %4296 = vmatpush1.msra.mxu0 0.0
    %4297 = vmatprep.subr.mxu0 0.0
    %4298 = vmatpush1.msra.mxu0 0.0
    %4299 = vmatprep.subr.mxu0 0.0
    %4300 = vmatpush1.msra.mxu0 0.0
    %4301 = vmatprep.subr.mxu0 0.0
    %4302 = vmatpush1.msra.mxu0 0.0
    %4303 = vmatprep.subr.mxu0 0.0
    %4304 = vmatpush1.msra.mxu0 0.0
    %4305 = vmatprep.subr.mxu0 0.0
    %4306 = vmatpush1.msra.mxu0 0.0
    %4307 = vmatprep.subr.mxu0 0.0
    %4308 = vmatpush1.msra.mxu0 0.0
    %4309 = vmatprep.subr.mxu0 0.0
    %4310 = vmatpush1.msra.mxu0 0.0
    %4311 = vmatprep.subr.mxu0 0.0
    %4312 = vmatpush1.msra.mxu0 0.0
    %4313 = vmatprep.subr.mxu0 0.0
    %4314 = vmatpush1.msra.mxu0 0.0
    %4315 = vmatprep.subr.mxu0 0.0
    %4316 = vmatpush1.msra.mxu0 0.0
    %4317 = vmatprep.subr.mxu0 0.0
    %4318 = vmatpush1.msra.mxu0 0.0
    %4319 = vmatprep.subr.mxu0 0.0
    %4320 = vmatpush1.msra.mxu0 0.0
    %4321 = vmatprep.subr.mxu0 0.0
    %4322 = vmatpush1.msra.mxu0 0.0
    %4323 = vmatprep.subr.mxu0 0.0
    %4324 = vmatpush1.msra.mxu0 0.0
    %4325 = vmatprep.subr.mxu0 0.0
    %4326 = vmatpush1.msra.mxu0 0.0
    %4327 = vmatprep.subr.mxu0 0.0
    %4328 = vmatpush1.msra.mxu0 0.0
    %4329 = vmatprep.subr.mxu0 0.0
    %4330 = vmatpush1.msra.mxu0 0.0
    %4331 = vmatprep.subr.mxu0 0.0
    %4332 = vmatpush1.msra.mxu0 0.0
    %4333 = vmatprep.subr.mxu0 0.0
    %4334 = vmatpush1.msra.mxu0 0.0
    %4335 = vmatprep.subr.mxu0 0.0
    %4336 = vmatpush1.msra.mxu0 0.0
    %4337 = vmatprep.subr.mxu0 0.0
    %4338 = vmatpush1.msra.mxu0 0.0
    %4339 = vmatprep.subr.mxu0 0.0
    %4340 = vmatpush1.msra.mxu0 0.0
    %4341 = vmatprep.subr.mxu0 0.0
    %4342 = vmatpush1.msra.mxu0 0.0
    %4343 = vmatprep.subr.mxu0 0.0
    %4344 = vmatpush1.msra.mxu0 0.0
    %4345 = vmatprep.mubr.f32.mxu0 0.0
    %4346 = vmatmul.mubr.f32.gmra.mrb[0].mxu0 %v4276
    %v4347 = vpop.f32.mrb[0].mxu0
    %v4348 = vadd.f32 0.0, %v4347
    %v4349 = vpop.f32.mrb[0].mxu0
    %4350 = vmatprep.mubr.f32.mxu0 0.0
    %4351 = vmatmul.mubr.f32.gmra.mrb[0].mxu0 %v4279
    %v4352 = vpop.f32.mrb[0].mxu0
    %v4353 = vadd.f32 0.0, %v4352
    %v4354 = vpop.f32.mrb[0].mxu0
    %4355 = vdwg.mxu0
    %v4357 = vsel %vm132, %v4261, 0
    %v4360 = vsel %vm132, %v4266, 0
    %v4363 = vsel %vm132, %v4348, 0
    %v4366 = vsel %vm132, %v4353, 0
    %4368 = vmatprep.subr.mxu0 0.0
    %4369 = vmatpush1.msra.mxu0 %v2948
    %4370 = vmatprep.subr.mxu0 0.0
    %4371 = vmatpush1.msra.mxu0 0.0
    %4372 = vmatprep.subr.mxu0 0.0
    %4373 = vmatpush1.msra.mxu0 0.0
    %4374 = vmatprep.subr.mxu0 0.0
    %4375 = vmatpush1.msra.mxu0 0.0
    %4376 = vmatprep.subr.mxu0 0.0
    %4377 = vmatpush1.msra.mxu0 0.0
    %4378 = vmatprep.subr.mxu0 0.0
    %4379 = vmatpush1.msra.mxu0 0.0
    %4380 = vmatprep.subr.mxu0 0.0
    %4381 = vmatpush1.msra.mxu0 0.0
    %4382 = vmatprep.subr.mxu0 0.0
    %4383 = vmatpush1.msra.mxu0 0.0
    %4384 = vmatprep.subr.mxu0 0.0
    %4385 = vmatpush1.msra.mxu0 0.0
    %4386 = vmatprep.subr.mxu0 0.0
    %4387 = vmatpush1.msra.mxu0 0.0
    %4388 = vmatprep.subr.mxu0 0.0
    %4389 = vmatpush1.msra.mxu0 0.0
    %4390 = vmatprep.subr.mxu0 0.0
    %4391 = vmatpush1.msra.mxu0 0.0
    %4392 = vmatprep.subr.mxu0 0.0
    %4393 = vmatpush1.msra.mxu0 0.0
    %4394 = vmatprep.subr.mxu0 0.0
    %4395 = vmatpush1.msra.mxu0 0.0
    %4396 = vmatprep.subr.mxu0 0.0
    %4397 = vmatpush1.msra.mxu0 0.0
    %4398 = vmatprep.subr.mxu0 0.0
    %4399 = vmatpush1.msra.mxu0 0.0
    %4400 = vmatprep.subr.mxu0 0.0
    %4401 = vmatpush1.msra.mxu0 0.0
    %4402 = vmatprep.subr.mxu0 0.0
    %4403 = vmatpush1.msra.mxu0 0.0
    %4404 = vmatprep.subr.mxu0 0.0
    %4405 = vmatpush1.msra.mxu0 0.0
    %4406 = vmatprep.subr.mxu0 0.0
    %4407 = vmatpush1.msra.mxu0 0.0
    %4408 = vmatprep.subr.mxu0 0.0
    %4409 = vmatpush1.msra.mxu0 0.0
    %4410 = vmatprep.subr.mxu0 0.0
    %4411 = vmatpush1.msra.mxu0 0.0
    %4412 = vmatprep.subr.mxu0 0.0
    %4413 = vmatpush1.msra.mxu0 0.0
    %4414 = vmatprep.subr.mxu0 0.0
    %4415 = vmatpush1.msra.mxu0 0.0
    %4416 = vmatprep.subr.mxu0 0.0
    %4417 = vmatpush1.msra.mxu0 0.0
    %4418 = vmatprep.subr.mxu0 0.0
    %4419 = vmatpush1.msra.mxu0 0.0
    %4420 = vmatprep.subr.mxu0 0.0
    %4421 = vmatpush1.msra.mxu0 0.0
    %4422 = vmatprep.subr.mxu0 0.0
    %4423 = vmatpush1.msra.mxu0 0.0
    %4424 = vmatprep.subr.mxu0 0.0
    %4425 = vmatpush1.msra.mxu0 0.0
    %4426 = vmatprep.subr.mxu0 0.0
    %4427 = vmatpush1.msra.mxu0 0.0
    %4428 = vmatprep.subr.mxu0 0.0
    %4429 = vmatpush1.msra.mxu0 0.0
    %4430 = vmatprep.subr.mxu0 0.0
    %4431 = vmatpush1.msra.mxu0 0.0
    %4432 = vmatprep.mubr.f32.mxu0 0.0
    %4433 = vmatmul.mubr.f32.gmra.mrb[0].mxu0 %v4357
    %v4434 = vpop.f32.mrb[0].mxu0
    %v4435 = vadd.f32 0.0, %v4434
    %v4436 = vpop.f32.mrb[0].mxu0
    %4437 = vmatprep.mubr.f32.mxu0 0.0
    %4438 = vmatmul.mubr.f32.gmra.mrb[0].mxu0 %v4360
    %v4439 = vpop.f32.mrb[0].mxu0
    %v4440 = vadd.f32 0.0, %v4439
    %v4441 = vpop.f32.mrb[0].mxu0
    %4442 = vmatprep.mubr.f32.mxu0 0.0
    %4443 = vmatmul.mubr.f32.gmra.mrb[0].mxu0 %v4363
    %v4444 = vpop.f32.mrb[0].mxu0
    %v4445 = vadd.f32 0.0, %v4444
    %v4446 = vpop.f32.mrb[0].mxu0
    %4447 = vmatprep.mubr.f32.mxu0 0.0
    %4448 = vmatmul.mubr.f32.gmra.mrb[0].mxu0 %v4366
    %v4449 = vpop.f32.mrb[0].mxu0
    %v4450 = vadd.f32 0.0, %v4449
    %v4451 = vpop.f32.mrb[0].mxu0
    %4452 = vdwg.mxu0
    %v4453 = vadd.f32 %v3948, %v4435
    %v4454 = vadd.f32 %v3949, %v4440
    %v4455 = vadd.f32 %v3950, %v4445
    %v4456 = vadd.f32 %v3951, %v4450
    %4457 = vrot.lane.b32.xlu0 %v2927, 104
    %v4458 = vpop.permute.xlu0 %4457
    %4459 = vrot.lane.b32.xlu0 %v2932, 104
    %v4460 = vpop.permute.xlu0 %4459
    %4461 = vrot.lane.b32.xlu0 %v2927, 72
    %v4462 = vpop.permute.xlu0 %4461
    %4463 = vrot.lane.b32.xlu0 %v2932, 72
    %v4464 = vpop.permute.xlu0 %4463
    %v4465 = vsel %vm132, %v4458, 0
    %v4467 = vsel %vm132, %v4460, 0
    %v4469 = vsel %vm132, %v4462, 0
    %v4471 = vsel %vm132, %v4464, 0
    %4473 = vmatprep.subr.mxu0 0.0
    %4474 = vmatpush1.xpose.msra.mxu0 %v4469
    %4475 = vmatprep.subr.mxu0 0.0
    %4476 = vmatpush1.xpose.msra.mxu0 %v4471
    %4477 = vmatprep.subr.mxu0 0.0
    %4478 = vmatpush1.xpose.msra.mxu0 0.0
    %4479 = vmatprep.subr.mxu0 0.0
    %4480 = vmatpush1.xpose.msra.mxu0 0.0
    %4481 = vmatprep.subr.mxu0 0.0
    %4482 = vmatpush1.xpose.msra.mxu0 0.0
    %4483 = vmatprep.subr.mxu0 0.0
    %4484 = vmatpush1.xpose.msra.mxu0 0.0
    %4485 = vmatprep.subr.mxu0 0.0
    %4486 = vmatpush1.xpose.msra.mxu0 0.0
    %4487 = vmatprep.subr.mxu0 0.0
    %4488 = vmatpush1.xpose.msra.mxu0 0.0
    %4489 = vmatprep.subr.mxu0 0.0
    %4490 = vmatpush1.xpose.msra.mxu0 0.0
    %4491 = vmatprep.subr.mxu0 0.0
    %4492 = vmatpush1.xpose.msra.mxu0 0.0
    %4493 = vmatprep.subr.mxu0 0.0
    %4494 = vmatpush1.xpose.msra.mxu0 0.0
    %4495 = vmatprep.subr.mxu0 0.0
    %4496 = vmatpush1.xpose.msra.mxu0 0.0
    %4497 = vmatprep.subr.mxu0 0.0
    %4498 = vmatpush1.xpose.msra.mxu0 0.0
    %4499 = vmatprep.subr.mxu0 0.0
    %4500 = vmatpush1.xpose.msra.mxu0 0.0
    %4501 = vmatprep.subr.mxu0 0.0
    %4502 = vmatpush1.xpose.msra.mxu0 0.0
    %4503 = vmatprep.subr.mxu0 0.0
    %4504 = vmatpush1.xpose.msra.mxu0 0.0
    %4505 = vmatprep.subr.mxu0 0.0
    %4506 = vmatpush1.xpose.msra.mxu0 0.0
    %4507 = vmatprep.subr.mxu0 0.0
    %4508 = vmatpush1.xpose.msra.mxu0 0.0
    %4509 = vmatprep.subr.mxu0 0.0
    %4510 = vmatpush1.xpose.msra.mxu0 0.0
    %4511 = vmatprep.subr.mxu0 0.0
    %4512 = vmatpush1.xpose.msra.mxu0 0.0
    %4513 = vmatprep.subr.mxu0 0.0
    %4514 = vmatpush1.xpose.msra.mxu0 0.0
    %4515 = vmatprep.subr.mxu0 0.0
    %4516 = vmatpush1.xpose.msra.mxu0 0.0
    %4517 = vmatprep.subr.mxu0 0.0
    %4518 = vmatpush1.xpose.msra.mxu0 0.0
    %4519 = vmatprep.subr.mxu0 0.0
    %4520 = vmatpush1.xpose.msra.mxu0 0.0
    %4521 = vmatprep.subr.mxu0 0.0
    %4522 = vmatpush1.xpose.msra.mxu0 0.0
    %4523 = vmatprep.subr.mxu0 0.0
    %4524 = vmatpush1.xpose.msra.mxu0 0.0
    %4525 = vmatprep.subr.mxu0 0.0
    %4526 = vmatpush1.xpose.msra.mxu0 0.0
    %4527 = vmatprep.subr.mxu0 0.0
    %4528 = vmatpush1.xpose.msra.mxu0 0.0
    %4529 = vmatprep.subr.mxu0 0.0
    %4530 = vmatpush1.xpose.msra.mxu0 0.0
    %4531 = vmatprep.subr.mxu0 0.0
    %4532 = vmatpush1.xpose.msra.mxu0 0.0
    %4533 = vmatprep.subr.mxu0 0.0
    %4534 = vmatpush1.xpose.msra.mxu0 0.0
    %4535 = vmatprep.subr.mxu0 0.0
    %4536 = vmatpush1.xpose.msra.mxu0 0.0
    %4537 = vmatprep.mubr.f32.mxu0 0.0
    %4538 = vmatmul.mubr.f32.gmra.mrb[0].mxu0 %v4465
    %v4539 = vpop.f32.mrb[0].mxu0
    %v4540 = vadd.f32 0.0, %v4539
    %v4541 = vpop.f32.mrb[0].mxu0
    %4542 = vmatprep.mubr.f32.mxu0 0.0
    %4543 = vmatmul.mubr.f32.gmra.mrb[0].mxu0 %v4467
    %v4544 = vpop.f32.mrb[0].mxu0
    %v4545 = vadd.f32 0.0, %v4544
    %v4546 = vpop.f32.mrb[0].mxu0
    %4547 = vdwg.mxu0
    %4548 = vrot.lane.b32.xlu0 %v2937, 104
    %v4549 = vpop.permute.xlu0 %4548
    %4550 = vrot.lane.b32.xlu0 %v2942, 104
    %v4551 = vpop.permute.xlu0 %4550
    %4552 = vrot.lane.b32.xlu0 %v2937, 72
    %v4553 = vpop.permute.xlu0 %4552
    %4554 = vrot.lane.b32.xlu0 %v2942, 72
    %v4555 = vpop.permute.xlu0 %4554
    %v4556 = vsel %vm132, %v4549, 0
    %v4558 = vsel %vm132, %v4551, 0
    %v4560 = vsel %vm132, %v4553, 0
    %v4562 = vsel %vm132, %v4555, 0
    %4564 = vmatprep.subr.mxu0 0.0
    %4565 = vmatpush1.xpose.msra.mxu0 %v4560
    %4566 = vmatprep.subr.mxu0 0.0
    %4567 = vmatpush1.xpose.msra.mxu0 %v4562
    %4568 = vmatprep.subr.mxu0 0.0
    %4569 = vmatpush1.xpose.msra.mxu0 0.0
    %4570 = vmatprep.subr.mxu0 0.0
    %4571 = vmatpush1.xpose.msra.mxu0 0.0
    %4572 = vmatprep.subr.mxu0 0.0
    %4573 = vmatpush1.xpose.msra.mxu0 0.0
    %4574 = vmatprep.subr.mxu0 0.0
    %4575 = vmatpush1.xpose.msra.mxu0 0.0
    %4576 = vmatprep.subr.mxu0 0.0
    %4577 = vmatpush1.xpose.msra.mxu0 0.0
    %4578 = vmatprep.subr.mxu0 0.0
    %4579 = vmatpush1.xpose.msra.mxu0 0.0
    %4580 = vmatprep.subr.mxu0 0.0
    %4581 = vmatpush1.xpose.msra.mxu0 0.0
    %4582 = vmatprep.subr.mxu0 0.0
    %4583 = vmatpush1.xpose.msra.mxu0 0.0
    %4584 = vmatprep.subr.mxu0 0.0
    %4585 = vmatpush1.xpose.msra.mxu0 0.0
    %4586 = vmatprep.subr.mxu0 0.0
    %4587 = vmatpush1.xpose.msra.mxu0 0.0
    %4588 = vmatprep.subr.mxu0 0.0
    %4589 = vmatpush1.xpose.msra.mxu0 0.0
    %4590 = vmatprep.subr.mxu0 0.0
    %4591 = vmatpush1.xpose.msra.mxu0 0.0
    %4592 = vmatprep.subr.mxu0 0.0
    %4593 = vmatpush1.xpose.msra.mxu0 0.0
    %4594 = vmatprep.subr.mxu0 0.0
    %4595 = vmatpush1.xpose.msra.mxu0 0.0
    %4596 = vmatprep.subr.mxu0 0.0
    %4597 = vmatpush1.xpose.msra.mxu0 0.0
    %4598 = vmatprep.subr.mxu0 0.0
    %4599 = vmatpush1.xpose.msra.mxu0 0.0
    %4600 = vmatprep.subr.mxu0 0.0
    %4601 = vmatpush1.xpose.msra.mxu0 0.0
    %4602 = vmatprep.subr.mxu0 0.0
    %4603 = vmatpush1.xpose.msra.mxu0 0.0
    %4604 = vmatprep.subr.mxu0 0.0
    %4605 = vmatpush1.xpose.msra.mxu0 0.0
    %4606 = vmatprep.subr.mxu0 0.0
    %4607 = vmatpush1.xpose.msra.mxu0 0.0
    %4608 = vmatprep.subr.mxu0 0.0
    %4609 = vmatpush1.xpose.msra.mxu0 0.0
    %4610 = vmatprep.subr.mxu0 0.0
    %4611 = vmatpush1.xpose.msra.mxu0 0.0
    %4612 = vmatprep.subr.mxu0 0.0
    %4613 = vmatpush1.xpose.msra.mxu0 0.0
    %4614 = vmatprep.subr.mxu0 0.0
    %4615 = vmatpush1.xpose.msra.mxu0 0.0
    %4616 = vmatprep.subr.mxu0 0.0
    %4617 = vmatpush1.xpose.msra.mxu0 0.0
    %4618 = vmatprep.subr.mxu0 0.0
    %4619 = vmatpush1.xpose.msra.mxu0 0.0
    %4620 = vmatprep.subr.mxu0 0.0
    %4621 = vmatpush1.xpose.msra.mxu0 0.0
    %4622 = vmatprep.subr.mxu0 0.0
    %4623 = vmatpush1.xpose.msra.mxu0 0.0
    %4624 = vmatprep.subr.mxu0 0.0
    %4625 = vmatpush1.xpose.msra.mxu0 0.0
    %4626 = vmatprep.subr.mxu0 0.0
    %4627 = vmatpush1.xpose.msra.mxu0 0.0
    %4628 = vmatprep.mubr.f32.mxu0 0.0
    %4629 = vmatmul.mubr.f32.gmra.mrb[0].mxu0 %v4556
    %v4630 = vpop.f32.mrb[0].mxu0
    %v4631 = vadd.f32 0.0, %v4630
    %v4632 = vpop.f32.mrb[0].mxu0
    %4633 = vmatprep.mubr.f32.mxu0 0.0
    %4634 = vmatmul.mubr.f32.gmra.mrb[0].mxu0 %v4558
    %v4635 = vpop.f32.mrb[0].mxu0
    %v4636 = vadd.f32 0.0, %v4635
    %v4637 = vpop.f32.mrb[0].mxu0
    %4638 = vdwg.mxu0
    %v4639 = vmul.f32 %v4540, 0.35355338
    %v4640 = vmul.f32 %v4545, 0.35355338
    %v4641 = vmul.f32 %v4631, 0.35355338
    %v4642 = vmul.f32 %v4636, 0.35355338
    %v4643 = vsel %vm599, %v4639, -inf
    %4644 = vmax.xlane.f32.xlu0 %v4643
    %v4645 = vpop.xlane.xlu0 %4644
    %v4646 = vsel %vm599, %v4640, -inf
    %4647 = vmax.xlane.f32.xlu0 %v4646
    %v4648 = vpop.xlane.xlu0 %4647
    %v4649 = vsel %vm599, %v4641, -inf
    %4650 = vmax.xlane.f32.xlu0 %v4649
    %v4651 = vpop.xlane.xlu0 %4650
    %v4652 = vsel %vm599, %v4642, -inf
    %4653 = vmax.xlane.f32.xlu0 %v4652
    %v4654 = vpop.xlane.xlu0 %4653
    %v4655 = vsub.f32 %v4639, %v4645
    %v4656 = vsub.f32 %v4640, %v4648
    %v4657 = vsub.f32 %v4641, %v4651
    %v4658 = vsub.f32 %v4642, %v4654
    %v4659 = vmul.f32 %v4655, 1.442695
    %v4660 = vpow.pop %v4659
    %v4661 = vmul.f32 %v4656, 1.442695
    %v4662 = vpow.pop %v4661
    %v4663 = vmul.f32 %v4657, 1.442695
    %v4664 = vpow.pop %v4663
    %v4665 = vmul.f32 %v4658, 1.442695
    %v4666 = vpow.pop %v4665
    %v4667 = vsel %vm599, %v4660, 0.0
    %4668 = vadd.xlane.f32.xlu0 %v4667
    %v4669 = vpop.xlane.xlu0 %4668
    %v4670 = vsel %vm599, %v4662, 0.0
    %4671 = vadd.xlane.f32.xlu0 %v4670
    %v4672 = vpop.xlane.xlu0 %4671
    %v4673 = vsel %vm599, %v4664, 0.0
    %4674 = vadd.xlane.f32.xlu0 %v4673
    %v4675 = vpop.xlane.xlu0 %4674
    %v4676 = vsel %vm599, %v4666, 0.0
    %4677 = vadd.xlane.f32.xlu0 %v4676
    %v4678 = vpop.xlane.xlu0 %4677
    %v4679 = vrcp.pop %v4669
    %v4680 = vrcp.pop %v4672
    %v4681 = vrcp.pop %v4675
    %v4682 = vrcp.pop %v4678
    %v4683 = vmul.f32 %v4660, %v4679
    %v4684 = vmul.f32 %v4662, %v4680
    %v4685 = vmul.f32 %v4664, %v4681
    %v4686 = vmul.f32 %v4666, %v4682
    %4687 = vrot.lane.b32.xlu0 %v2927, 40
    %v4688 = vpop.permute.xlu0 %4687
    %4689 = vrot.lane.b32.xlu0 %v2932, 40
    %v4690 = vpop.permute.xlu0 %4689
    %v4694 = vsel %vm599, %v4683, 0
    %v4697 = vsel %vm599, %v4684, 0
    %4699 = vmatprep.subr.mxu0 0.0
    %4700 = vmatpush1.msra.mxu0 %v4688
    %4701 = vmatprep.subr.mxu0 0.0
    %4702 = vmatpush1.msra.mxu0 %v4690
    %4703 = vmatprep.subr.mxu0 0.0
    %4704 = vmatpush1.msra.mxu0 0.0
    %4705 = vmatprep.subr.mxu0 0.0
    %4706 = vmatpush1.msra.mxu0 0.0
    %4707 = vmatprep.subr.mxu0 0.0
    %4708 = vmatpush1.msra.mxu0 0.0
    %4709 = vmatprep.subr.mxu0 0.0
    %4710 = vmatpush1.msra.mxu0 0.0
    %4711 = vmatprep.subr.mxu0 0.0
    %4712 = vmatpush1.msra.mxu0 0.0
    %4713 = vmatprep.subr.mxu0 0.0
    %4714 = vmatpush1.msra.mxu0 0.0
    %4715 = vmatprep.subr.mxu0 0.0
    %4716 = vmatpush1.msra.mxu0 0.0
    %4717 = vmatprep.subr.mxu0 0.0
    %4718 = vmatpush1.msra.mxu0 0.0
    %4719 = vmatprep.subr.mxu0 0.0
    %4720 = vmatpush1.msra.mxu0 0.0
    %4721 = vmatprep.subr.mxu0 0.0
    %4722 = vmatpush1.msra.mxu0 0.0
    %4723 = vmatprep.subr.mxu0 0.0
    %4724 = vmatpush1.msra.mxu0 0.0
    %4725 = vmatprep.subr.mxu0 0.0
    %4726 = vmatpush1.msra.mxu0 0.0
    %4727 = vmatprep.subr.mxu0 0.0
    %4728 = vmatpush1.msra.mxu0 0.0
    %4729 = vmatprep.subr.mxu0 0.0
    %4730 = vmatpush1.msra.mxu0 0.0
    %4731 = vmatprep.subr.mxu0 0.0
    %4732 = vmatpush1.msra.mxu0 0.0
    %4733 = vmatprep.subr.mxu0 0.0
    %4734 = vmatpush1.msra.mxu0 0.0
    %4735 = vmatprep.subr.mxu0 0.0
    %4736 = vmatpush1.msra.mxu0 0.0
    %4737 = vmatprep.subr.mxu0 0.0
    %4738 = vmatpush1.msra.mxu0 0.0
    %4739 = vmatprep.subr.mxu0 0.0
    %4740 = vmatpush1.msra.mxu0 0.0
    %4741 = vmatprep.subr.mxu0 0.0
    %4742 = vmatpush1.msra.mxu0 0.0
    %4743 = vmatprep.subr.mxu0 0.0
    %4744 = vmatpush1.msra.mxu0 0.0
    %4745 = vmatprep.subr.mxu0 0.0
    %4746 = vmatpush1.msra.mxu0 0.0
    %4747 = vmatprep.subr.mxu0 0.0
    %4748 = vmatpush1.msra.mxu0 0.0
    %4749 = vmatprep.subr.mxu0 0.0
    %4750 = vmatpush1.msra.mxu0 0.0
    %4751 = vmatprep.subr.mxu0 0.0
    %4752 = vmatpush1.msra.mxu0 0.0
    %4753 = vmatprep.subr.mxu0 0.0
    %4754 = vmatpush1.msra.mxu0 0.0
    %4755 = vmatprep.subr.mxu0 0.0
    %4756 = vmatpush1.msra.mxu0 0.0
    %4757 = vmatprep.subr.mxu0 0.0
    %4758 = vmatpush1.msra.mxu0 0.0
    %4759 = vmatprep.subr.mxu0 0.0
    %4760 = vmatpush1.msra.mxu0 0.0
    %4761 = vmatprep.subr.mxu0 0.0
    %4762 = vmatpush1.msra.mxu0 0.0
    %4763 = vmatprep.mubr.f32.mxu0 0.0
    %4764 = vmatmul.mubr.f32.gmra.mrb[0].mxu0 %v4694
    %v4765 = vpop.f32.mrb[0].mxu0
    %v4766 = vadd.f32 0.0, %v4765
    %v4767 = vpop.f32.mrb[0].mxu0
    %4768 = vmatprep.mubr.f32.mxu0 0.0
    %4769 = vmatmul.mubr.f32.gmra.mrb[0].mxu0 %v4697
    %v4770 = vpop.f32.mrb[0].mxu0
    %v4771 = vadd.f32 0.0, %v4770
    %v4772 = vpop.f32.mrb[0].mxu0
    %4773 = vdwg.mxu0
    %4774 = vrot.lane.b32.xlu0 %v2937, 40
    %v4775 = vpop.permute.xlu0 %4774
    %4776 = vrot.lane.b32.xlu0 %v2942, 40
    %v4777 = vpop.permute.xlu0 %4776
    %v4781 = vsel %vm599, %v4685, 0
    %v4784 = vsel %vm599, %v4686, 0
    %4786 = vmatprep.subr.mxu0 0.0
    %4787 = vmatpush1.msra.mxu0 %v4775
    %4788 = vmatprep.subr.mxu0 0.0
    %4789 = vmatpush1.msra.mxu0 %v4777
    %4790 = vmatprep.subr.mxu0 0.0
    %4791 = vmatpush1.msra.mxu0 0.0
    %4792 = vmatprep.subr.mxu0 0.0
    %4793 = vmatpush1.msra.mxu0 0.0
    %4794 = vmatprep.subr.mxu0 0.0
    %4795 = vmatpush1.msra.mxu0 0.0
    %4796 = vmatprep.subr.mxu0 0.0
    %4797 = vmatpush1.msra.mxu0 0.0
    %4798 = vmatprep.subr.mxu0 0.0
    %4799 = vmatpush1.msra.mxu0 0.0
    %4800 = vmatprep.subr.mxu0 0.0
    %4801 = vmatpush1.msra.mxu0 0.0
    %4802 = vmatprep.subr.mxu0 0.0
    %4803 = vmatpush1.msra.mxu0 0.0
    %4804 = vmatprep.subr.mxu0 0.0
    %4805 = vmatpush1.msra.mxu0 0.0
    %4806 = vmatprep.subr.mxu0 0.0
    %4807 = vmatpush1.msra.mxu0 0.0
    %4808 = vmatprep.subr.mxu0 0.0
    %4809 = vmatpush1.msra.mxu0 0.0
    %4810 = vmatprep.subr.mxu0 0.0
    %4811 = vmatpush1.msra.mxu0 0.0
    %4812 = vmatprep.subr.mxu0 0.0
    %4813 = vmatpush1.msra.mxu0 0.0
    %4814 = vmatprep.subr.mxu0 0.0
    %4815 = vmatpush1.msra.mxu0 0.0
    %4816 = vmatprep.subr.mxu0 0.0
    %4817 = vmatpush1.msra.mxu0 0.0
    %4818 = vmatprep.subr.mxu0 0.0
    %4819 = vmatpush1.msra.mxu0 0.0
    %4820 = vmatprep.subr.mxu0 0.0
    %4821 = vmatpush1.msra.mxu0 0.0
    %4822 = vmatprep.subr.mxu0 0.0
    %4823 = vmatpush1.msra.mxu0 0.0
    %4824 = vmatprep.subr.mxu0 0.0
    %4825 = vmatpush1.msra.mxu0 0.0
    %4826 = vmatprep.subr.mxu0 0.0
    %4827 = vmatpush1.msra.mxu0 0.0
    %4828 = vmatprep.subr.mxu0 0.0
    %4829 = vmatpush1.msra.mxu0 0.0
    %4830 = vmatprep.subr.mxu0 0.0
    %4831 = vmatpush1.msra.mxu0 0.0
    %4832 = vmatprep.subr.mxu0 0.0
    %4833 = vmatpush1.msra.mxu0 0.0
    %4834 = vmatprep.subr.mxu0 0.0
    %4835 = vmatpush1.msra.mxu0 0.0
    %4836 = vmatprep.subr.mxu0 0.0
    %4837 = vmatpush1.msra.mxu0 0.0
    %4838 = vmatprep.subr.mxu0 0.0
    %4839 = vmatpush1.msra.mxu0 0.0
    %4840 = vmatprep.subr.mxu0 0.0
    %4841 = vmatpush1.msra.mxu0 0.0
    %4842 = vmatprep.subr.mxu0 0.0
    %4843 = vmatpush1.msra.mxu0 0.0
    %4844 = vmatprep.subr.mxu0 0.0
    %4845 = vmatpush1.msra.mxu0 0.0
    %4846 = vmatprep.subr.mxu0 0.0
    %4847 = vmatpush1.msra.mxu0 0.0
    %4848 = vmatprep.subr.mxu0 0.0
    %4849 = vmatpush1.msra.mxu0 0.0
    %4850 = vmatprep.mubr.f32.mxu0 0.0
    %4851 = vmatmul.mubr.f32.gmra.mrb[0].mxu0 %v4781
    %v4852 = vpop.f32.mrb[0].mxu0
    %v4853 = vadd.f32 0.0, %v4852
    %v4854 = vpop.f32.mrb[0].mxu0
    %4855 = vmatprep.mubr.f32.mxu0 0.0
    %4856 = vmatmul.mubr.f32.gmra.mrb[0].mxu0 %v4784
    %v4857 = vpop.f32.mrb[0].mxu0
    %v4858 = vadd.f32 0.0, %v4857
    %v4859 = vpop.f32.mrb[0].mxu0
    %4860 = vdwg.mxu0
    %v4862 = vsel %vm132, %v4766, 0
    %v4865 = vsel %vm132, %v4771, 0
    %v4868 = vsel %vm132, %v4853, 0
    %v4871 = vsel %vm132, %v4858, 0
    %4873 = vmatprep.subr.mxu0 0.0
    %4874 = vmatpush1.msra.mxu0 %v2949
    %4875 = vmatprep.subr.mxu0 0.0
    %4876 = vmatpush1.msra.mxu0 0.0
    %4877 = vmatprep.subr.mxu0 0.0
    %4878 = vmatpush1.msra.mxu0 0.0
    %4879 = vmatprep.subr.mxu0 0.0
    %4880 = vmatpush1.msra.mxu0 0.0
    %4881 = vmatprep.subr.mxu0 0.0
    %4882 = vmatpush1.msra.mxu0 0.0
    %4883 = vmatprep.subr.mxu0 0.0
    %4884 = vmatpush1.msra.mxu0 0.0
    %4885 = vmatprep.subr.mxu0 0.0
    %4886 = vmatpush1.msra.mxu0 0.0
    %4887 = vmatprep.subr.mxu0 0.0
    %4888 = vmatpush1.msra.mxu0 0.0
    %4889 = vmatprep.subr.mxu0 0.0
    %4890 = vmatpush1.msra.mxu0 0.0
    %4891 = vmatprep.subr.mxu0 0.0
    %4892 = vmatpush1.msra.mxu0 0.0
    %4893 = vmatprep.subr.mxu0 0.0
    %4894 = vmatpush1.msra.mxu0 0.0
    %4895 = vmatprep.subr.mxu0 0.0
    %4896 = vmatpush1.msra.mxu0 0.0
    %4897 = vmatprep.subr.mxu0 0.0
    %4898 = vmatpush1.msra.mxu0 0.0
    %4899 = vmatprep.subr.mxu0 0.0
    %4900 = vmatpush1.msra.mxu0 0.0
    %4901 = vmatprep.subr.mxu0 0.0
    %4902 = vmatpush1.msra.mxu0 0.0
    %4903 = vmatprep.subr.mxu0 0.0
    %4904 = vmatpush1.msra.mxu0 0.0
    %4905 = vmatprep.subr.mxu0 0.0
    %4906 = vmatpush1.msra.mxu0 0.0
    %4907 = vmatprep.subr.mxu0 0.0
    %4908 = vmatpush1.msra.mxu0 0.0
    %4909 = vmatprep.subr.mxu0 0.0
    %4910 = vmatpush1.msra.mxu0 0.0
    %4911 = vmatprep.subr.mxu0 0.0
    %4912 = vmatpush1.msra.mxu0 0.0
    %4913 = vmatprep.subr.mxu0 0.0
    %4914 = vmatpush1.msra.mxu0 0.0
    %4915 = vmatprep.subr.mxu0 0.0
    %4916 = vmatpush1.msra.mxu0 0.0
    %4917 = vmatprep.subr.mxu0 0.0
    %4918 = vmatpush1.msra.mxu0 0.0
    %4919 = vmatprep.subr.mxu0 0.0
    %4920 = vmatpush1.msra.mxu0 0.0
    %4921 = vmatprep.subr.mxu0 0.0
    %4922 = vmatpush1.msra.mxu0 0.0
    %4923 = vmatprep.subr.mxu0 0.0
    %4924 = vmatpush1.msra.mxu0 0.0
    %4925 = vmatprep.subr.mxu0 0.0
    %4926 = vmatpush1.msra.mxu0 0.0
    %4927 = vmatprep.subr.mxu0 0.0
    %4928 = vmatpush1.msra.mxu0 0.0
    %4929 = vmatprep.subr.mxu0 0.0
    %4930 = vmatpush1.msra.mxu0 0.0
    %4931 = vmatprep.subr.mxu0 0.0
    %4932 = vmatpush1.msra.mxu0 0.0
    %4933 = vmatprep.subr.mxu0 0.0
    %4934 = vmatpush1.msra.mxu0 0.0
    %4935 = vmatprep.subr.mxu0 0.0
    %4936 = vmatpush1.msra.mxu0 0.0
    %4937 = vmatprep.mubr.f32.mxu0 0.0
    %4938 = vmatmul.mubr.f32.gmra.mrb[0].mxu0 %v4862
    %v4939 = vpop.f32.mrb[0].mxu0
    %v4940 = vadd.f32 0.0, %v4939
    %v4941 = vpop.f32.mrb[0].mxu0
    %4942 = vmatprep.mubr.f32.mxu0 0.0
    %4943 = vmatmul.mubr.f32.gmra.mrb[0].mxu0 %v4865
    %v4944 = vpop.f32.mrb[0].mxu0
    %v4945 = vadd.f32 0.0, %v4944
    %v4946 = vpop.f32.mrb[0].mxu0
    %4947 = vmatprep.mubr.f32.mxu0 0.0
    %4948 = vmatmul.mubr.f32.gmra.mrb[0].mxu0 %v4868
    %v4949 = vpop.f32.mrb[0].mxu0
    %v4950 = vadd.f32 0.0, %v4949
    %v4951 = vpop.f32.mrb[0].mxu0
    %4952 = vmatprep.mubr.f32.mxu0 0.0
    %4953 = vmatmul.mubr.f32.gmra.mrb[0].mxu0 %v4871
    %v4954 = vpop.f32.mrb[0].mxu0
    %v4955 = vadd.f32 0.0, %v4954
    %v4956 = vpop.f32.mrb[0].mxu0
    %4957 = vdwg.mxu0
    %v4958 = vadd.f32 %v4453, %v4940
    %v4959 = vadd.f32 %v4454, %v4945
    %v4960 = vadd.f32 %v4455, %v4950
    %v4961 = vadd.f32 %v4456, %v4955
    %v4962 = vadd.f32 %v2763, %v4958
    %v4963 = vadd.f32 %v2764, %v4959
    %v4964 = vadd.f32 %v2765, %v4960
    %v4965 = vadd.f32 %v2766, %v4961
    %s4966 = scalar_lea.vmem [#allocation6], 1
    %v4967 = vld [vmem:[%s4966] sm:$0x1]
    %s4968 = scalar_lea.vmem [#allocation7], 1
    %v4969 = vld [vmem:[%s4968] sm:$0x1]
    %v4970 = vsel %vm238, %v4962, 0.0
    %4971 = vadd.xlane.f32.xlu0 %v4970
    %v4972 = vpop.xlane.xlu0 %4971
    %v4973 = vsel %vm238, %v4963, 0.0
    %4974 = vadd.xlane.f32.xlu0 %v4973
    %v4975 = vpop.xlane.xlu0 %4974
    %v4976 = vsel %vm238, %v4964, 0.0
    %4977 = vadd.xlane.f32.xlu0 %v4976
    %v4978 = vpop.xlane.xlu0 %4977
    %v4979 = vsel %vm238, %v4965, 0.0
    %4980 = vadd.xlane.f32.xlu0 %v4979
    %v4981 = vpop.xlane.xlu0 %4980
    %v4982 = vmul.f32 %v4972, %v251
    %v4983 = vmul.f32 %v4975, %v251
    %v4984 = vmul.f32 %v4978, %v251
    %v4985 = vmul.f32 %v4981, %v251
    %v4986 = vsub.f32 %v4962, %v4982
    %v4987 = vsub.f32 %v4963, %v4983
    %v4988 = vsub.f32 %v4964, %v4984
    %v4989 = vsub.f32 %v4965, %v4985
    %v4990 = vmul.f32 %v4986, %v4986
    %v4991 = vmul.f32 %v4987, %v4987
    %v4992 = vmul.f32 %v4988, %v4988
    %v4993 = vmul.f32 %v4989, %v4989
    %v4994 = vsel %vm238, %v4990, 0.0
    %4995 = vadd.xlane.f32.xlu0 %v4994
    %v4996 = vpop.xlane.xlu0 %4995
    %v4997 = vsel %vm238, %v4991, 0.0
    %4998 = vadd.xlane.f32.xlu0 %v4997
    %v4999 = vpop.xlane.xlu0 %4998
    %v5000 = vsel %vm238, %v4992, 0.0
    %5001 = vadd.xlane.f32.xlu0 %v5000
    %v5002 = vpop.xlane.xlu0 %5001
    %v5003 = vsel %vm238, %v4993, 0.0
    %5004 = vadd.xlane.f32.xlu0 %v5003
    %v5005 = vpop.xlane.xlu0 %5004
    %v5006 = vmul.f32 %v4996, %v251
    %v5007 = vmul.f32 %v4999, %v251
    %v5008 = vmul.f32 %v5002, %v251
    %v5009 = vmul.f32 %v5005, %v251
    %v5010 = vadd.f32 %v5006, 1e-05
    %v5011 = vadd.f32 %v5007, 1e-05
    %v5012 = vadd.f32 %v5008, 1e-05
    %v5013 = vadd.f32 %v5009, 1e-05
    %v5014 = vrsqrt.pop %v5010
    %v5015 = vrsqrt.pop %v5011
    %v5016 = vrsqrt.pop %v5012
    %v5017 = vrsqrt.pop %v5013
    %v5018 = vmul.f32 %v4986, %v5014
    %v5019 = vmul.f32 %v4987, %v5015
    %v5020 = vmul.f32 %v4988, %v5016
    %v5021 = vmul.f32 %v4989, %v5017
    %v5023 = vlaneseq
    %v5024 = vshrl.u32 %v5023, 7
    %v5025 = vsub.s32 0, %v5024
    %v5026 = vrot.slane %v4967, %v5025
    %v5028 = vmul.f32 %v5018, %v5026
    %v5029 = vmul.f32 %v5019, %v5026
    %v5030 = vmul.f32 %v5020, %v5026
    %v5031 = vmul.f32 %v5021, %v5026
    %v5033 = vlaneseq
    %v5034 = vshrl.u32 %v5033, 7
    %v5035 = vsub.s32 0, %v5034
    %v5036 = vrot.slane %v4969, %v5035
    %v5038 = vadd.f32 %v5028, %v5036
    %v5039 = vadd.f32 %v5029, %v5036
    %v5040 = vadd.f32 %v5030, %v5036
    %v5041 = vadd.f32 %v5031, %v5036
    %s5042 = scalar_lea.vmem %s9, 32
    %v5043 = vld [vmem:[%s5042] sm:$0xff]
    %v5044 = vld [vmem:[%s5042 + $0x8] sm:$0xff]
    %v5045 = vld [vmem:[%s5042 + $0x10] sm:$0xff]
    %v5046 = vld [vmem:[%s5042 + $0x18] sm:$0xff]
    %v5048 = vsel %vm238, %v5038, 0
    %v5051 = vsel %vm238, %v5039, 0
    %v5054 = vsel %vm238, %v5040, 0
    %v5057 = vsel %vm238, %v5041, 0
    %5059 = vmatprep.subr.mxu0 0.0
    %5060 = vmatpush1.msra.mxu0 %v5043
    %5061 = vmatprep.subr.mxu0 0.0
    %5062 = vmatpush1.msra.mxu0 %v5044
    %5063 = vmatprep.subr.mxu0 0.0
    %5064 = vmatpush1.msra.mxu0 %v5045
    %5065 = vmatprep.subr.mxu0 0.0
    %5066 = vmatpush1.msra.mxu0 %v5046
    %5067 = vmatprep.subr.mxu0 0.0
    %5068 = vmatpush1.msra.mxu0 0.0
    %5069 = vmatprep.subr.mxu0 0.0
    %5070 = vmatpush1.msra.mxu0 0.0
    %5071 = vmatprep.subr.mxu0 0.0
    %5072 = vmatpush1.msra.mxu0 0.0
    %5073 = vmatprep.subr.mxu0 0.0
    %5074 = vmatpush1.msra.mxu0 0.0
    %5075 = vmatprep.subr.mxu0 0.0
    %5076 = vmatpush1.msra.mxu0 0.0
    %5077 = vmatprep.subr.mxu0 0.0
    %5078 = vmatpush1.msra.mxu0 0.0
    %5079 = vmatprep.subr.mxu0 0.0
    %5080 = vmatpush1.msra.mxu0 0.0
    %5081 = vmatprep.subr.mxu0 0.0
    %5082 = vmatpush1.msra.mxu0 0.0
    %5083 = vmatprep.subr.mxu0 0.0
    %5084 = vmatpush1.msra.mxu0 0.0
    %5085 = vmatprep.subr.mxu0 0.0
    %5086 = vmatpush1.msra.mxu0 0.0
    %5087 = vmatprep.subr.mxu0 0.0
    %5088 = vmatpush1.msra.mxu0 0.0
    %5089 = vmatprep.subr.mxu0 0.0
    %5090 = vmatpush1.msra.mxu0 0.0
    %5091 = vmatprep.subr.mxu0 0.0
    %5092 = vmatpush1.msra.mxu0 0.0
    %5093 = vmatprep.subr.mxu0 0.0
    %5094 = vmatpush1.msra.mxu0 0.0
    %5095 = vmatprep.subr.mxu0 0.0
    %5096 = vmatpush1.msra.mxu0 0.0
    %5097 = vmatprep.subr.mxu0 0.0
    %5098 = vmatpush1.msra.mxu0 0.0
    %5099 = vmatprep.subr.mxu0 0.0
    %5100 = vmatpush1.msra.mxu0 0.0
    %5101 = vmatprep.subr.mxu0 0.0
    %5102 = vmatpush1.msra.mxu0 0.0
    %5103 = vmatprep.subr.mxu0 0.0
    %5104 = vmatpush1.msra.mxu0 0.0
    %5105 = vmatprep.subr.mxu0 0.0
    %5106 = vmatpush1.msra.mxu0 0.0
    %5107 = vmatprep.subr.mxu0 0.0
    %5108 = vmatpush1.msra.mxu0 0.0
    %5109 = vmatprep.subr.mxu0 0.0
    %5110 = vmatpush1.msra.mxu0 0.0
    %5111 = vmatprep.subr.mxu0 0.0
    %5112 = vmatpush1.msra.mxu0 0.0
    %5113 = vmatprep.subr.mxu0 0.0
    %5114 = vmatpush1.msra.mxu0 0.0
    %5115 = vmatprep.subr.mxu0 0.0
    %5116 = vmatpush1.msra.mxu0 0.0
    %5117 = vmatprep.subr.mxu0 0.0
    %5118 = vmatpush1.msra.mxu0 0.0
    %5119 = vmatprep.subr.mxu0 0.0
    %5120 = vmatpush1.msra.mxu0 0.0
    %5121 = vmatprep.subr.mxu0 0.0
    %5122 = vmatpush1.msra.mxu0 0.0
    %5123 = vmatprep.mubr.f32.mxu0 0.0
    %5124 = vmatmul.mubr.f32.gmra.mrb[0].mxu0 %v5048
    %v5125 = vpop.f32.mrb[0].mxu0
    %v5126 = vadd.f32 0.0, %v5125
    %v5127 = vpop.f32.mrb[0].mxu0
    %5128 = vmatprep.mubr.f32.mxu0 0.0
    %5129 = vmatmul.mubr.f32.gmra.mrb[0].mxu0 %v5051
    %v5130 = vpop.f32.mrb[0].mxu0
    %v5131 = vadd.f32 0.0, %v5130
    %v5132 = vpop.f32.mrb[0].mxu0
    %5133 = vmatprep.mubr.f32.mxu0 0.0
    %5134 = vmatmul.mubr.f32.gmra.mrb[0].mxu0 %v5054
    %v5135 = vpop.f32.mrb[0].mxu0
    %v5136 = vadd.f32 0.0, %v5135
    %v5137 = vpop.f32.mrb[0].mxu0
    %5138 = vmatprep.mubr.f32.mxu0 0.0
    %5139 = vmatmul.mubr.f32.gmra.mrb[0].mxu0 %v5057
    %v5140 = vpop.f32.mrb[0].mxu0
    %v5141 = vadd.f32 0.0, %v5140
    %v5142 = vpop.f32.mrb[0].mxu0
    %5143 = vdwg.mxu0
    %v5144 = vxor.u32 %v5126, 2147483648
    %v5145 = vxor.u32 %v5131, 2147483648
    %v5146 = vxor.u32 %v5136, 2147483648
    %v5147 = vxor.u32 %v5141, 2147483648
    %v5148 = vmul.f32 %v5144, 1.442695
    %v5149 = vpow.pop %v5148
    %v5150 = vmul.f32 %v5145, 1.442695
    %v5151 = vpow.pop %v5150
    %v5152 = vmul.f32 %v5146, 1.442695
    %v5153 = vpow.pop %v5152
    %v5154 = vmul.f32 %v5147, 1.442695
    %v5155 = vpow.pop %v5154
    %v5156 = vadd.f32 %v5149, 1.0
    %v5157 = vadd.f32 %v5151, 1.0
    %v5158 = vadd.f32 %v5153, 1.0
    %v5159 = vadd.f32 %v5155, 1.0
    %v5160 = vrcp.pop %v5156
    %v5161 = vmul.f32 1.0, %v5160
    %v5162 = vrcp.pop %v5157
    %v5163 = vmul.f32 1.0, %v5162
    %v5164 = vrcp.pop %v5158
    %v5165 = vmul.f32 1.0, %v5164
    %v5166 = vrcp.pop %v5159
    %v5167 = vmul.f32 1.0, %v5166
    %v5168 = vmul.f32 %v5126, %v5161
    %v5169 = vmul.f32 %v5131, %v5163
    %v5170 = vmul.f32 %v5136, %v5165
    %v5171 = vmul.f32 %v5141, %v5167
    %5176 = vrot.lane.b32.xlu0 %v5126, 64
    %v5177 = vpop.permute.xlu0 %5176
    %5178 = vrot.lane.b32.xlu0 %v5131, 64
    %v5179 = vpop.permute.xlu0 %5178
    %5180 = vrot.lane.b32.xlu0 %v5136, 64
    %v5181 = vpop.permute.xlu0 %5180
    %5182 = vrot.lane.b32.xlu0 %v5141, 64
    %v5183 = vpop.permute.xlu0 %5182
    %v5188 = vmul.f32 %v5168, %v5177
    %v5189 = vmul.f32 %v5169, %v5179
    %v5190 = vmul.f32 %v5170, %v5181
    %v5191 = vmul.f32 %v5171, %v5183
    %s5192 = scalar_lea.vmem %s10, 64
    %v5193 = vld [vmem:[%s5192] sm:$0xff]
    %v5194 = vld [vmem:[%s5192 + $0x8] sm:$0xff]
    %v5195 = vld [vmem:[%s5192 + $0x10] sm:$0xff]
    %v5196 = vld [vmem:[%s5192 + $0x18] sm:$0xff]
    %v5197 = vld [vmem:[%s5192 + $0x20] sm:$0xff]
    %v5198 = vld [vmem:[%s5192 + $0x28] sm:$0xff]
    %v5199 = vld [vmem:[%s5192 + $0x30] sm:$0xff]
    %v5200 = vld [vmem:[%s5192 + $0x38] sm:$0xff]
    %v5202 = vsel %vm2665, %v5188, 0
    %v5205 = vsel %vm2665, %v5189, 0
    %v5208 = vsel %vm2665, %v5190, 0
    %v5211 = vsel %vm2665, %v5191, 0
    %5213 = vmatprep.subr.mxu0 0.0
    %5214 = vmatpush1.msra.mxu0 %v5193
    %5215 = vmatprep.subr.mxu0 0.0
    %5216 = vmatpush1.msra.mxu0 %v5194
    %5217 = vmatprep.subr.mxu0 0.0
    %5218 = vmatpush1.msra.mxu0 %v5195
    %5219 = vmatprep.subr.mxu0 0.0
    %5220 = vmatpush1.msra.mxu0 %v5196
    %5221 = vmatprep.subr.mxu0 0.0
    %5222 = vmatpush1.msra.mxu0 %v5197
    %5223 = vmatprep.subr.mxu0 0.0
    %5224 = vmatpush1.msra.mxu0 %v5198
    %5225 = vmatprep.subr.mxu0 0.0
    %5226 = vmatpush1.msra.mxu0 %v5199
    %5227 = vmatprep.subr.mxu0 0.0
    %5228 = vmatpush1.msra.mxu0 %v5200
    %5229 = vmatprep.subr.mxu0 0.0
    %5230 = vmatpush1.msra.mxu0 0.0
    %5231 = vmatprep.subr.mxu0 0.0
    %5232 = vmatpush1.msra.mxu0 0.0
    %5233 = vmatprep.subr.mxu0 0.0
    %5234 = vmatpush1.msra.mxu0 0.0
    %5235 = vmatprep.subr.mxu0 0.0
    %5236 = vmatpush1.msra.mxu0 0.0
    %5237 = vmatprep.subr.mxu0 0.0
    %5238 = vmatpush1.msra.mxu0 0.0
    %5239 = vmatprep.subr.mxu0 0.0
    %5240 = vmatpush1.msra.mxu0 0.0
    %5241 = vmatprep.subr.mxu0 0.0
    %5242 = vmatpush1.msra.mxu0 0.0
    %5243 = vmatprep.subr.mxu0 0.0
    %5244 = vmatpush1.msra.mxu0 0.0
    %5245 = vmatprep.subr.mxu0 0.0
    %5246 = vmatpush1.msra.mxu0 0.0
    %5247 = vmatprep.subr.mxu0 0.0
    %5248 = vmatpush1.msra.mxu0 0.0
    %5249 = vmatprep.subr.mxu0 0.0
    %5250 = vmatpush1.msra.mxu0 0.0
    %5251 = vmatprep.subr.mxu0 0.0
    %5252 = vmatpush1.msra.mxu0 0.0
    %5253 = vmatprep.subr.mxu0 0.0
    %5254 = vmatpush1.msra.mxu0 0.0
    %5255 = vmatprep.subr.mxu0 0.0
    %5256 = vmatpush1.msra.mxu0 0.0
    %5257 = vmatprep.subr.mxu0 0.0
    %5258 = vmatpush1.msra.mxu0 0.0
    %5259 = vmatprep.subr.mxu0 0.0
    %5260 = vmatpush1.msra.mxu0 0.0
    %5261 = vmatprep.subr.mxu0 0.0
    %5262 = vmatpush1.msra.mxu0 0.0
    %5263 = vmatprep.subr.mxu0 0.0
    %5264 = vmatpush1.msra.mxu0 0.0
    %5265 = vmatprep.subr.mxu0 0.0
    %5266 = vmatpush1.msra.mxu0 0.0
    %5267 = vmatprep.subr.mxu0 0.0
    %5268 = vmatpush1.msra.mxu0 0.0
    %5269 = vmatprep.subr.mxu0 0.0
    %5270 = vmatpush1.msra.mxu0 0.0
    %5271 = vmatprep.subr.mxu0 0.0
    %5272 = vmatpush1.msra.mxu0 0.0
    %5273 = vmatprep.subr.mxu0 0.0
    %5274 = vmatpush1.msra.mxu0 0.0
    %5275 = vmatprep.subr.mxu0 0.0
    %5276 = vmatpush1.msra.mxu0 0.0
    %5277 = vmatprep.mubr.f32.mxu0 0.0
    %5278 = vmatmul.mubr.f32.gmra.mrb[0].mxu0 %v5202
    %v5279 = vpop.f32.mrb[0].mxu0
    %v5280 = vadd.f32 0.0, %v5279
    %v5281 = vpop.f32.mrb[0].mxu0
    %5282 = vmatprep.mubr.f32.mxu0 0.0
    %5283 = vmatmul.mubr.f32.gmra.mrb[0].mxu0 %v5205
    %v5284 = vpop.f32.mrb[0].mxu0
    %v5285 = vadd.f32 0.0, %v5284
    %v5286 = vpop.f32.mrb[0].mxu0
    %5287 = vmatprep.mubr.f32.mxu0 0.0
    %5288 = vmatmul.mubr.f32.gmra.mrb[0].mxu0 %v5208
    %v5289 = vpop.f32.mrb[0].mxu0
    %v5290 = vadd.f32 0.0, %v5289
    %v5291 = vpop.f32.mrb[0].mxu0
    %5292 = vmatprep.mubr.f32.mxu0 0.0
    %5293 = vmatmul.mubr.f32.gmra.mrb[0].mxu0 %v5211
    %v5294 = vpop.f32.mrb[0].mxu0
    %v5295 = vadd.f32 0.0, %v5294
    %v5296 = vpop.f32.mrb[0].mxu0
    %5297 = vdwg.mxu0
    %v5298 = vadd.f32 %v4962, %v5280
    %v5299 = vadd.f32 %v4963, %v5285
    %v5300 = vadd.f32 %v4964, %v5290
    %v5301 = vadd.f32 %v4965, %v5295
    %v5302 = vld [vmem:[%s11] sm:$0x1]
    %v5303 = vld [vmem:[#allocation9] sm:$0x1]
    %v5304 = vsel %vm238, %v5298, 0.0
    %5305 = vadd.xlane.f32.xlu0 %v5304
    %v5306 = vpop.xlane.xlu0 %5305
    %v5307 = vsel %vm238, %v5299, 0.0
    %5308 = vadd.xlane.f32.xlu0 %v5307
    %v5309 = vpop.xlane.xlu0 %5308
    %v5310 = vsel %vm238, %v5300, 0.0
    %5311 = vadd.xlane.f32.xlu0 %v5310
    %v5312 = vpop.xlane.xlu0 %5311
    %v5313 = vsel %vm238, %v5301, 0.0
    %5314 = vadd.xlane.f32.xlu0 %v5313
    %v5315 = vpop.xlane.xlu0 %5314
    %v5316 = vmul.f32 %v5306, %v251
    %v5317 = vmul.f32 %v5309, %v251
    %v5318 = vmul.f32 %v5312, %v251
    %v5319 = vmul.f32 %v5315, %v251
    %v5320 = vsub.f32 %v5298, %v5316
    %v5321 = vsub.f32 %v5299, %v5317
    %v5322 = vsub.f32 %v5300, %v5318
    %v5323 = vsub.f32 %v5301, %v5319
    %v5324 = vmul.f32 %v5320, %v5320
    %v5325 = vmul.f32 %v5321, %v5321
    %v5326 = vmul.f32 %v5322, %v5322
    %v5327 = vmul.f32 %v5323, %v5323
    %v5328 = vsel %vm238, %v5324, 0.0
    %5329 = vadd.xlane.f32.xlu0 %v5328
    %v5330 = vpop.xlane.xlu0 %5329
    %v5331 = vsel %vm238, %v5325, 0.0
    %5332 = vadd.xlane.f32.xlu0 %v5331
    %v5333 = vpop.xlane.xlu0 %5332
    %v5334 = vsel %vm238, %v5326, 0.0
    %5335 = vadd.xlane.f32.xlu0 %v5334
    %v5336 = vpop.xlane.xlu0 %5335
    %v5337 = vsel %vm238, %v5327, 0.0
    %5338 = vadd.xlane.f32.xlu0 %v5337
    %v5339 = vpop.xlane.xlu0 %5338
    %v5340 = vmul.f32 %v5330, %v251
    %v5341 = vmul.f32 %v5333, %v251
    %v5342 = vmul.f32 %v5336, %v251
    %v5343 = vmul.f32 %v5339, %v251
    %v5344 = vadd.f32 %v5340, 1e-05
    %v5345 = vadd.f32 %v5341, 1e-05
    %v5346 = vadd.f32 %v5342, 1e-05
    %v5347 = vadd.f32 %v5343, 1e-05
    %v5348 = vrsqrt.pop %v5344
    %v5349 = vrsqrt.pop %v5345
    %v5350 = vrsqrt.pop %v5346
    %v5351 = vrsqrt.pop %v5347
    %v5352 = vmul.f32 %v5320, %v5348
    %v5353 = vmul.f32 %v5321, %v5349
    %v5354 = vmul.f32 %v5322, %v5350
    %v5355 = vmul.f32 %v5323, %v5351
    %v5357 = vlaneseq
    %v5358 = vshrl.u32 %v5357, 7
    %v5359 = vsub.s32 0, %v5358
    %v5360 = vrot.slane %v5302, %v5359
    %v5362 = vmul.f32 %v5352, %v5360
    %v5363 = vmul.f32 %v5353, %v5360
    %v5364 = vmul.f32 %v5354, %v5360
    %v5365 = vmul.f32 %v5355, %v5360
    %v5367 = vlaneseq
    %v5368 = vshrl.u32 %v5367, 7
    %v5369 = vsub.s32 0, %v5368
    %v5370 = vrot.slane %v5303, %v5369
    %v5372 = vadd.f32 %v5362, %v5370
    %v5373 = vadd.f32 %v5363, %v5370
    %v5374 = vadd.f32 %v5364, %v5370
    %v5375 = vadd.f32 %v5365, %v5370
    %v5376 = vld [vmem:[#allocation10] sm:$0xff]
    %v5377 = vld [vmem:[#allocation10 + $0x8] sm:$0xff]
    %v5378 = vld [vmem:[#allocation10 + $0x10] sm:$0xff]
    %v5379 = vld [vmem:[#allocation10 + $0x18] sm:$0xff]
    %v5381 = vsel %vm238, %v5372, 0
    %v5384 = vsel %vm238, %v5373, 0
    %v5387 = vsel %vm238, %v5374, 0
    %v5390 = vsel %vm238, %v5375, 0
    %5392 = vmatprep.subr.mxu0 0.0
    %5393 = vmatpush1.msra.mxu0 %v5376
    %5394 = vmatprep.subr.mxu0 0.0
    %5395 = vmatpush1.msra.mxu0 %v5377
    %5396 = vmatprep.subr.mxu0 0.0
    %5397 = vmatpush1.msra.mxu0 %v5378
    %5398 = vmatprep.subr.mxu0 0.0
    %5399 = vmatpush1.msra.mxu0 %v5379
    %5400 = vmatprep.subr.mxu0 0.0
    %5401 = vmatpush1.msra.mxu0 0.0
    %5402 = vmatprep.subr.mxu0 0.0
    %5403 = vmatpush1.msra.mxu0 0.0
    %5404 = vmatprep.subr.mxu0 0.0
    %5405 = vmatpush1.msra.mxu0 0.0
    %5406 = vmatprep.subr.mxu0 0.0
    %5407 = vmatpush1.msra.mxu0 0.0
    %5408 = vmatprep.subr.mxu0 0.0
    %5409 = vmatpush1.msra.mxu0 0.0
    %5410 = vmatprep.subr.mxu0 0.0
    %5411 = vmatpush1.msra.mxu0 0.0
    %5412 = vmatprep.subr.mxu0 0.0
    %5413 = vmatpush1.msra.mxu0 0.0
    %5414 = vmatprep.subr.mxu0 0.0
    %5415 = vmatpush1.msra.mxu0 0.0
    %5416 = vmatprep.subr.mxu0 0.0
    %5417 = vmatpush1.msra.mxu0 0.0
    %5418 = vmatprep.subr.mxu0 0.0
    %5419 = vmatpush1.msra.mxu0 0.0
    %5420 = vmatprep.subr.mxu0 0.0
    %5421 = vmatpush1.msra.mxu0 0.0
    %5422 = vmatprep.subr.mxu0 0.0
    %5423 = vmatpush1.msra.mxu0 0.0
    %5424 = vmatprep.subr.mxu0 0.0
    %5425 = vmatpush1.msra.mxu0 0.0
    %5426 = vmatprep.subr.mxu0 0.0
    %5427 = vmatpush1.msra.mxu0 0.0
    %5428 = vmatprep.subr.mxu0 0.0
    %5429 = vmatpush1.msra.mxu0 0.0
    %5430 = vmatprep.subr.mxu0 0.0
    %5431 = vmatpush1.msra.mxu0 0.0
    %5432 = vmatprep.subr.mxu0 0.0
    %5433 = vmatpush1.msra.mxu0 0.0
    %5434 = vmatprep.subr.mxu0 0.0
    %5435 = vmatpush1.msra.mxu0 0.0
    %5436 = vmatprep.subr.mxu0 0.0
    %5437 = vmatpush1.msra.mxu0 0.0
    %5438 = vmatprep.subr.mxu0 0.0
    %5439 = vmatpush1.msra.mxu0 0.0
    %5440 = vmatprep.subr.mxu0 0.0
    %5441 = vmatpush1.msra.mxu0 0.0
    %5442 = vmatprep.subr.mxu0 0.0
    %5443 = vmatpush1.msra.mxu0 0.0
    %5444 = vmatprep.subr.mxu0 0.0
    %5445 = vmatpush1.msra.mxu0 0.0
    %5446 = vmatprep.subr.mxu0 0.0
    %5447 = vmatpush1.msra.mxu0 0.0
    %5448 = vmatprep.subr.mxu0 0.0
    %5449 = vmatpush1.msra.mxu0 0.0
    %5450 = vmatprep.subr.mxu0 0.0
    %5451 = vmatpush1.msra.mxu0 0.0
    %5452 = vmatprep.subr.mxu0 0.0
    %5453 = vmatpush1.msra.mxu0 0.0
    %5454 = vmatprep.subr.mxu0 0.0
    %5455 = vmatpush1.msra.mxu0 0.0
    %5456 = vmatprep.mubr.f32.mxu0 0.0
    %5457 = vmatmul.mubr.f32.gmra.mrb[0].mxu0 %v5381
    %v5458 = vpop.f32.mrb[0].mxu0
    %v5459 = vadd.f32 0.0, %v5458
    %v5460 = vpop.f32.mrb[0].mxu0
    %5461 = vmatprep.mubr.f32.mxu0 0.0
    %5462 = vmatmul.mubr.f32.gmra.mrb[0].mxu0 %v5384
    %v5463 = vpop.f32.mrb[0].mxu0
    %v5464 = vadd.f32 0.0, %v5463
    %v5465 = vpop.f32.mrb[0].mxu0
    %5466 = vmatprep.mubr.f32.mxu0 0.0
    %5467 = vmatmul.mubr.f32.gmra.mrb[0].mxu0 %v5387
    %v5468 = vpop.f32.mrb[0].mxu0
    %v5469 = vadd.f32 0.0, %v5468
    %v5470 = vpop.f32.mrb[0].mxu0
    %5471 = vmatprep.mubr.f32.mxu0 0.0
    %5472 = vmatmul.mubr.f32.gmra.mrb[0].mxu0 %v5390
    %v5473 = vpop.f32.mrb[0].mxu0
    %v5474 = vadd.f32 0.0, %v5473
    %v5475 = vpop.f32.mrb[0].mxu0
    %5476 = vdwg.mxu0
    %vm5477 = vcmask 392192
    %5478 = vst.msk [vmem:[%s14] sm:$0xff] %vm5477, %v5459
    %5479 = vst.msk [vmem:[%s14 + $0x8] sm:$0xff] %vm5477, %v5464
    %5480 = vst.msk [vmem:[%s14 + $0x10] sm:$0xff] %vm5477, %v5469
    %5481 = vst.msk [vmem:[%s14 + $0x18] sm:$0xff] %vm5477, %v5474
    // Predicated region
    $region82: #{freq_transformer_decoder_forward.1} parent=1 // pred_check
      _
    $region83: #{freq_transformer_decoder_forward.1} parent=1 // pred_check_branch
      %5483 = sbr.rel (0) target = $region85
    $region84: #{freq_transformer_decoder_forward.1} parent=1 // pred_region
      _
    $region85: #{freq_transformer_decoder_forward.1} parent=1 // pred_fallthru
      _
    // Predicated region
    $region86: #{freq_transformer_decoder_forward.1} parent=1 // pred_check
      _
    $region87: #{freq_transformer_decoder_forward.1} parent=1 // pred_check_branch
      %5485 = sbr.rel (0) target = $region89
    $region88: #{freq_transformer_decoder_forward.1} parent=1 // pred_region
      _
    $region89: #{freq_transformer_decoder_forward.1} parent=1 // pred_fallthru
      _
    %5486 = vsyncpa [#allocation3], 1
    %5487 = vsyncpa [#allocation5], 1
    %5488 = vsyncpa [#allocation8], 1
    %5489 = vsyncpa [#allocation11], 1

</llo_original>
